<compile_context>
chip_gen: v5e
topology: v5e:2x2
jax: 0.10.0
libtpu: 0.0.40
codegen_flags: <defaults>
</compile_context>

<pallas_src>
import functools
import math

import jax
import jax.numpy as jnp
from jax.experimental import pallas as pl
from jax.experimental.pallas import tpu as pltpu


# ----------------------------------------------------------------- helpers ---
def _layernorm(v, eps=1e-6):
    # PyTorch LayerNorm(elementwise_affine=False): biased variance, eps in rsqrt.
    # Fused single pass: mean and mean-of-squares (one fewer reduction sweep).
    mu = jnp.mean(v, axis=-1, keepdims=True)
    ms = jnp.mean(v * v, axis=-1, keepdims=True)
    var = ms - mu * mu
    return (v - mu) * jax.lax.rsqrt(var + eps)


def _gelu_tanh(v):
    # nn.GELU(approximate='tanh')
    c = math.sqrt(2.0 / math.pi)
    return 0.5 * v * (1.0 + jnp.tanh(c * (v + 0.044715 * v * v * v)))


def _modulate(v, shift, scale):
    return v * (1.0 + scale) + shift


# ------------------------------------------------------------------ kernel ---
def joint_block_kernel(ctx_ref, x_ref, c_ref,
                       wada_ref, bada_ref,
                       wqkv_ref, bqkv_ref,
                       wproj_ref, bproj_ref,
                       wfc1_ref, bfc1_ref,
                       wfc2_ref, bfc2_ref,
                       ctx_o_ref, x_o_ref,
                       *, dim, heads):
    D = dim
    dh = D // heads
    Tc = ctx_ref.shape[1]
    Tx = x_ref.shape[1]
    T = Tc + Tx
    mm = jnp.bfloat16          # MXU operand dtype; accumulation stays f32.

    ctx = ctx_ref[0].astype(jnp.float32)      # (Tc, D)
    xx = x_ref[0].astype(jnp.float32)         # (Tx, D)
    c = c_ref[0].astype(jnp.float32)          # (1, D)

    # ---- adaLN: Linear(SiLU(c)) -> 6 modulation vectors per block, each (1, D)
    c_act = jax.nn.silu(c).astype(mm)

    def adaln(blk):
        ada = jnp.dot(c_act, wada_ref[blk],
                      preferred_element_type=jnp.float32) + bada_ref[blk]
        # D is a multiple of 128, so these column splits are lane-tile aligned.
        return [ada[:, i * D:(i + 1) * D] for i in range(6)]

    sh_msa_c, sc_msa_c, g_msa_c, sh_mlp_c, sc_mlp_c, g_mlp_c = adaln(0)
    sh_msa_x, sc_msa_x, g_msa_x, sh_mlp_x, sc_mlp_x, g_mlp_x = adaln(1)

    # ---- pre-attention: LN -> modulate -> fused QKV projection ----
    def pre_attention(h, blk, shift, scale):
        mod = _modulate(_layernorm(h), shift, scale)
        return jnp.dot(mod.astype(mm), wqkv_ref[blk],
                       preferred_element_type=jnp.float32) + bqkv_ref[blk]

    qkv_c = pre_attention(ctx, 0, sh_msa_c, sc_msa_c)     # (Tc, 3D)
    qkv_x = pre_attention(xx, 1, sh_msa_x, sc_msa_x)      # (Tx, 3D)

    # ---- joint attention over concat(context tokens, x tokens) ----
    qkv = jnp.concatenate([qkv_c, qkv_x], axis=0)          # (T, 3D)
    q = qkv[:, 0:D] * (1.0 / math.sqrt(dh))                # fold softmax scale into Q
    k = qkv[:, D:2 * D]
    v = qkv[:, 2 * D:3 * D]

    # Head-batched contractions (single batched dot) instead of a per-head loop.
    q3 = q.reshape(T, heads, dh).swapaxes(0, 1).astype(mm)   # (H, T, dh)
    k3 = k.reshape(T, heads, dh).swapaxes(0, 1).astype(mm)
    v3 = v.reshape(T, heads, dh).swapaxes(0, 1).astype(mm)

    s = jnp.einsum("hqd,hkd->hqk", q3, k3,
                   preferred_element_type=jnp.float32)       # (H, T, T)
    s = s - jnp.max(s, axis=-1, keepdims=True)
    p = jnp.exp(s)
    p = p * pl.reciprocal(jnp.sum(p, axis=-1, keepdims=True), approx=True)
    attn = jnp.einsum("hqk,hkd->hqd", p.astype(mm), v3,
                      preferred_element_type=jnp.float32)    # (H, T, dh) f32
    attn = attn.swapaxes(0, 1).reshape(T, D)                 # (T, D)

    attn_c = attn[0:Tc, :]      # Tc is a multiple of 8 -> sublane-aligned split
    attn_x = attn[Tc:T, :]

    # ---- post-attention: gated proj residual + gated (LN->modulate->MLP) ----
    def post_attention(h, a, blk, gate_msa, shift_mlp, scale_mlp, gate_mlp):
        # single full-width (T,D)@(D,D) projection of the concatenated heads
        proj = jnp.dot(a.astype(mm), wproj_ref[blk],
                       preferred_element_type=jnp.float32) + bproj_ref[blk]
        h = h + gate_msa * proj
        mod = _modulate(_layernorm(h), shift_mlp, scale_mlp)
        ff = jnp.dot(mod.astype(mm), wfc1_ref[blk],
                     preferred_element_type=jnp.float32) + bfc1_ref[blk]
        ff = _gelu_tanh(ff)
        ff = jnp.dot(ff.astype(mm), wfc2_ref[blk],
                     preferred_element_type=jnp.float32) + bfc2_ref[blk]
        return h + gate_mlp * ff

    ctx_out = post_attention(ctx, attn_c, 0, g_msa_c, sh_mlp_c, sc_mlp_c, g_mlp_c)
    x_out = post_attention(xx, attn_x, 1, g_msa_x, sh_mlp_x, sc_mlp_x, g_mlp_x)

    ctx_o_ref[0] = ctx_out.astype(ctx_o_ref.dtype)
    x_o_ref[0] = x_out.astype(x_o_ref.dtype)


# ----------------------------------------------------------------- wrapper ---
_PARAM_ORDER = ("wada", "bada", "wqkv", "bqkv", "wproj", "bproj",
                "wfc1", "bfc1", "wfc2", "bfc2")


def _full_spec(a):
    nd = a.ndim
    return pl.BlockSpec(a.shape, lambda b, nd=nd: (0,) * nd)


def joint_block(context, x, c, params, *, dim, heads):
    """Fused SD3 JointBlock forward. Returns (context_out, x_out)."""
    B, Tc, D = context.shape
    _, Tx, _ = x.shape
    assert D == dim and dim % heads == 0 and c.shape == (B, D)

    c3 = c.reshape(B, 1, D)
    weights = [params[k] for k in _PARAM_ORDER]

    in_specs = [
        pl.BlockSpec((1, Tc, D), lambda b: (b, 0, 0)),
        pl.BlockSpec((1, Tx, D), lambda b: (b, 0, 0)),
        pl.BlockSpec((1, 1, D), lambda b: (b, 0, 0)),
    ] + [_full_spec(w) for w in weights]
    # TODO(synk): at real SD3 sizes (D~1536, hidden~6144) stream wfc1/wfc2 (and
    # optionally wqkv) in (tk, tn) tiles over an extra "arbitrary" grid axis with
    # an f32 VMEM accumulator, and single-buffer the constant weight specs
    # (pipeline_mode=pl.Buffered(1)) to stay inside v7x's 64 MiB VMEM.

    out_specs = (pl.BlockSpec((1, Tc, D), lambda b: (b, 0, 0)),
                 pl.BlockSpec((1, Tx, D), lambda b: (b, 0, 0)))
    out_shape = (jax.ShapeDtypeStruct(context.shape, context.dtype),
                 jax.ShapeDtypeStruct(x.shape, x.dtype))

    # Scoped-VMEM budget: double-buffered weights + activation blocks + headroom
    # (never below the 32 MiB default, never above the 64 MiB v7x capacity).
    weight_bytes = sum(int(w.size) * w.dtype.itemsize for w in weights)
    act_bytes = 4 * (Tc + Tx + 1) * D * 4
    vmem_limit = int(min(64 * 1024 * 1024,
                         max(32 * 1024 * 1024,
                             2 * weight_bytes + 4 * act_bytes + (16 << 20))))

    return pl.pallas_call(
        functools.partial(joint_block_kernel, dim=dim, heads=heads),
        out_shape=out_shape,
        grid=(B,),
        in_specs=in_specs,
        out_specs=out_specs,
        compiler_params=pltpu.CompilerParams(
            dimension_semantics=("parallel",),   # megacore-shards batch
            vmem_limit_bytes=vmem_limit,
        ),
    )(context, x, c3, *weights)


# ------------------------------------------------------------ pure-JAX ref ---
def _ref_joint_block(context, x, c, p32, dim, heads):
    D, dh = dim, dim // heads
    Tc = context.shape[1]

    def ln(v):
        mu = v.mean(-1, keepdims=True)
        var = ((v - mu) ** 2).mean(-1, keepdims=True)
        return (v - mu) * jax.lax.rsqrt(var + 1e-6)

    def adaln(blk):
        ada = jax.nn.silu(c) @ p32["wada"][blk] + p32["bada"][blk][0]
        return jnp.split(ada, 6, axis=-1)

    sm_c, sc_c, gm_c, smlp_c, sclp_c, gmlp_c = adaln(0)
    sm_x, sc_x, gm_x, smlp_x, sclp_x, gmlp_x = adaln(1)

    def pre(h, blk, shift, scale):
        mod = ln(h) * (1 + scale[:, None, :]) + shift[:, None, :]
        return mod @ p32["wqkv"][blk] + p32["bqkv"][blk][0]

    qkv = jnp.concatenate([pre(context, 0, sm_c, sc_c),
                           pre(x, 1, sm_x, sc_x)], axis=1)       # (B, T, 3D)
    q, k, v = qkv[..., :D], qkv[..., D:2 * D], qkv[..., 2 * D:]
    B, T, _ = q.shape
    qh = q.reshape(B, T, heads, dh).transpose(0, 2, 1, 3)
    kh = k.reshape(B, T, heads, dh).transpose(0, 2, 1, 3)
    vh = v.reshape(B, T, heads, dh).transpose(0, 2, 1, 3)
    s = jnp.einsum("bhqd,bhkd->bhqk", qh, kh) / math.sqrt(dh)
    a = jax.nn.softmax(s, axis=-1)
    o = jnp.einsum("bhqk,bhkd->bhqd", a, vh).transpose(0, 2, 1, 3).reshape(B, T, D)
    attn_c, attn_x = o[:, :Tc], o[:, Tc:]

    def post(h, att, blk, gm, smlp, sclp, gmlp):
        h = h + gm[:, None, :] * (att @ p32["wproj"][blk] + p32["bproj"][blk][0])
        mod = ln(h) * (1 + sclp[:, None, :]) + smlp[:, None, :]
        ff = _gelu_tanh(mod @ p32["wfc1"][blk] + p32["bfc1"][blk][0])
        ff = ff @ p32["wfc2"][blk] + p32["bfc2"][blk][0]
        return h + gmlp[:, None, :] * ff

    return (post(context, attn_c, 0, gm_c, smlp_c, sclp_c, gmlp_c),
            post(x, attn_x, 1, gm_x, smlp_x, sclp_x, gmlp_x))


# -------------------------------------------------------------------- main ---
if __name__ == "__main__":
    B, Tc, Tx = 2, 8, 16
    D, HEADS = 128, 2            # head_dim = 64 (as in SD3), lane-dense last dim
    HIDDEN = 4 * D

    key = jax.random.PRNGKey(0)
    keys = jax.random.split(key, 16)

    def rand(k, shape, scale=0.02):
        return jax.random.normal(k, shape, jnp.float32) * scale

    # f32 "PyTorch" parameters; leading axis: 0 = context_block, 1 = x_block.
    p32 = dict(
        wada=rand(keys[0], (2, D, 6 * D)), bada=rand(keys[1], (2, 1, 6 * D)),
        wqkv=rand(keys[2], (2, D, 3 * D)), bqkv=rand(keys[3], (2, 1, 3 * D)),
        wproj=rand(keys[4], (2, D, D)), bproj=rand(keys[5], (2, 1, D)),
        wfc1=rand(keys[6], (2, D, HIDDEN)), bfc1=rand(keys[7], (2, 1, HIDDEN)),
        wfc2=rand(keys[8], (2, HIDDEN, D)), bfc2=rand(keys[9], (2, 1, D)),
    )
    # Kernel params: weights bf16 (MXU operands), biases f32.
    params = {k: (v.astype(jnp.bfloat16) if k.startswith("w") else v)
              for k, v in p32.items()}

    context = jax.random.normal(keys[10], (B, Tc, D), jnp.float32)
    x = jax.random.normal(keys[11], (B, Tx, D), jnp.float32)
    c = jax.random.normal(keys[12], (B, D), jnp.float32)

    ctx_out, x_out = joint_block(context, x, c, params, dim=D, heads=HEADS)
    ctx_out, x_out = jax.block_until_ready((ctx_out, x_out))

    ref_ctx, ref_x = _ref_joint_block(context, x, c, p32, D, HEADS)
    assert ctx_out.shape == (B, Tc, D) and x_out.shape == (B, Tx, D)
    # bf16 matmul operands -> relaxed tolerance vs the f32 reference.
    assert jnp.allclose(ctx_out, ref_ctx, atol=2e-2, rtol=2e-2), "context mismatch"
    assert jnp.allclose(x_out, ref_x, atol=2e-2, rtol=2e-2), "x mismatch"

    print("KERNEL_OK")
</pallas_src>

<mosaic_0001>
module attributes {stable_mosaic.version = 11 : i64} {
  func.func @joint_block_kernel(%arg0: i32, %arg1: memref<1x8x128xf32, #tpu.memory_space<vmem>>, %arg2: memref<1x16x128xf32, #tpu.memory_space<vmem>>, %arg3: memref<1x1x128xf32, #tpu.memory_space<vmem>>, %arg4: memref<2x128x768xbf16, #tpu.memory_space<vmem>>, %arg5: memref<2x1x768xf32, #tpu.memory_space<vmem>>, %arg6: memref<2x128x384xbf16, #tpu.memory_space<vmem>>, %arg7: memref<2x1x384xf32, #tpu.memory_space<vmem>>, %arg8: memref<2x128x128xbf16, #tpu.memory_space<vmem>>, %arg9: memref<2x1x128xf32, #tpu.memory_space<vmem>>, %arg10: memref<2x128x512xbf16, #tpu.memory_space<vmem>>, %arg11: memref<2x1x512xf32, #tpu.memory_space<vmem>>, %arg12: memref<2x512x128xbf16, #tpu.memory_space<vmem>>, %arg13: memref<2x1x128xf32, #tpu.memory_space<vmem>>, %arg14: memref<1x8x128xf32, #tpu.memory_space<vmem>>, %arg15: memref<1x16x128xf32, #tpu.memory_space<vmem>>) attributes {dimension_semantics = [#tpu.dimension_semantics<parallel>], iteration_bounds = array<i64: 2>, scalar_prefetch = 0 : i64, scratch_operands = 0 : i64, tpu.core_type = #tpu.core_type<tc>, window_params = [{transform_indices = @transform_0, window_bounds = array<i64: 1, 8, 128>}, {transform_indices = @transform_1, window_bounds = array<i64: 1, 16, 128>}, {transform_indices = @transform_2, window_bounds = array<i64: 1, 1, 128>}, {pipeline_mode = #tpu.pipeline_mode<synchronous>, transform_indices = @transform_3, window_bounds = array<i64: 2, 128, 768>}, {pipeline_mode = #tpu.pipeline_mode<synchronous>, transform_indices = @transform_4, window_bounds = array<i64: 2, 1, 768>}, {pipeline_mode = #tpu.pipeline_mode<synchronous>, transform_indices = @transform_5, window_bounds = array<i64: 2, 128, 384>}, {pipeline_mode = #tpu.pipeline_mode<synchronous>, transform_indices = @transform_6, window_bounds = array<i64: 2, 1, 384>}, {pipeline_mode = #tpu.pipeline_mode<synchronous>, transform_indices = @transform_7, window_bounds = array<i64: 2, 128, 128>}, {pipeline_mode = #tpu.pipeline_mode<synchronous>, transform_indices = @transform_8, window_bounds = array<i64: 2, 1, 128>}, {pipeline_mode = #tpu.pipeline_mode<synchronous>, transform_indices = @transform_9, window_bounds = array<i64: 2, 128, 512>}, {pipeline_mode = #tpu.pipeline_mode<synchronous>, transform_indices = @transform_10, window_bounds = array<i64: 2, 1, 512>}, {pipeline_mode = #tpu.pipeline_mode<synchronous>, transform_indices = @transform_11, window_bounds = array<i64: 2, 512, 128>}, {pipeline_mode = #tpu.pipeline_mode<synchronous>, transform_indices = @transform_12, window_bounds = array<i64: 2, 1, 128>}, {transform_indices = @transform_13, window_bounds = array<i64: 1, 8, 128>}, {transform_indices = @transform_14, window_bounds = array<i64: 1, 16, 128>}]} {
    %c0 = arith.constant 0 : index
    %c0_0 = arith.constant 0 : index
    %c0_1 = arith.constant 0 : index
    %0 = vector.load %arg1[%c0, %c0_0, %c0_1] : memref<1x8x128xf32, #tpu.memory_space<vmem>>, vector<1x8x128xf32>
    %1 = vector.shape_cast %0 : vector<1x8x128xf32> to vector<8x128xf32>
    %c0_2 = arith.constant 0 : index
    %c0_3 = arith.constant 0 : index
    %c0_4 = arith.constant 0 : index
    %2 = vector.load %arg2[%c0_2, %c0_3, %c0_4] : memref<1x16x128xf32, #tpu.memory_space<vmem>>, vector<1x16x128xf32>
    %3 = vector.shape_cast %2 : vector<1x16x128xf32> to vector<16x128xf32>
    %c0_5 = arith.constant 0 : index
    %c0_6 = arith.constant 0 : index
    %c0_7 = arith.constant 0 : index
    %4 = vector.load %arg3[%c0_5, %c0_6, %c0_7] : memref<1x1x128xf32, #tpu.memory_space<vmem>>, vector<1x1x128xf32>
    %5 = vector.shape_cast %4 : vector<1x1x128xf32> to vector<1x128xf32>
    %6 = arith.negf %5 : vector<1x128xf32>
    %7 = math.exp %6 : vector<1x128xf32>
    %cst = arith.constant 1.000000e+00 : f32
    %8 = vector.broadcast %cst : f32 to vector<1x128xf32>
    %9 = arith.addf %8, %7 : vector<1x128xf32>
    %10 = arith.divf %8, %9 : vector<1x128xf32>
    %11 = arith.mulf %5, %10 : vector<1x128xf32>
    %12 = arith.truncf %11 : vector<1x128xf32> to vector<1x128xbf16>
    %c0_8 = arith.constant 0 : index
    %c0_9 = arith.constant 0 : index
    %c0_10 = arith.constant 0 : index
    %13 = vector.load %arg4[%c0_8, %c0_9, %c0_10] : memref<2x128x768xbf16, #tpu.memory_space<vmem>>, vector<1x128x768xbf16>
    %14 = vector.shape_cast %13 : vector<1x128x768xbf16> to vector<128x768xbf16>
    %cst_11 = arith.constant dense<0.000000e+00> : vector<1x768xf32>
    %15 = tpu.matmul %12, %14, %cst_11 {dimension_numbers = #tpu.dot_dimension_numbers<[1], [0], [0], [1], [0, 0, 1, 1], [], []>} : vector<1x128xbf16>, vector<128x768xbf16>, vector<1x768xf32> -> vector<1x768xf32>
    %c0_12 = arith.constant 0 : index
    %c0_13 = arith.constant 0 : index
    %c0_14 = arith.constant 0 : index
    %16 = vector.load %arg5[%c0_12, %c0_13, %c0_14] : memref<2x1x768xf32, #tpu.memory_space<vmem>>, vector<1x1x768xf32>
    %17 = vector.shape_cast %16 : vector<1x1x768xf32> to vector<1x768xf32>
    %18 = arith.addf %15, %17 : vector<1x768xf32>
    %19 = vector.extract_strided_slice %18 {offsets = [0, 0], sizes = [1, 128], strides = [1, 1]} : vector<1x768xf32> to vector<1x128xf32>
    %20 = vector.extract_strided_slice %18 {offsets = [0, 128], sizes = [1, 128], strides = [1, 1]} : vector<1x768xf32> to vector<1x128xf32>
    %21 = vector.extract_strided_slice %18 {offsets = [0, 256], sizes = [1, 128], strides = [1, 1]} : vector<1x768xf32> to vector<1x128xf32>
    %22 = vector.extract_strided_slice %18 {offsets = [0, 384], sizes = [1, 128], strides = [1, 1]} : vector<1x768xf32> to vector<1x128xf32>
    %23 = vector.extract_strided_slice %18 {offsets = [0, 512], sizes = [1, 128], strides = [1, 1]} : vector<1x768xf32> to vector<1x128xf32>
    %24 = vector.extract_strided_slice %18 {offsets = [0, 640], sizes = [1, 128], strides = [1, 1]} : vector<1x768xf32> to vector<1x128xf32>
    %c1 = arith.constant 1 : index
    %c0_15 = arith.constant 0 : index
    %c0_16 = arith.constant 0 : index
    %25 = vector.load %arg4[%c1, %c0_15, %c0_16] : memref<2x128x768xbf16, #tpu.memory_space<vmem>>, vector<1x128x768xbf16>
    %26 = vector.shape_cast %25 : vector<1x128x768xbf16> to vector<128x768xbf16>
    %cst_17 = arith.constant dense<0.000000e+00> : vector<1x768xf32>
    %27 = tpu.matmul %12, %26, %cst_17 {dimension_numbers = #tpu.dot_dimension_numbers<[1], [0], [0], [1], [0, 0, 1, 1], [], []>} : vector<1x128xbf16>, vector<128x768xbf16>, vector<1x768xf32> -> vector<1x768xf32>
    %c1_18 = arith.constant 1 : index
    %c0_19 = arith.constant 0 : index
    %c0_20 = arith.constant 0 : index
    %28 = vector.load %arg5[%c1_18, %c0_19, %c0_20] : memref<2x1x768xf32, #tpu.memory_space<vmem>>, vector<1x1x768xf32>
    %29 = vector.shape_cast %28 : vector<1x1x768xf32> to vector<1x768xf32>
    %30 = arith.addf %27, %29 : vector<1x768xf32>
    %31 = vector.extract_strided_slice %30 {offsets = [0, 0], sizes = [1, 128], strides = [1, 1]} : vector<1x768xf32> to vector<1x128xf32>
    %32 = vector.extract_strided_slice %30 {offsets = [0, 128], sizes = [1, 128], strides = [1, 1]} : vector<1x768xf32> to vector<1x128xf32>
    %33 = vector.extract_strided_slice %30 {offsets = [0, 256], sizes = [1, 128], strides = [1, 1]} : vector<1x768xf32> to vector<1x128xf32>
    %34 = vector.extract_strided_slice %30 {offsets = [0, 384], sizes = [1, 128], strides = [1, 1]} : vector<1x768xf32> to vector<1x128xf32>
    %35 = vector.extract_strided_slice %30 {offsets = [0, 512], sizes = [1, 128], strides = [1, 1]} : vector<1x768xf32> to vector<1x128xf32>
    %36 = vector.extract_strided_slice %30 {offsets = [0, 640], sizes = [1, 128], strides = [1, 1]} : vector<1x768xf32> to vector<1x128xf32>
    %cst_21 = arith.constant dense<0.000000e+00> : vector<8xf32>
    %37 = vector.multi_reduction <add>, %1, %cst_21 [1] : vector<8x128xf32> to vector<8xf32>
    %38 = vector.shape_cast %37 : vector<8xf32> to vector<8x1xf32>
    %cst_22 = arith.constant 1.280000e+02 : f32
    %39 = vector.broadcast %cst_22 : f32 to vector<8x1xf32>
    %40 = arith.divf %38, %39 : vector<8x1xf32>
    %41 = arith.mulf %1, %1 : vector<8x128xf32>
    %cst_23 = arith.constant dense<0.000000e+00> : vector<8xf32>
    %42 = vector.multi_reduction <add>, %41, %cst_23 [1] : vector<8x128xf32> to vector<8xf32>
    %43 = vector.shape_cast %42 : vector<8xf32> to vector<8x1xf32>
    %cst_24 = arith.constant 1.280000e+02 : f32
    %44 = vector.broadcast %cst_24 : f32 to vector<8x1xf32>
    %45 = arith.divf %43, %44 : vector<8x1xf32>
    %46 = arith.mulf %40, %40 : vector<8x1xf32>
    %47 = arith.subf %45, %46 : vector<8x1xf32>
    %48 = vector.broadcast %40 : vector<8x1xf32> to vector<8x128xf32>
    %49 = arith.subf %1, %48 : vector<8x128xf32>
    %cst_25 = arith.constant 9.99999997E-7 : f32
    %50 = vector.broadcast %cst_25 : f32 to vector<8x1xf32>
    %51 = arith.addf %47, %50 : vector<8x1xf32>
    %52 = math.rsqrt %51 : vector<8x1xf32>
    %53 = vector.broadcast %52 : vector<8x1xf32> to vector<8x128xf32>
    %54 = arith.mulf %49, %53 : vector<8x128xf32>
    %cst_26 = arith.constant 1.000000e+00 : f32
    %55 = vector.broadcast %cst_26 : f32 to vector<1x128xf32>
    %56 = arith.addf %55, %20 : vector<1x128xf32>
    %57 = vector.broadcast %56 : vector<1x128xf32> to vector<8x128xf32>
    %58 = arith.mulf %54, %57 : vector<8x128xf32>
    %59 = vector.broadcast %19 : vector<1x128xf32> to vector<8x128xf32>
    %60 = arith.addf %58, %59 : vector<8x128xf32>
    %61 = arith.truncf %60 : vector<8x128xf32> to vector<8x128xbf16>
    %c0_27 = arith.constant 0 : index
    %c0_28 = arith.constant 0 : index
    %c0_29 = arith.constant 0 : index
    %62 = vector.load %arg6[%c0_27, %c0_28, %c0_29] : memref<2x128x384xbf16, #tpu.memory_space<vmem>>, vector<1x128x384xbf16>
    %63 = vector.shape_cast %62 : vector<1x128x384xbf16> to vector<128x384xbf16>
    %cst_30 = arith.constant dense<0.000000e+00> : vector<8x384xf32>
    %64 = tpu.matmul %61, %63, %cst_30 {dimension_numbers = #tpu.dot_dimension_numbers<[1], [0], [0], [1], [0, 0, 1, 1], [], []>} : vector<8x128xbf16>, vector<128x384xbf16>, vector<8x384xf32> -> vector<8x384xf32>
    %c0_31 = arith.constant 0 : index
    %c0_32 = arith.constant 0 : index
    %c0_33 = arith.constant 0 : index
    %65 = vector.load %arg7[%c0_31, %c0_32, %c0_33] : memref<2x1x384xf32, #tpu.memory_space<vmem>>, vector<1x1x384xf32>
    %66 = vector.shape_cast %65 : vector<1x1x384xf32> to vector<1x384xf32>
    %67 = vector.broadcast %66 : vector<1x384xf32> to vector<8x384xf32>
    %68 = arith.addf %64, %67 : vector<8x384xf32>
    %cst_34 = arith.constant dense<0.000000e+00> : vector<16xf32>
    %69 = vector.multi_reduction <add>, %3, %cst_34 [1] : vector<16x128xf32> to vector<16xf32>
    %70 = vector.shape_cast %69 : vector<16xf32> to vector<16x1xf32>
    %cst_35 = arith.constant 1.280000e+02 : f32
    %71 = vector.broadcast %cst_35 : f32 to vector<16x1xf32>
    %72 = arith.divf %70, %71 : vector<16x1xf32>
    %73 = arith.mulf %3, %3 : vector<16x128xf32>
    %cst_36 = arith.constant dense<0.000000e+00> : vector<16xf32>
    %74 = vector.multi_reduction <add>, %73, %cst_36 [1] : vector<16x128xf32> to vector<16xf32>
    %75 = vector.shape_cast %74 : vector<16xf32> to vector<16x1xf32>
    %cst_37 = arith.constant 1.280000e+02 : f32
    %76 = vector.broadcast %cst_37 : f32 to vector<16x1xf32>
    %77 = arith.divf %75, %76 : vector<16x1xf32>
    %78 = arith.mulf %72, %72 : vector<16x1xf32>
    %79 = arith.subf %77, %78 : vector<16x1xf32>
    %80 = vector.broadcast %72 : vector<16x1xf32> to vector<16x128xf32>
    %81 = arith.subf %3, %80 : vector<16x128xf32>
    %cst_38 = arith.constant 9.99999997E-7 : f32
    %82 = vector.broadcast %cst_38 : f32 to vector<16x1xf32>
    %83 = arith.addf %79, %82 : vector<16x1xf32>
    %84 = math.rsqrt %83 : vector<16x1xf32>
    %85 = vector.broadcast %84 : vector<16x1xf32> to vector<16x128xf32>
    %86 = arith.mulf %81, %85 : vector<16x128xf32>
    %cst_39 = arith.constant 1.000000e+00 : f32
    %87 = vector.broadcast %cst_39 : f32 to vector<1x128xf32>
    %88 = arith.addf %87, %32 : vector<1x128xf32>
    %89 = vector.broadcast %88 : vector<1x128xf32> to vector<16x128xf32>
    %90 = arith.mulf %86, %89 : vector<16x128xf32>
    %91 = vector.broadcast %31 : vector<1x128xf32> to vector<16x128xf32>
    %92 = arith.addf %90, %91 : vector<16x128xf32>
    %93 = arith.truncf %92 : vector<16x128xf32> to vector<16x128xbf16>
    %c1_40 = arith.constant 1 : index
    %c0_41 = arith.constant 0 : index
    %c0_42 = arith.constant 0 : index
    %94 = vector.load %arg6[%c1_40, %c0_41, %c0_42] : memref<2x128x384xbf16, #tpu.memory_space<vmem>>, vector<1x128x384xbf16>
    %95 = vector.shape_cast %94 : vector<1x128x384xbf16> to vector<128x384xbf16>
    %cst_43 = arith.constant dense<0.000000e+00> : vector<16x384xf32>
    %96 = tpu.matmul %93, %95, %cst_43 {dimension_numbers = #tpu.dot_dimension_numbers<[1], [0], [0], [1], [0, 0, 1, 1], [], []>} : vector<16x128xbf16>, vector<128x384xbf16>, vector<16x384xf32> -> vector<16x384xf32>
    %c1_44 = arith.constant 1 : index
    %c0_45 = arith.constant 0 : index
    %c0_46 = arith.constant 0 : index
    %97 = vector.load %arg7[%c1_44, %c0_45, %c0_46] : memref<2x1x384xf32, #tpu.memory_space<vmem>>, vector<1x1x384xf32>
    %98 = vector.shape_cast %97 : vector<1x1x384xf32> to vector<1x384xf32>
    %99 = vector.broadcast %98 : vector<1x384xf32> to vector<16x384xf32>
    %100 = arith.addf %96, %99 : vector<16x384xf32>
    %101 = tpu.concatenate %68, %100 in 0 : vector<8x384xf32>, vector<16x384xf32> -> vector<24x384xf32>
    %102 = vector.extract_strided_slice %101 {offsets = [0, 0], sizes = [24, 128], strides = [1, 1]} : vector<24x384xf32> to vector<24x128xf32>
    %cst_47 = arith.constant 1.250000e-01 : f32
    %103 = vector.broadcast %cst_47 : f32 to vector<24x128xf32>
    %104 = arith.mulf %102, %103 : vector<24x128xf32>
    %105 = vector.extract_strided_slice %101 {offsets = [0, 128], sizes = [24, 128], strides = [1, 1]} : vector<24x384xf32> to vector<24x128xf32>
    %106 = vector.extract_strided_slice %101 {offsets = [0, 256], sizes = [24, 128], strides = [1, 1]} : vector<24x384xf32> to vector<24x128xf32>
    %107 = vector.shape_cast %104 : vector<24x128xf32> to vector<24x2x64xf32>
    %108 = tpu.transpose %107, [1, 0, 2] : vector<24x2x64xf32> -> vector<2x24x64xf32>
    %109 = arith.truncf %108 : vector<2x24x64xf32> to vector<2x24x64xbf16>
    %110 = vector.shape_cast %105 : vector<24x128xf32> to vector<24x2x64xf32>
    %111 = tpu.transpose %110, [1, 0, 2] : vector<24x2x64xf32> -> vector<2x24x64xf32>
    %112 = arith.truncf %111 : vector<2x24x64xf32> to vector<2x24x64xbf16>
    %113 = vector.shape_cast %106 : vector<24x128xf32> to vector<24x2x64xf32>
    %114 = tpu.transpose %113, [1, 0, 2] : vector<24x2x64xf32> -> vector<2x24x64xf32>
    %115 = arith.truncf %114 : vector<2x24x64xf32> to vector<2x24x64xbf16>
    "tpu.trace_start"() <{level = 10 : i32, message = "hqd,hkd->hqk"}> : () -> ()
    %cst_48 = arith.constant dense<0.000000e+00> : vector<2x24x24xf32>
    %116 = tpu.matmul %109, %112, %cst_48 {dimension_numbers = #tpu.dot_dimension_numbers<[2], [2], [1], [1], [0, 0, 0, 1, 1, 1], [0], [0]>} : vector<2x24x64xbf16>, vector<2x24x64xbf16>, vector<2x24x24xf32> -> vector<2x24x24xf32>
    "tpu.trace_stop"() : () -> ()
    %cst_49 = arith.constant dense<0xFF800000> : vector<2x24xf32>
    %117 = vector.multi_reduction <maximumf>, %116, %cst_49 [2] : vector<2x24x24xf32> to vector<2x24xf32>
    %118 = vector.shape_cast %117 : vector<2x24xf32> to vector<2x24x1xf32>
    %119 = vector.broadcast %118 : vector<2x24x1xf32> to vector<2x24x24xf32>
    %120 = arith.subf %116, %119 : vector<2x24x24xf32>
    %121 = math.exp %120 : vector<2x24x24xf32>
    %cst_50 = arith.constant dense<0.000000e+00> : vector<2x24xf32>
    %122 = vector.multi_reduction <add>, %121, %cst_50 [2] : vector<2x24x24xf32> to vector<2x24xf32>
    %123 = vector.shape_cast %122 : vector<2x24xf32> to vector<2x24x1xf32>
    %124 = tpu.reciprocal %123 {approx = true} : vector<2x24x1xf32> -> vector<2x24x1xf32>
    %125 = vector.broadcast %124 : vector<2x24x1xf32> to vector<2x24x24xf32>
    %126 = arith.mulf %121, %125 : vector<2x24x24xf32>
    %127 = arith.truncf %126 : vector<2x24x24xf32> to vector<2x24x24xbf16>
    "tpu.trace_start"() <{level = 10 : i32, message = "hqk,hkd->hqd"}> : () -> ()
    %cst_51 = arith.constant dense<0.000000e+00> : vector<2x24x64xf32>
    %128 = tpu.matmul %127, %115, %cst_51 {dimension_numbers = #tpu.dot_dimension_numbers<[2], [1], [1], [2], [0, 0, 0, 1, 1, 2], [0], [0]>} : vector<2x24x24xbf16>, vector<2x24x64xbf16>, vector<2x24x64xf32> -> vector<2x24x64xf32>
    "tpu.trace_stop"() : () -> ()
    %129 = tpu.transpose %128, [1, 0, 2] : vector<2x24x64xf32> -> vector<24x2x64xf32>
    %130 = vector.shape_cast %129 : vector<24x2x64xf32> to vector<24x128xf32>
    %131 = vector.extract_strided_slice %130 {offsets = [0, 0], sizes = [8, 128], strides = [1, 1]} : vector<24x128xf32> to vector<8x128xf32>
    %132 = vector.extract_strided_slice %130 {offsets = [8, 0], sizes = [16, 128], strides = [1, 1]} : vector<24x128xf32> to vector<16x128xf32>
    %133 = arith.truncf %131 : vector<8x128xf32> to vector<8x128xbf16>
    %c0_52 = arith.constant 0 : index
    %c0_53 = arith.constant 0 : index
    %c0_54 = arith.constant 0 : index
    %134 = vector.load %arg8[%c0_52, %c0_53, %c0_54] : memref<2x128x128xbf16, #tpu.memory_space<vmem>>, vector<1x128x128xbf16>
    %135 = vector.shape_cast %134 : vector<1x128x128xbf16> to vector<128x128xbf16>
    %cst_55 = arith.constant dense<0.000000e+00> : vector<8x128xf32>
    %136 = tpu.matmul %133, %135, %cst_55 {dimension_numbers = #tpu.dot_dimension_numbers<[1], [0], [0], [1], [0, 0, 1, 1], [], []>} : vector<8x128xbf16>, vector<128x128xbf16>, vector<8x128xf32> -> vector<8x128xf32>
    %c0_56 = arith.constant 0 : index
    %c0_57 = arith.constant 0 : index
    %c0_58 = arith.constant 0 : index
    %137 = vector.load %arg9[%c0_56, %c0_57, %c0_58] : memref<2x1x128xf32, #tpu.memory_space<vmem>>, vector<1x1x128xf32>
    %138 = vector.shape_cast %137 : vector<1x1x128xf32> to vector<1x128xf32>
    %139 = vector.broadcast %138 : vector<1x128xf32> to vector<8x128xf32>
    %140 = arith.addf %136, %139 : vector<8x128xf32>
    %141 = vector.broadcast %21 : vector<1x128xf32> to vector<8x128xf32>
    %142 = arith.mulf %141, %140 : vector<8x128xf32>
    %143 = arith.addf %1, %142 : vector<8x128xf32>
    %cst_59 = arith.constant dense<0.000000e+00> : vector<8xf32>
    %144 = vector.multi_reduction <add>, %143, %cst_59 [1] : vector<8x128xf32> to vector<8xf32>
    %145 = vector.shape_cast %144 : vector<8xf32> to vector<8x1xf32>
    %cst_60 = arith.constant 1.280000e+02 : f32
    %146 = vector.broadcast %cst_60 : f32 to vector<8x1xf32>
    %147 = arith.divf %145, %146 : vector<8x1xf32>
    %148 = arith.mulf %143, %143 : vector<8x128xf32>
    %cst_61 = arith.constant dense<0.000000e+00> : vector<8xf32>
    %149 = vector.multi_reduction <add>, %148, %cst_61 [1] : vector<8x128xf32> to vector<8xf32>
    %150 = vector.shape_cast %149 : vector<8xf32> to vector<8x1xf32>
    %cst_62 = arith.constant 1.280000e+02 : f32
    %151 = vector.broadcast %cst_62 : f32 to vector<8x1xf32>
    %152 = arith.divf %150, %151 : vector<8x1xf32>
    %153 = arith.mulf %147, %147 : vector<8x1xf32>
    %154 = arith.subf %152, %153 : vector<8x1xf32>
    %155 = vector.broadcast %147 : vector<8x1xf32> to vector<8x128xf32>
    %156 = arith.subf %143, %155 : vector<8x128xf32>
    %cst_63 = arith.constant 9.99999997E-7 : f32
    %157 = vector.broadcast %cst_63 : f32 to vector<8x1xf32>
    %158 = arith.addf %154, %157 : vector<8x1xf32>
    %159 = math.rsqrt %158 : vector<8x1xf32>
    %160 = vector.broadcast %159 : vector<8x1xf32> to vector<8x128xf32>
    %161 = arith.mulf %156, %160 : vector<8x128xf32>
    %cst_64 = arith.constant 1.000000e+00 : f32
    %162 = vector.broadcast %cst_64 : f32 to vector<1x128xf32>
    %163 = arith.addf %162, %23 : vector<1x128xf32>
    %164 = vector.broadcast %163 : vector<1x128xf32> to vector<8x128xf32>
    %165 = arith.mulf %161, %164 : vector<8x128xf32>
    %166 = vector.broadcast %22 : vector<1x128xf32> to vector<8x128xf32>
    %167 = arith.addf %165, %166 : vector<8x128xf32>
    %168 = arith.truncf %167 : vector<8x128xf32> to vector<8x128xbf16>
    %c0_65 = arith.constant 0 : index
    %c0_66 = arith.constant 0 : index
    %c0_67 = arith.constant 0 : index
    %169 = vector.load %arg10[%c0_65, %c0_66, %c0_67] : memref<2x128x512xbf16, #tpu.memory_space<vmem>>, vector<1x128x512xbf16>
    %170 = vector.shape_cast %169 : vector<1x128x512xbf16> to vector<128x512xbf16>
    %cst_68 = arith.constant dense<0.000000e+00> : vector<8x512xf32>
    %171 = tpu.matmul %168, %170, %cst_68 {dimension_numbers = #tpu.dot_dimension_numbers<[1], [0], [0], [1], [0, 0, 1, 1], [], []>} : vector<8x128xbf16>, vector<128x512xbf16>, vector<8x512xf32> -> vector<8x512xf32>
    %c0_69 = arith.constant 0 : index
    %c0_70 = arith.constant 0 : index
    %c0_71 = arith.constant 0 : index
    %172 = vector.load %arg11[%c0_69, %c0_70, %c0_71] : memref<2x1x512xf32, #tpu.memory_space<vmem>>, vector<1x1x512xf32>
    %173 = vector.shape_cast %172 : vector<1x1x512xf32> to vector<1x512xf32>
    %174 = vector.broadcast %173 : vector<1x512xf32> to vector<8x512xf32>
    %175 = arith.addf %171, %174 : vector<8x512xf32>
    %cst_72 = arith.constant 5.000000e-01 : f32
    %176 = vector.broadcast %cst_72 : f32 to vector<8x512xf32>
    %177 = arith.mulf %176, %175 : vector<8x512xf32>
    %cst_73 = arith.constant 4.471500e-02 : f32
    %178 = vector.broadcast %cst_73 : f32 to vector<8x512xf32>
    %179 = arith.mulf %178, %175 : vector<8x512xf32>
    %180 = arith.mulf %179, %175 : vector<8x512xf32>
    %181 = arith.mulf %180, %175 : vector<8x512xf32>
    %182 = arith.addf %175, %181 : vector<8x512xf32>
    %cst_74 = arith.constant 0.797884583 : f32
    %183 = vector.broadcast %cst_74 : f32 to vector<8x512xf32>
    %184 = arith.mulf %183, %182 : vector<8x512xf32>
    %185 = math.tanh %184 : vector<8x512xf32>
    %cst_75 = arith.constant 1.000000e+00 : f32
    %186 = vector.broadcast %cst_75 : f32 to vector<8x512xf32>
    %187 = arith.addf %186, %185 : vector<8x512xf32>
    %188 = arith.mulf %177, %187 : vector<8x512xf32>
    %189 = arith.truncf %188 : vector<8x512xf32> to vector<8x512xbf16>
    %c0_76 = arith.constant 0 : index
    %c0_77 = arith.constant 0 : index
    %c0_78 = arith.constant 0 : index
    %190 = vector.load %arg12[%c0_76, %c0_77, %c0_78] : memref<2x512x128xbf16, #tpu.memory_space<vmem>>, vector<1x512x128xbf16>
    %191 = vector.shape_cast %190 : vector<1x512x128xbf16> to vector<512x128xbf16>
    %cst_79 = arith.constant dense<0.000000e+00> : vector<8x128xf32>
    %192 = tpu.matmul %189, %191, %cst_79 {dimension_numbers = #tpu.dot_dimension_numbers<[1], [0], [0], [1], [0, 0, 1, 1], [], []>} : vector<8x512xbf16>, vector<512x128xbf16>, vector<8x128xf32> -> vector<8x128xf32>
    %c0_80 = arith.constant 0 : index
    %c0_81 = arith.constant 0 : index
    %c0_82 = arith.constant 0 : index
    %193 = vector.load %arg13[%c0_80, %c0_81, %c0_82] : memref<2x1x128xf32, #tpu.memory_space<vmem>>, vector<1x1x128xf32>
    %194 = vector.shape_cast %193 : vector<1x1x128xf32> to vector<1x128xf32>
    %195 = vector.broadcast %194 : vector<1x128xf32> to vector<8x128xf32>
    %196 = arith.addf %192, %195 : vector<8x128xf32>
    %197 = vector.broadcast %24 : vector<1x128xf32> to vector<8x128xf32>
    %198 = arith.mulf %197, %196 : vector<8x128xf32>
    %199 = arith.addf %143, %198 : vector<8x128xf32>
    %200 = arith.truncf %132 : vector<16x128xf32> to vector<16x128xbf16>
    %c1_83 = arith.constant 1 : index
    %c0_84 = arith.constant 0 : index
    %c0_85 = arith.constant 0 : index
    %201 = vector.load %arg8[%c1_83, %c0_84, %c0_85] : memref<2x128x128xbf16, #tpu.memory_space<vmem>>, vector<1x128x128xbf16>
    %202 = vector.shape_cast %201 : vector<1x128x128xbf16> to vector<128x128xbf16>
    %cst_86 = arith.constant dense<0.000000e+00> : vector<16x128xf32>
    %203 = tpu.matmul %200, %202, %cst_86 {dimension_numbers = #tpu.dot_dimension_numbers<[1], [0], [0], [1], [0, 0, 1, 1], [], []>} : vector<16x128xbf16>, vector<128x128xbf16>, vector<16x128xf32> -> vector<16x128xf32>
    %c1_87 = arith.constant 1 : index
    %c0_88 = arith.constant 0 : index
    %c0_89 = arith.constant 0 : index
    %204 = vector.load %arg9[%c1_87, %c0_88, %c0_89] : memref<2x1x128xf32, #tpu.memory_space<vmem>>, vector<1x1x128xf32>
    %205 = vector.shape_cast %204 : vector<1x1x128xf32> to vector<1x128xf32>
    %206 = vector.broadcast %205 : vector<1x128xf32> to vector<16x128xf32>
    %207 = arith.addf %203, %206 : vector<16x128xf32>
    %208 = vector.broadcast %33 : vector<1x128xf32> to vector<16x128xf32>
    %209 = arith.mulf %208, %207 : vector<16x128xf32>
    %210 = arith.addf %3, %209 : vector<16x128xf32>
    %cst_90 = arith.constant dense<0.000000e+00> : vector<16xf32>
    %211 = vector.multi_reduction <add>, %210, %cst_90 [1] : vector<16x128xf32> to vector<16xf32>
    %212 = vector.shape_cast %211 : vector<16xf32> to vector<16x1xf32>
    %cst_91 = arith.constant 1.280000e+02 : f32
    %213 = vector.broadcast %cst_91 : f32 to vector<16x1xf32>
    %214 = arith.divf %212, %213 : vector<16x1xf32>
    %215 = arith.mulf %210, %210 : vector<16x128xf32>
    %cst_92 = arith.constant dense<0.000000e+00> : vector<16xf32>
    %216 = vector.multi_reduction <add>, %215, %cst_92 [1] : vector<16x128xf32> to vector<16xf32>
    %217 = vector.shape_cast %216 : vector<16xf32> to vector<16x1xf32>
    %cst_93 = arith.constant 1.280000e+02 : f32
    %218 = vector.broadcast %cst_93 : f32 to vector<16x1xf32>
    %219 = arith.divf %217, %218 : vector<16x1xf32>
    %220 = arith.mulf %214, %214 : vector<16x1xf32>
    %221 = arith.subf %219, %220 : vector<16x1xf32>
    %222 = vector.broadcast %214 : vector<16x1xf32> to vector<16x128xf32>
    %223 = arith.subf %210, %222 : vector<16x128xf32>
    %cst_94 = arith.constant 9.99999997E-7 : f32
    %224 = vector.broadcast %cst_94 : f32 to vector<16x1xf32>
    %225 = arith.addf %221, %224 : vector<16x1xf32>
    %226 = math.rsqrt %225 : vector<16x1xf32>
    %227 = vector.broadcast %226 : vector<16x1xf32> to vector<16x128xf32>
    %228 = arith.mulf %223, %227 : vector<16x128xf32>
    %cst_95 = arith.constant 1.000000e+00 : f32
    %229 = vector.broadcast %cst_95 : f32 to vector<1x128xf32>
    %230 = arith.addf %229, %35 : vector<1x128xf32>
    %231 = vector.broadcast %230 : vector<1x128xf32> to vector<16x128xf32>
    %232 = arith.mulf %228, %231 : vector<16x128xf32>
    %233 = vector.broadcast %34 : vector<1x128xf32> to vector<16x128xf32>
    %234 = arith.addf %232, %233 : vector<16x128xf32>
    %235 = arith.truncf %234 : vector<16x128xf32> to vector<16x128xbf16>
    %c1_96 = arith.constant 1 : index
    %c0_97 = arith.constant 0 : index
    %c0_98 = arith.constant 0 : index
    %236 = vector.load %arg10[%c1_96, %c0_97, %c0_98] : memref<2x128x512xbf16, #tpu.memory_space<vmem>>, vector<1x128x512xbf16>
    %237 = vector.shape_cast %236 : vector<1x128x512xbf16> to vector<128x512xbf16>
    %cst_99 = arith.constant dense<0.000000e+00> : vector<16x512xf32>
    %238 = tpu.matmul %235, %237, %cst_99 {dimension_numbers = #tpu.dot_dimension_numbers<[1], [0], [0], [1], [0, 0, 1, 1], [], []>} : vector<16x128xbf16>, vector<128x512xbf16>, vector<16x512xf32> -> vector<16x512xf32>
    %c1_100 = arith.constant 1 : index
    %c0_101 = arith.constant 0 : index
    %c0_102 = arith.constant 0 : index
    %239 = vector.load %arg11[%c1_100, %c0_101, %c0_102] : memref<2x1x512xf32, #tpu.memory_space<vmem>>, vector<1x1x512xf32>
    %240 = vector.shape_cast %239 : vector<1x1x512xf32> to vector<1x512xf32>
    %241 = vector.broadcast %240 : vector<1x512xf32> to vector<16x512xf32>
    %242 = arith.addf %238, %241 : vector<16x512xf32>
    %cst_103 = arith.constant 5.000000e-01 : f32
    %243 = vector.broadcast %cst_103 : f32 to vector<16x512xf32>
    %244 = arith.mulf %243, %242 : vector<16x512xf32>
    %cst_104 = arith.constant 4.471500e-02 : f32
    %245 = vector.broadcast %cst_104 : f32 to vector<16x512xf32>
    %246 = arith.mulf %245, %242 : vector<16x512xf32>
    %247 = arith.mulf %246, %242 : vector<16x512xf32>
    %248 = arith.mulf %247, %242 : vector<16x512xf32>
    %249 = arith.addf %242, %248 : vector<16x512xf32>
    %cst_105 = arith.constant 0.797884583 : f32
    %250 = vector.broadcast %cst_105 : f32 to vector<16x512xf32>
    %251 = arith.mulf %250, %249 : vector<16x512xf32>
    %252 = math.tanh %251 : vector<16x512xf32>
    %cst_106 = arith.constant 1.000000e+00 : f32
    %253 = vector.broadcast %cst_106 : f32 to vector<16x512xf32>
    %254 = arith.addf %253, %252 : vector<16x512xf32>
    %255 = arith.mulf %244, %254 : vector<16x512xf32>
    %256 = arith.truncf %255 : vector<16x512xf32> to vector<16x512xbf16>
    %c1_107 = arith.constant 1 : index
    %c0_108 = arith.constant 0 : index
    %c0_109 = arith.constant 0 : index
    %257 = vector.load %arg12[%c1_107, %c0_108, %c0_109] : memref<2x512x128xbf16, #tpu.memory_space<vmem>>, vector<1x512x128xbf16>
    %258 = vector.shape_cast %257 : vector<1x512x128xbf16> to vector<512x128xbf16>
    %cst_110 = arith.constant dense<0.000000e+00> : vector<16x128xf32>
    %259 = tpu.matmul %256, %258, %cst_110 {dimension_numbers = #tpu.dot_dimension_numbers<[1], [0], [0], [1], [0, 0, 1, 1], [], []>} : vector<16x512xbf16>, vector<512x128xbf16>, vector<16x128xf32> -> vector<16x128xf32>
    %c1_111 = arith.constant 1 : index
    %c0_112 = arith.constant 0 : index
    %c0_113 = arith.constant 0 : index
    %260 = vector.load %arg13[%c1_111, %c0_112, %c0_113] : memref<2x1x128xf32, #tpu.memory_space<vmem>>, vector<1x1x128xf32>
    %261 = vector.shape_cast %260 : vector<1x1x128xf32> to vector<1x128xf32>
    %262 = vector.broadcast %261 : vector<1x128xf32> to vector<16x128xf32>
    %263 = arith.addf %259, %262 : vector<16x128xf32>
    %264 = vector.broadcast %36 : vector<1x128xf32> to vector<16x128xf32>
    %265 = arith.mulf %264, %263 : vector<16x128xf32>
    %266 = arith.addf %210, %265 : vector<16x128xf32>
    %c0_114 = arith.constant 0 : index
    %c0_115 = arith.constant 0 : index
    %c0_116 = arith.constant 0 : index
    %267 = vector.load %arg14[%c0_114, %c0_115, %c0_116] : memref<1x8x128xf32, #tpu.memory_space<vmem>>, vector<1x8x128xf32>
    %268 = vector.shape_cast %267 : vector<1x8x128xf32> to vector<8x128xf32>
    %269 = vector.shape_cast %199 : vector<8x128xf32> to vector<1x8x128xf32>
    tpu.vector_store %arg14[%c0_114, %c0_115, %c0_116], %269 {strides = array<i32>} : memref<1x8x128xf32, #tpu.memory_space<vmem>>, vector<1x8x128xf32>,
    %c0_117 = arith.constant 0 : index
    %c0_118 = arith.constant 0 : index
    %c0_119 = arith.constant 0 : index
    %270 = vector.load %arg15[%c0_117, %c0_118, %c0_119] : memref<1x16x128xf32, #tpu.memory_space<vmem>>, vector<1x16x128xf32>
    %271 = vector.shape_cast %270 : vector<1x16x128xf32> to vector<16x128xf32>
    %272 = vector.shape_cast %266 : vector<16x128xf32> to vector<1x16x128xf32>
    tpu.vector_store %arg15[%c0_117, %c0_118, %c0_119], %272 {strides = array<i32>} : memref<1x16x128xf32, #tpu.memory_space<vmem>>, vector<1x16x128xf32>,
    return
  }
  func.func @transform_0(%arg0: i32) -> (i32, i32, i32) {
    %c0_i32 = arith.constant 0 : i32
    %c0_i32_0 = arith.constant 0 : i32
    %c0_i32_1 = arith.constant 0 : i32
    return %arg0, %c0_i32, %c0_i32_0 : i32, i32, i32
  }
  func.func @transform_1(%arg0: i32) -> (i32, i32, i32) {
    %c0_i32 = arith.constant 0 : i32
    %c0_i32_0 = arith.constant 0 : i32
    %c0_i32_1 = arith.constant 0 : i32
    return %arg0, %c0_i32, %c0_i32_0 : i32, i32, i32
  }
  func.func @transform_2(%arg0: i32) -> (i32, i32, i32) {
    %c0_i32 = arith.constant 0 : i32
    %c0_i32_0 = arith.constant 0 : i32
    %c0_i32_1 = arith.constant 0 : i32
    return %arg0, %c0_i32, %c0_i32_0 : i32, i32, i32
  }
  func.func @transform_3(%arg0: i32) -> (i32, i32, i32) {
    %c0_i32 = arith.constant 0 : i32
    %c0_i32_0 = arith.constant 0 : i32
    %c0_i32_1 = arith.constant 0 : i32
    %c0_i32_2 = arith.constant 0 : i32
    return %c0_i32, %c0_i32_0, %c0_i32_1 : i32, i32, i32
  }
  func.func @transform_4(%arg0: i32) -> (i32, i32, i32) {
    %c0_i32 = arith.constant 0 : i32
    %c0_i32_0 = arith.constant 0 : i32
    %c0_i32_1 = arith.constant 0 : i32
    %c0_i32_2 = arith.constant 0 : i32
    return %c0_i32, %c0_i32_0, %c0_i32_1 : i32, i32, i32
  }
  func.func @transform_5(%arg0: i32) -> (i32, i32, i32) {
    %c0_i32 = arith.constant 0 : i32
    %c0_i32_0 = arith.constant 0 : i32
    %c0_i32_1 = arith.constant 0 : i32
    %c0_i32_2 = arith.constant 0 : i32
    return %c0_i32, %c0_i32_0, %c0_i32_1 : i32, i32, i32
  }
  func.func @transform_6(%arg0: i32) -> (i32, i32, i32) {
    %c0_i32 = arith.constant 0 : i32
    %c0_i32_0 = arith.constant 0 : i32
    %c0_i32_1 = arith.constant 0 : i32
    %c0_i32_2 = arith.constant 0 : i32
    return %c0_i32, %c0_i32_0, %c0_i32_1 : i32, i32, i32
  }
  func.func @transform_7(%arg0: i32) -> (i32, i32, i32) {
    %c0_i32 = arith.constant 0 : i32
    %c0_i32_0 = arith.constant 0 : i32
    %c0_i32_1 = arith.constant 0 : i32
    %c0_i32_2 = arith.constant 0 : i32
    return %c0_i32, %c0_i32_0, %c0_i32_1 : i32, i32, i32
  }
  func.func @transform_8(%arg0: i32) -> (i32, i32, i32) {
    %c0_i32 = arith.constant 0 : i32
    %c0_i32_0 = arith.constant 0 : i32
    %c0_i32_1 = arith.constant 0 : i32
    %c0_i32_2 = arith.constant 0 : i32
    return %c0_i32, %c0_i32_0, %c0_i32_1 : i32, i32, i32
  }
  func.func @transform_9(%arg0: i32) -> (i32, i32, i32) {
    %c0_i32 = arith.constant 0 : i32
    %c0_i32_0 = arith.constant 0 : i32
    %c0_i32_1 = arith.constant 0 : i32
    %c0_i32_2 = arith.constant 0 : i32
    return %c0_i32, %c0_i32_0, %c0_i32_1 : i32, i32, i32
  }
  func.func @transform_10(%arg0: i32) -> (i32, i32, i32) {
    %c0_i32 = arith.constant 0 : i32
    %c0_i32_0 = arith.constant 0 : i32
    %c0_i32_1 = arith.constant 0 : i32
    %c0_i32_2 = arith.constant 0 : i32
    return %c0_i32, %c0_i32_0, %c0_i32_1 : i32, i32, i32
  }
  func.func @transform_11(%arg0: i32) -> (i32, i32, i32) {
    %c0_i32 = arith.constant 0 : i32
    %c0_i32_0 = arith.constant 0 : i32
    %c0_i32_1 = arith.constant 0 : i32
    %c0_i32_2 = arith.constant 0 : i32
    return %c0_i32, %c0_i32_0, %c0_i32_1 : i32, i32, i32
  }
  func.func @transform_12(%arg0: i32) -> (i32, i32, i32) {
    %c0_i32 = arith.constant 0 : i32
    %c0_i32_0 = arith.constant 0 : i32
    %c0_i32_1 = arith.constant 0 : i32
    %c0_i32_2 = arith.constant 0 : i32
    return %c0_i32, %c0_i32_0, %c0_i32_1 : i32, i32, i32
  }
  func.func @transform_13(%arg0: i32) -> (i32, i32, i32) {
    %c0_i32 = arith.constant 0 : i32
    %c0_i32_0 = arith.constant 0 : i32
    %c0_i32_1 = arith.constant 0 : i32
    return %arg0, %c0_i32, %c0_i32_0 : i32, i32, i32
  }
  func.func @transform_14(%arg0: i32) -> (i32, i32, i32) {
    %c0_i32 = arith.constant 0 : i32
    %c0_i32_0 = arith.constant 0 : i32
    %c0_i32_1 = arith.constant 0 : i32
    return %arg0, %c0_i32, %c0_i32_0 : i32, i32, i32
  }
}

</mosaic_0001>

<llo_original>
// kernel: tpu_custom_call.1
$region0: #{tpu_custom_call.1}
  #allocation0 [shape = 'u32[]', space=smem, size = 0x4, offset = 0x4, fixed_abs, tag = 'smem constant byte address 0x4 - core index']
  #allocation1 [shape = 'u32[72,128]{1,0:T(1,128)}', space=vmem, size = 0x9000, scoped, tag = 'internal scratch']
  %s0 = inlined_call_operand.hbm [shape: f32[2,8,128], index: 0, kind: input, shape index: {}]
  %s1 = inlined_call_operand.hbm [shape: f32[2,16,128], index: 1, kind: input, shape index: {}]
  %s2 = inlined_call_operand.hbm [shape: f32[2,1,128], index: 2, kind: input, shape index: {}]
  %s3 = inlined_call_operand.hbm [shape: bf16[2,128,768], index: 3, kind: input, shape index: {}]
  %s4 = inlined_call_operand.hbm [shape: f32[2,1,768], index: 4, kind: input, shape index: {}]
  %s5 = inlined_call_operand.hbm [shape: bf16[2,128,384], index: 5, kind: input, shape index: {}]
  %s6 = inlined_call_operand.hbm [shape: f32[2,1,384], index: 6, kind: input, shape index: {}]
  %s7 = inlined_call_operand.hbm [shape: bf16[2,128,128], index: 7, kind: input, shape index: {}]
  %s8 = inlined_call_operand.hbm [shape: f32[2,1,128], index: 8, kind: input, shape index: {}]
  %s9 = inlined_call_operand.hbm [shape: bf16[2,128,512], index: 9, kind: input, shape index: {}]
  %s10 = inlined_call_operand.vmem [shape: f32[2,1,512], index: 10, kind: input, shape index: {}]
  %s11 = inlined_call_operand.hbm [shape: bf16[2,512,128], index: 11, kind: input, shape index: {}]
  %s12 = inlined_call_operand.vmem [shape: f32[2,1,128], index: 12, kind: input, shape index: {}]
  %s13 = inlined_call_operand.hbm [shape: f32[2,8,128], index: 13, kind: output, shape index: {0}]
  %s14 = inlined_call_operand.hbm [shape: f32[2,16,128], index: 14, kind: output, shape index: {1}]
  %15 = xla_tuple %s13, %s14
  %s16 = sld [smem:[#allocation0]]
  $region137: #{tpu_custom_call.1} parent=0
    _
  %s18 = ssub.s32 1, %s16
  %s19 = scalar_select 0, %s18, %s16
  $region1: #{tpu_custom_call.1} parent=0
    #allocation2 [shape = 'u8[8192]{0}', space=vmem, size = 0x2000, scoped, tag = 'input window, operand 0']
    #allocation3 [shape = 's32[2]{0}', space=sflag, size = 0x8, scoped, tag = 'scoped memory for tpu_custom_call.1']
    #allocation4 [shape = 's32[2]{0}', space=sflag, size = 0x8, scoped, tag = 'scoped memory for tpu_custom_call.1']
    #allocation5 [shape = 'u8[16384]{0}', space=vmem, size = 0x4000, scoped, tag = 'input window, operand 1']
    #allocation6 [shape = 's32[2]{0}', space=sflag, size = 0x8, scoped, tag = 'scoped memory for tpu_custom_call.1']
    #allocation7 [shape = 'u8[1024]{0}', space=vmem, size = 0x400, scoped, tag = 'input window, operand 2']
    #allocation8 [shape = 'u8[393216]{0}', space=vmem, size = 0x60000, scoped, tag = 'input window, operand 3, single buffered']
    #allocation9 [shape = 's32[1]{0}', space=sflag, size = 0x4, scoped, tag = 'scoped memory for tpu_custom_call.1']
    #allocation10 [shape = 'u8[6144]{0}', space=vmem, size = 0x1800, scoped, tag = 'input window, operand 4, single buffered']
    #allocation11 [shape = 'u8[196608]{0}', space=vmem, size = 0x30000, scoped, tag = 'input window, operand 5, single buffered']
    #allocation12 [shape = 's32[1]{0}', space=sflag, size = 0x4, scoped, tag = 'scoped memory for tpu_custom_call.1']
    #allocation13 [shape = 'u8[3072]{0}', space=vmem, size = 0xc00, scoped, tag = 'input window, operand 6, single buffered']
    #allocation14 [shape = 'u8[65536]{0}', space=vmem, size = 0x10000, scoped, tag = 'input window, operand 7, single buffered']
    #allocation15 [shape = 's32[1]{0}', space=sflag, size = 0x4, scoped, tag = 'scoped memory for tpu_custom_call.1']
    #allocation16 [shape = 'u8[1024]{0}', space=vmem, size = 0x400, scoped, tag = 'input window, operand 8, single buffered']
    #allocation17 [shape = 'u8[262144]{0}', space=vmem, size = 0x40000, scoped, tag = 'input window, operand 9, single buffered']
    #allocation18 [shape = 's32[1]{0}', space=sflag, size = 0x4, scoped, tag = 'scoped memory for tpu_custom_call.1']
    #allocation19 [shape = 'u8[262144]{0}', space=vmem, size = 0x40000, scoped, tag = 'input window, operand 11, single buffered']
    #allocation20 [shape = 'u8[8192]{0}', space=vmem, size = 0x2000, scoped, tag = 'output window, operand 0']
    #allocation21 [shape = 'u8[16384]{0}', space=vmem, size = 0x4000, scoped, tag = 'output window, operand 1']
    #allocation22 [shape = 's32[2]{0}', space=sflag, size = 0x8, scoped, tag = 'scoped memory for tpu_custom_call.1']
    %20 = vsyncpa [#allocation3], 0
    %s21 = scalar_lea.sflag [#allocation3], 1
    %22 = vsyncpa %s21, 0
    %23 = vsyncpa [#allocation6], 0
    %s24 = scalar_lea.sflag [#allocation6], 1
    %25 = vsyncpa %s24, 0
    %26 = vsyncpa [#allocation9], 0
    %27 = vsyncpa [#allocation12], 0
    %28 = vsyncpa [#allocation15], 0
    %29 = vsyncpa [#allocation18], 0
    %30 = vsyncpa [#allocation4], 0
    %s31 = scalar_lea.sflag [#allocation4], 1
    %32 = vsyncpa %s31, 0
    %33 = vsyncpa [#allocation22], 0
    %s34 = scalar_lea.sflag [#allocation22], 1
    %35 = vsyncpa %s34, 0
    loop: start=0, step=1, limit=4
    $region2: #{tpu_custom_call.1} parent=1 // loop_pre_header
      _
    $region3: #{tpu_custom_call.1} parent=1 // loop_header
      %s37 = sphi 0, %s41
      %p38 = scmp.ge.s32.totalorder %s37, 4
      %s47 = sphi 0, %s49
      %s50 = sphi 0, %s47
      %s51 = sphi 0, %s50
      %s67 = sphi 0, %s51
      %s73 = sphi 0, %s75
      %s76 = sphi 0, %s73
      %s77 = sphi 0, %s76
      %s93 = sphi 0, %s77
      %s99 = sphi 0, %s101
      %s102 = sphi 0, %s99
      %s103 = sphi 0, %s102
      %s119 = sphi 0, %s103
      %s123 = sphi 0, %s123
      %s125 = sphi 0, %s123
      %s126 = sphi 0, %s125
      %s140 = sphi 0, %s126
      %s144 = sphi 0, %s144
      %s146 = sphi 0, %s144
      %s147 = sphi 0, %s146
      %s161 = sphi 0, %s147
      %s165 = sphi 0, %s165
      %s167 = sphi 0, %s165
      %s168 = sphi 0, %s167
      %s182 = sphi 0, %s168
      %s186 = sphi 0, %s186
      %s188 = sphi 0, %s186
      %s189 = sphi 0, %s188
      %s203 = sphi 0, %s189
      %s207 = sphi 0, %s207
      %s209 = sphi 0, %s207
      %s210 = sphi 0, %s209
      %s224 = sphi 0, %s210
      %s228 = sphi 0, %s228
      %s230 = sphi 0, %s228
      %s231 = sphi 0, %s230
      %s245 = sphi 0, %s231
      %s249 = sphi 0, %s249
      %s251 = sphi 0, %s249
      %s252 = sphi 0, %s251
      %s266 = sphi 0, %s252
      %s270 = sphi 0, %s270
      %s272 = sphi 0, %s270
      %s273 = sphi 0, %s272
      %s287 = sphi 0, %s273
      %s291 = sphi 0, %s291
      %s293 = sphi 0, %s291
      %s294 = sphi 0, %s293
      %s308 = sphi 0, %s294
      %s312 = sphi 0, %s312
      %s314 = sphi 0, %s312
      %s315 = sphi 0, %s314
      %s329 = sphi 0, %s315
      %s335 = sphi 0, %s337
      %s338 = sphi 0, %s335
      %s339 = sphi 0, %s338
      %s355 = sphi 0, %s339
      %s361 = sphi 0, %s363
      %s364 = sphi 0, %s361
      %s365 = sphi 0, %s364
      %s381 = sphi 0, %s365
    $region4: #{tpu_custom_call.1} parent=1 // loop_header_branch
      %40 = sbr.rel (%p38) target = $region8
    $region5: #{tpu_custom_call.1} parent=1 // loop_body
      %s42 = ssub.s32 %s37, 1
      %s43 = ssub.s32 %s37, 2
      %s44 = sadd.s32 %s37, 1
      %s45 = ssub.s32 %s37, %s44
      %p46 = scmp.eq.s32.totalorder %s45, 0
      %s48 = sadd.s32 %s47, 1
      %s49 = scalar_select %p46, %s47, %s48
      %p52 = pneg %p46
      %p53 = scmp.eq.s32.totalorder %s37, 1
      %p54 = por %p52, %p53
      %p55 = scmp.ne.s32.totalorder %s47, %s50
      %p56 = scmp.eq.s32.totalorder %s37, 0
      %p57 = por %p55, %p56
      %p58 = scmp.ne.s32.totalorder %s47, %s50
      %p59 = scmp.eq.s32.totalorder %s42, 1
      %p60 = por %p58, %p59
      %p61 = scmp.ne.s32.totalorder %s50, %s51
      %p62 = scmp.eq.s32.totalorder %s42, 0
      %p63 = por %p61, %p62
      %p64 = scmp.ne.s32.totalorder %s50, %s51
      %p65 = scmp.eq.s32.totalorder %s43, 1
      %p66 = por %p64, %p65
      %p68 = scmp.ne.s32.totalorder %s51, %s67
      %p69 = scmp.eq.s32.totalorder %s43, 0
      %p70 = por %p68, %p69
      %s71 = ssub.s32 %s37, %s44
      %p72 = scmp.eq.s32.totalorder %s71, 0
      %s74 = sadd.s32 %s73, 1
      %s75 = scalar_select %p72, %s73, %s74
      %p78 = pneg %p72
      %p79 = scmp.eq.s32.totalorder %s37, 1
      %p80 = por %p78, %p79
      %p81 = scmp.ne.s32.totalorder %s73, %s76
      %p82 = scmp.eq.s32.totalorder %s37, 0
      %p83 = por %p81, %p82
      %p84 = scmp.ne.s32.totalorder %s73, %s76
      %p85 = scmp.eq.s32.totalorder %s42, 1
      %p86 = por %p84, %p85
      %p87 = scmp.ne.s32.totalorder %s76, %s77
      %p88 = scmp.eq.s32.totalorder %s42, 0
      %p89 = por %p87, %p88
      %p90 = scmp.ne.s32.totalorder %s76, %s77
      %p91 = scmp.eq.s32.totalorder %s43, 1
      %p92 = por %p90, %p91
      %p94 = scmp.ne.s32.totalorder %s77, %s93
      %p95 = scmp.eq.s32.totalorder %s43, 0
      %p96 = por %p94, %p95
      %s97 = ssub.s32 %s37, %s44
      %p98 = scmp.eq.s32.totalorder %s97, 0
      %s100 = sadd.s32 %s99, 1
      %s101 = scalar_select %p98, %s99, %s100
      %p104 = pneg %p98
      %p105 = scmp.eq.s32.totalorder %s37, 1
      %p106 = por %p104, %p105
      %p107 = scmp.ne.s32.totalorder %s99, %s102
      %p108 = scmp.eq.s32.totalorder %s37, 0
      %p109 = por %p107, %p108
      %p110 = scmp.ne.s32.totalorder %s99, %s102
      %p111 = scmp.eq.s32.totalorder %s42, 1
      %p112 = por %p110, %p111
      %p113 = scmp.ne.s32.totalorder %s102, %s103
      %p114 = scmp.eq.s32.totalorder %s42, 0
      %p115 = por %p113, %p114
      %p116 = scmp.ne.s32.totalorder %s102, %s103
      %p117 = scmp.eq.s32.totalorder %s43, 1
      %p118 = por %p116, %p117
      %p120 = scmp.ne.s32.totalorder %s103, %s119
      %p121 = scmp.eq.s32.totalorder %s43, 0
      %p122 = por %p120, %p121
      %s124 = sadd.s32 %s123, 1
      %p127 = scmp.eq.s32.totalorder %s37, 1
      %p128 = scmp.ne.s32.totalorder %s123, %s125
      %p129 = scmp.eq.s32.totalorder %s37, 0
      %p130 = por %p128, %p129
      %p131 = scmp.ne.s32.totalorder %s123, %s125
      %p132 = scmp.eq.s32.totalorder %s42, 1
      %p133 = por %p131, %p132
      %p134 = scmp.ne.s32.totalorder %s125, %s126
      %p135 = scmp.eq.s32.totalorder %s42, 0
      %p136 = por %p134, %p135
      %p137 = scmp.ne.s32.totalorder %s125, %s126
      %p138 = scmp.eq.s32.totalorder %s43, 1
      %p139 = por %p137, %p138
      %p141 = scmp.ne.s32.totalorder %s126, %s140
      %p142 = scmp.eq.s32.totalorder %s43, 0
      %p143 = por %p141, %p142
      %s145 = sadd.s32 %s144, 1
      %p148 = scmp.eq.s32.totalorder %s37, 1
      %p149 = scmp.ne.s32.totalorder %s144, %s146
      %p150 = scmp.eq.s32.totalorder %s37, 0
      %p151 = por %p149, %p150
      %p152 = scmp.ne.s32.totalorder %s144, %s146
      %p153 = scmp.eq.s32.totalorder %s42, 1
      %p154 = por %p152, %p153
      %p155 = scmp.ne.s32.totalorder %s146, %s147
      %p156 = scmp.eq.s32.totalorder %s42, 0
      %p157 = por %p155, %p156
      %p158 = scmp.ne.s32.totalorder %s146, %s147
      %p159 = scmp.eq.s32.totalorder %s43, 1
      %p160 = por %p158, %p159
      %p162 = scmp.ne.s32.totalorder %s147, %s161
      %p163 = scmp.eq.s32.totalorder %s43, 0
      %p164 = por %p162, %p163
      %s166 = sadd.s32 %s165, 1
      %p169 = scmp.eq.s32.totalorder %s37, 1
      %p170 = scmp.ne.s32.totalorder %s165, %s167
      %p171 = scmp.eq.s32.totalorder %s37, 0
      %p172 = por %p170, %p171
      %p173 = scmp.ne.s32.totalorder %s165, %s167
      %p174 = scmp.eq.s32.totalorder %s42, 1
      %p175 = por %p173, %p174
      %p176 = scmp.ne.s32.totalorder %s167, %s168
      %p177 = scmp.eq.s32.totalorder %s42, 0
      %p178 = por %p176, %p177
      %p179 = scmp.ne.s32.totalorder %s167, %s168
      %p180 = scmp.eq.s32.totalorder %s43, 1
      %p181 = por %p179, %p180
      %p183 = scmp.ne.s32.totalorder %s168, %s182
      %p184 = scmp.eq.s32.totalorder %s43, 0
      %p185 = por %p183, %p184
      %s187 = sadd.s32 %s186, 1
      %p190 = scmp.eq.s32.totalorder %s37, 1
      %p191 = scmp.ne.s32.totalorder %s186, %s188
      %p192 = scmp.eq.s32.totalorder %s37, 0
      %p193 = por %p191, %p192
      %p194 = scmp.ne.s32.totalorder %s186, %s188
      %p195 = scmp.eq.s32.totalorder %s42, 1
      %p196 = por %p194, %p195
      %p197 = scmp.ne.s32.totalorder %s188, %s189
      %p198 = scmp.eq.s32.totalorder %s42, 0
      %p199 = por %p197, %p198
      %p200 = scmp.ne.s32.totalorder %s188, %s189
      %p201 = scmp.eq.s32.totalorder %s43, 1
      %p202 = por %p200, %p201
      %p204 = scmp.ne.s32.totalorder %s189, %s203
      %p205 = scmp.eq.s32.totalorder %s43, 0
      %p206 = por %p204, %p205
      %s208 = sadd.s32 %s207, 1
      %p211 = scmp.eq.s32.totalorder %s37, 1
      %p212 = scmp.ne.s32.totalorder %s207, %s209
      %p213 = scmp.eq.s32.totalorder %s37, 0
      %p214 = por %p212, %p213
      %p215 = scmp.ne.s32.totalorder %s207, %s209
      %p216 = scmp.eq.s32.totalorder %s42, 1
      %p217 = por %p215, %p216
      %p218 = scmp.ne.s32.totalorder %s209, %s210
      %p219 = scmp.eq.s32.totalorder %s42, 0
      %p220 = por %p218, %p219
      %p221 = scmp.ne.s32.totalorder %s209, %s210
      %p222 = scmp.eq.s32.totalorder %s43, 1
      %p223 = por %p221, %p222
      %p225 = scmp.ne.s32.totalorder %s210, %s224
      %p226 = scmp.eq.s32.totalorder %s43, 0
      %p227 = por %p225, %p226
      %s229 = sadd.s32 %s228, 1
      %p232 = scmp.eq.s32.totalorder %s37, 1
      %p233 = scmp.ne.s32.totalorder %s228, %s230
      %p234 = scmp.eq.s32.totalorder %s37, 0
      %p235 = por %p233, %p234
      %p236 = scmp.ne.s32.totalorder %s228, %s230
      %p237 = scmp.eq.s32.totalorder %s42, 1
      %p238 = por %p236, %p237
      %p239 = scmp.ne.s32.totalorder %s230, %s231
      %p240 = scmp.eq.s32.totalorder %s42, 0
      %p241 = por %p239, %p240
      %p242 = scmp.ne.s32.totalorder %s230, %s231
      %p243 = scmp.eq.s32.totalorder %s43, 1
      %p244 = por %p242, %p243
      %p246 = scmp.ne.s32.totalorder %s231, %s245
      %p247 = scmp.eq.s32.totalorder %s43, 0
      %p248 = por %p246, %p247
      %s250 = sadd.s32 %s249, 1
      %p253 = scmp.eq.s32.totalorder %s37, 1
      %p254 = scmp.ne.s32.totalorder %s249, %s251
      %p255 = scmp.eq.s32.totalorder %s37, 0
      %p256 = por %p254, %p255
      %p257 = scmp.ne.s32.totalorder %s249, %s251
      %p258 = scmp.eq.s32.totalorder %s42, 1
      %p259 = por %p257, %p258
      %p260 = scmp.ne.s32.totalorder %s251, %s252
      %p261 = scmp.eq.s32.totalorder %s42, 0
      %p262 = por %p260, %p261
      %p263 = scmp.ne.s32.totalorder %s251, %s252
      %p264 = scmp.eq.s32.totalorder %s43, 1
      %p265 = por %p263, %p264
      %p267 = scmp.ne.s32.totalorder %s252, %s266
      %p268 = scmp.eq.s32.totalorder %s43, 0
      %p269 = por %p267, %p268
      %s271 = sadd.s32 %s270, 1
      %p274 = scmp.eq.s32.totalorder %s37, 1
      %p275 = scmp.ne.s32.totalorder %s270, %s272
      %p276 = scmp.eq.s32.totalorder %s37, 0
      %p277 = por %p275, %p276
      %p278 = scmp.ne.s32.totalorder %s270, %s272
      %p279 = scmp.eq.s32.totalorder %s42, 1
      %p280 = por %p278, %p279
      %p281 = scmp.ne.s32.totalorder %s272, %s273
      %p282 = scmp.eq.s32.totalorder %s42, 0
      %p283 = por %p281, %p282
      %p284 = scmp.ne.s32.totalorder %s272, %s273
      %p285 = scmp.eq.s32.totalorder %s43, 1
      %p286 = por %p284, %p285
      %p288 = scmp.ne.s32.totalorder %s273, %s287
      %p289 = scmp.eq.s32.totalorder %s43, 0
      %p290 = por %p288, %p289
      %s292 = sadd.s32 %s291, 1
      %p295 = scmp.eq.s32.totalorder %s37, 1
      %p296 = scmp.ne.s32.totalorder %s291, %s293
      %p297 = scmp.eq.s32.totalorder %s37, 0
      %p298 = por %p296, %p297
      %p299 = scmp.ne.s32.totalorder %s291, %s293
      %p300 = scmp.eq.s32.totalorder %s42, 1
      %p301 = por %p299, %p300
      %p302 = scmp.ne.s32.totalorder %s293, %s294
      %p303 = scmp.eq.s32.totalorder %s42, 0
      %p304 = por %p302, %p303
      %p305 = scmp.ne.s32.totalorder %s293, %s294
      %p306 = scmp.eq.s32.totalorder %s43, 1
      %p307 = por %p305, %p306
      %p309 = scmp.ne.s32.totalorder %s294, %s308
      %p310 = scmp.eq.s32.totalorder %s43, 0
      %p311 = por %p309, %p310
      %s313 = sadd.s32 %s312, 1
      %p316 = scmp.eq.s32.totalorder %s37, 1
      %p317 = scmp.ne.s32.totalorder %s312, %s314
      %p318 = scmp.eq.s32.totalorder %s37, 0
      %p319 = por %p317, %p318
      %p320 = scmp.ne.s32.totalorder %s312, %s314
      %p321 = scmp.eq.s32.totalorder %s42, 1
      %p322 = por %p320, %p321
      %p323 = scmp.ne.s32.totalorder %s314, %s315
      %p324 = scmp.eq.s32.totalorder %s42, 0
      %p325 = por %p323, %p324
      %p326 = scmp.ne.s32.totalorder %s314, %s315
      %p327 = scmp.eq.s32.totalorder %s43, 1
      %p328 = por %p326, %p327
      %p330 = scmp.ne.s32.totalorder %s315, %s329
      %p331 = scmp.eq.s32.totalorder %s43, 0
      %p332 = por %p330, %p331
      %s333 = ssub.s32 %s37, %s44
      %p334 = scmp.eq.s32.totalorder %s333, 0
      %s336 = sadd.s32 %s335, 1
      %s337 = scalar_select %p334, %s335, %s336
      %p340 = pneg %p334
      %p341 = scmp.eq.s32.totalorder %s37, 1
      %p342 = por %p340, %p341
      %p343 = scmp.ne.s32.totalorder %s335, %s338
      %p344 = scmp.eq.s32.totalorder %s37, 0
      %p345 = por %p343, %p344
      %p346 = scmp.ne.s32.totalorder %s335, %s338
      %p347 = scmp.eq.s32.totalorder %s42, 1
      %p348 = por %p346, %p347
      %p349 = scmp.ne.s32.totalorder %s338, %s339
      %p350 = scmp.eq.s32.totalorder %s42, 0
      %p351 = por %p349, %p350
      %p352 = scmp.ne.s32.totalorder %s338, %s339
      %p353 = scmp.eq.s32.totalorder %s43, 1
      %p354 = por %p352, %p353
      %p356 = scmp.ne.s32.totalorder %s339, %s355
      %p357 = scmp.eq.s32.totalorder %s43, 0
      %p358 = por %p356, %p357
      %s359 = ssub.s32 %s37, %s44
      %p360 = scmp.eq.s32.totalorder %s359, 0
      %s362 = sadd.s32 %s361, 1
      %s363 = scalar_select %p360, %s361, %s362
      %p366 = pneg %p360
      %p367 = scmp.eq.s32.totalorder %s37, 1
      %p368 = por %p366, %p367
      %p369 = scmp.ne.s32.totalorder %s361, %s364
      %p370 = scmp.eq.s32.totalorder %s37, 0
      %p371 = por %p369, %p370
      %p372 = scmp.ne.s32.totalorder %s361, %s364
      %p373 = scmp.eq.s32.totalorder %s42, 1
      %p374 = por %p372, %p373
      %p375 = scmp.ne.s32.totalorder %s364, %s365
      %p376 = scmp.eq.s32.totalorder %s42, 0
      %p377 = por %p375, %p376
      %p378 = scmp.ne.s32.totalorder %s364, %s365
      %p379 = scmp.eq.s32.totalorder %s43, 1
      %p380 = por %p378, %p379
      %p382 = scmp.ne.s32.totalorder %s365, %s381
      %p383 = scmp.eq.s32.totalorder %s43, 0
      %p384 = por %p382, %p383
      %p385 = scmp.le.s32.totalorder 1, %s37
      %p386 = scmp.lt.s32.totalorder %s37, 3
      %p387 = pnand %p385, %p386
      %p388 = pneg %p387
      // Predicated region
      $region9: #{tpu_custom_call.1} parent=5 // pred_check
        _
      $region10: #{tpu_custom_call.1} parent=5 // pred_check_branch
        %390 = sbr.rel (%p387) target = $region12
      $region11: #{tpu_custom_call.1} parent=5 // pred_region
        %s391 = ssub.s32 %s37, 1
        // Predicated region
        $region13: #{tpu_custom_call.1} parent=11 // pred_check
          %p392 = pneg %p136
        $region14: #{tpu_custom_call.1} parent=11 // pred_check_branch
          %394 = sbr.rel (%p392) target = $region16
        $region15: #{tpu_custom_call.1} parent=11 // pred_region
          %396 = vsyncadd [#allocation9], 0
          %s397 = sshll.u32 %s3, 4
          %s398 = int_to_ptr.hbm [resolvable:$true] %s397
          %s399 = sshll.u32 [#allocation8], 4
          %s400 = int_to_ptr.vmem [resolvable:$true] %s399
          %405 = dma.hbm_to_vmem [thread:$0]  %s398, 12288, %s400, [#allocation9], 384, 384, 24
        $region16: #{tpu_custom_call.1} parent=11 // pred_fallthru
          _
        // Predicated region
        $region17: #{tpu_custom_call.1} parent=11 // pred_check
          %p406 = pneg %p157
        $region18: #{tpu_custom_call.1} parent=11 // pred_check_branch
          %408 = sbr.rel (%p406) target = $region20
        $region19: #{tpu_custom_call.1} parent=11 // pred_region
          %410 = vsyncadd [#allocation9], 0
          %s411 = sshll.u32 %s4, 4
          %s412 = int_to_ptr.hbm [resolvable:$true] %s411
          %s413 = sshll.u32 [#allocation10], 4
          %s414 = int_to_ptr.vmem [resolvable:$true] %s413
          %419 = dma.hbm_to_vmem [thread:$0]  %s412, 192, %s414, [#allocation9], 96, 96, 6
        $region20: #{tpu_custom_call.1} parent=11 // pred_fallthru
          _
        // Predicated region
        $region21: #{tpu_custom_call.1} parent=11 // pred_check
          %p420 = pneg %p178
        $region22: #{tpu_custom_call.1} parent=11 // pred_check_branch
          %422 = sbr.rel (%p420) target = $region24
        $region23: #{tpu_custom_call.1} parent=11 // pred_region
          %424 = vsyncadd [#allocation12], 0
          %s425 = sshll.u32 %s5, 4
          %s426 = int_to_ptr.hbm [resolvable:$true] %s425
          %s427 = sshll.u32 [#allocation11], 4
          %s428 = int_to_ptr.vmem [resolvable:$true] %s427
          %433 = dma.hbm_to_vmem [thread:$0]  %s426, 6144, %s428, [#allocation12], 192, 192, 12
        $region24: #{tpu_custom_call.1} parent=11 // pred_fallthru
          _
        // Predicated region
        $region25: #{tpu_custom_call.1} parent=11 // pred_check
          %p434 = pneg %p199
        $region26: #{tpu_custom_call.1} parent=11 // pred_check_branch
          %436 = sbr.rel (%p434) target = $region28
        $region27: #{tpu_custom_call.1} parent=11 // pred_region
          %438 = vsyncadd [#allocation12], 0
          %s439 = sshll.u32 %s6, 4
          %s440 = int_to_ptr.hbm [resolvable:$true] %s439
          %s441 = sshll.u32 [#allocation13], 4
          %s442 = int_to_ptr.vmem [resolvable:$true] %s441
          %447 = dma.hbm_to_vmem [thread:$0]  %s440, 96, %s442, [#allocation12], 48, 48, 3
        $region28: #{tpu_custom_call.1} parent=11 // pred_fallthru
          _
        // Predicated region
        $region29: #{tpu_custom_call.1} parent=11 // pred_check
          %p448 = pneg %p220
        $region30: #{tpu_custom_call.1} parent=11 // pred_check_branch
          %450 = sbr.rel (%p448) target = $region32
        $region31: #{tpu_custom_call.1} parent=11 // pred_region
          %452 = vsyncadd [#allocation15], 0
          %s453 = sshll.u32 %s7, 4
          %s454 = int_to_ptr.hbm [resolvable:$true] %s453
          %s455 = sshll.u32 [#allocation14], 4
          %s456 = int_to_ptr.vmem [resolvable:$true] %s455
          %461 = dma.hbm_to_vmem [thread:$0]  %s454, 2048, %s456, [#allocation15], 64, 64, 4
        $region32: #{tpu_custom_call.1} parent=11 // pred_fallthru
          _
        // Predicated region
        $region33: #{tpu_custom_call.1} parent=11 // pred_check
          %p462 = pneg %p241
        $region34: #{tpu_custom_call.1} parent=11 // pred_check_branch
          %464 = sbr.rel (%p462) target = $region36
        $region35: #{tpu_custom_call.1} parent=11 // pred_region
          %466 = vsyncadd [#allocation15], 0
          %s467 = sshll.u32 %s8, 4
          %s468 = int_to_ptr.hbm [resolvable:$true] %s467
          %s469 = sshll.u32 [#allocation16], 4
          %s470 = int_to_ptr.vmem [resolvable:$true] %s469
          %475 = dma.hbm_to_vmem [thread:$0]  %s468, 32, %s470, [#allocation15], 16, 16, 1
        $region36: #{tpu_custom_call.1} parent=11 // pred_fallthru
          _
        // Predicated region
        $region37: #{tpu_custom_call.1} parent=11 // pred_check
          %p476 = pneg %p262
        $region38: #{tpu_custom_call.1} parent=11 // pred_check_branch
          %478 = sbr.rel (%p476) target = $region40
        $region39: #{tpu_custom_call.1} parent=11 // pred_region
          %480 = vsyncadd [#allocation18], 0
          %s481 = sshll.u32 %s9, 4
          %s482 = int_to_ptr.hbm [resolvable:$true] %s481
          %s483 = sshll.u32 [#allocation17], 4
          %s484 = int_to_ptr.vmem [resolvable:$true] %s483
          %489 = dma.hbm_to_vmem [thread:$0]  %s482, 8192, %s484, [#allocation18], 256, 256, 16
        $region40: #{tpu_custom_call.1} parent=11 // pred_fallthru
          _
        // Predicated region
        $region41: #{tpu_custom_call.1} parent=11 // pred_check
          %p490 = pneg %p283
        $region42: #{tpu_custom_call.1} parent=11 // pred_check_branch
          %492 = sbr.rel (%p490) target = $region44
        $region43: #{tpu_custom_call.1} parent=11 // pred_region
          _
        $region44: #{tpu_custom_call.1} parent=11 // pred_fallthru
          _
        // Predicated region
        $region45: #{tpu_custom_call.1} parent=11 // pred_check
          %p493 = pneg %p304
        $region46: #{tpu_custom_call.1} parent=11 // pred_check_branch
          %495 = sbr.rel (%p493) target = $region48
        $region47: #{tpu_custom_call.1} parent=11 // pred_region
          %497 = vsyncadd [#allocation18], 0
          %s498 = sshll.u32 %s11, 4
          %s499 = int_to_ptr.hbm [resolvable:$true] %s498
          %s500 = sshll.u32 [#allocation19], 4
          %s501 = int_to_ptr.vmem [resolvable:$true] %s500
          %506 = dma.hbm_to_vmem [thread:$0]  %s499, 8192, %s501, [#allocation18], 64, 64, 4
        $region48: #{tpu_custom_call.1} parent=11 // pred_fallthru
          _
        // Predicated region
        $region49: #{tpu_custom_call.1} parent=11 // pred_check
          %p507 = pneg %p325
        $region50: #{tpu_custom_call.1} parent=11 // pred_check_branch
          %509 = sbr.rel (%p507) target = $region52
        $region51: #{tpu_custom_call.1} parent=11 // pred_region
          _
        $region52: #{tpu_custom_call.1} parent=11 // pred_fallthru
          _
      $region12: #{tpu_custom_call.1} parent=5 // pred_fallthru
        _
      %p510 = scmp.lt.s32.totalorder %s37, 2
      // Predicated region
      $region53: #{tpu_custom_call.1} parent=5 // pred_check
        %p511 = pneg %p510
      $region54: #{tpu_custom_call.1} parent=5 // pred_check_branch
        %513 = sbr.rel (%p511) target = $region56
      $region55: #{tpu_custom_call.1} parent=5 // pred_region
        // Predicated region
        $region57: #{tpu_custom_call.1} parent=55 // pred_check
          %p514 = pneg %p57
        $region58: #{tpu_custom_call.1} parent=55 // pred_check_branch
          %516 = sbr.rel (%p514) target = $region60
        $region59: #{tpu_custom_call.1} parent=55 // pred_region
          %s517 = sand.u32 %s47, 1
          %s518 = scalar_lea.sflag [#allocation3], %s517
          %s519 = sand.u32 %s47, 1
          %s520 = smul.addr %s519, 8
          %s521 = scalar_lea.vmem [#allocation2], %s520
          %523 = vsyncadd %s518, 0
          %s524 = smul.addr %s37, 8
          %s525 = scalar_lea.hbm %s0, %s524
          %s527 = sshll.u32 %s525, 4
          %s528 = int_to_ptr.hbm [resolvable:$true] %s527
          %s529 = sshll.u32 %s521, 4
          %s530 = int_to_ptr.vmem [resolvable:$true] %s529
          %532 = dma.hbm_to_vmem [thread:$0]  %s528, 128, %s530, %s518
        $region60: #{tpu_custom_call.1} parent=55 // pred_fallthru
          _
        // Predicated region
        $region61: #{tpu_custom_call.1} parent=55 // pred_check
          %p533 = pneg %p83
        $region62: #{tpu_custom_call.1} parent=55 // pred_check_branch
          %535 = sbr.rel (%p533) target = $region64
        $region63: #{tpu_custom_call.1} parent=55 // pred_region
          %s536 = sand.u32 %s37, 1
          %s537 = scalar_lea.sflag [#allocation6], %s536
          %s538 = sand.u32 %s73, 1
          %s539 = smul.addr %s538, 16
          %s540 = scalar_lea.vmem [#allocation5], %s539
          %542 = vsyncadd %s537, 0
          %s543 = smul.addr %s37, 2
          %s544 = smul.addr %s543, 8
          %s545 = scalar_lea.hbm %s1, %s544
          %s546 = sshll.u32 %s545, 4
          %s547 = int_to_ptr.hbm [resolvable:$true] %s546
          %s548 = sshll.u32 %s540, 4
          %s549 = int_to_ptr.vmem [resolvable:$true] %s548
          %554 = dma.hbm_to_vmem [thread:$0]  %s547, 256, %s549, %s537, 128, 128, 8
        $region64: #{tpu_custom_call.1} parent=55 // pred_fallthru
          _
        // Predicated region
        $region65: #{tpu_custom_call.1} parent=55 // pred_check
          %p555 = pneg %p109
        $region66: #{tpu_custom_call.1} parent=55 // pred_check_branch
          %557 = sbr.rel (%p555) target = $region68
        $region67: #{tpu_custom_call.1} parent=55 // pred_region
          %s558 = sand.u32 %s37, 1
          %s559 = scalar_lea.sflag [#allocation6], %s558
          %s560 = sand.u32 %s99, 1
          %s561 = scalar_lea.vmem [#allocation7], %s560
          %563 = vsyncadd %s559, 0
          %s564 = scalar_lea.hbm %s2, %s37
          %s566 = sshll.u32 %s564, 4
          %s567 = int_to_ptr.hbm [resolvable:$true] %s566
          %s568 = sshll.u32 %s561, 4
          %s569 = int_to_ptr.vmem [resolvable:$true] %s568
          %571 = dma.hbm_to_vmem [thread:$0]  %s567, 16, %s569, %s559
        $region68: #{tpu_custom_call.1} parent=55 // pred_fallthru
          _
      $region56: #{tpu_custom_call.1} parent=5 // pred_fallthru
        _
      %p572 = scmp.le.s32.totalorder 1, %s37
      %p573 = scmp.lt.s32.totalorder %s37, 3
      %p574 = pnand %p572, %p573
      %p575 = pneg %p574
      // Predicated region
      $region69: #{tpu_custom_call.1} parent=5 // pred_check
        _
      $region70: #{tpu_custom_call.1} parent=5 // pred_check_branch
        %577 = sbr.rel (%p574) target = $region72
      $region71: #{tpu_custom_call.1} parent=5 // pred_region
        %s578 = ssub.s32 %s37, 1
        %s579 = sand.u32 %s50, 1
        %s580 = scalar_lea.sflag [#allocation3], %s579
        %s581 = sand.u32 %s50, 1
        %s582 = smul.addr %s581, 8
        %s583 = scalar_lea.vmem [#allocation2], %s582
        // Predicated region
        $region73: #{tpu_custom_call.1} parent=71 // pred_check
          %p584 = pneg %p63
        $region74: #{tpu_custom_call.1} parent=71 // pred_check_branch
          %586 = sbr.rel (%p584) target = $region76
        $region75: #{tpu_custom_call.1} parent=71 // pred_region
          %588 = dma.done %s580, 128
        $region76: #{tpu_custom_call.1} parent=71 // pred_fallthru
          _
        %s589 = sand.u32 %s42, 1
        %s590 = scalar_lea.sflag [#allocation6], %s589
        %s591 = sand.u32 %s76, 1
        %s592 = smul.addr %s591, 16
        %s593 = scalar_lea.vmem [#allocation5], %s592
        // Predicated region
        $region77: #{tpu_custom_call.1} parent=71 // pred_check
          %p594 = pneg %p89
        $region78: #{tpu_custom_call.1} parent=71 // pred_check_branch
          %596 = sbr.rel (%p594) target = $region80
        $region79: #{tpu_custom_call.1} parent=71 // pred_region
          %598 = dma.done %s590, 256
        $region80: #{tpu_custom_call.1} parent=71 // pred_fallthru
          _
        %s599 = sand.u32 %s42, 1
        %s600 = scalar_lea.sflag [#allocation6], %s599
        %s601 = sand.u32 %s102, 1
        %s602 = scalar_lea.vmem [#allocation7], %s601
        // Predicated region
        $region81: #{tpu_custom_call.1} parent=71 // pred_check
          %p603 = pneg %p115
        $region82: #{tpu_custom_call.1} parent=71 // pred_check_branch
          %605 = sbr.rel (%p603) target = $region84
        $region83: #{tpu_custom_call.1} parent=71 // pred_region
          %607 = dma.done %s600, 16
        $region84: #{tpu_custom_call.1} parent=71 // pred_fallthru
          _
        // Predicated region
        $region85: #{tpu_custom_call.1} parent=71 // pred_check
          %p608 = pneg %p136
        $region86: #{tpu_custom_call.1} parent=71 // pred_check_branch
          %610 = sbr.rel (%p608) target = $region88
        $region87: #{tpu_custom_call.1} parent=71 // pred_region
          %612 = dma.done [#allocation9], 12288
        $region88: #{tpu_custom_call.1} parent=71 // pred_fallthru
          _
        // Predicated region
        $region89: #{tpu_custom_call.1} parent=71 // pred_check
          %p613 = pneg %p157
        $region90: #{tpu_custom_call.1} parent=71 // pred_check_branch
          %615 = sbr.rel (%p613) target = $region92
        $region91: #{tpu_custom_call.1} parent=71 // pred_region
          %617 = dma.done [#allocation9], 192
        $region92: #{tpu_custom_call.1} parent=71 // pred_fallthru
          _
        // Predicated region
        $region93: #{tpu_custom_call.1} parent=71 // pred_check
          %p618 = pneg %p178
        $region94: #{tpu_custom_call.1} parent=71 // pred_check_branch
          %620 = sbr.rel (%p618) target = $region96
        $region95: #{tpu_custom_call.1} parent=71 // pred_region
          %622 = dma.done [#allocation12], 6144
        $region96: #{tpu_custom_call.1} parent=71 // pred_fallthru
          _
        // Predicated region
        $region97: #{tpu_custom_call.1} parent=71 // pred_check
          %p623 = pneg %p199
        $region98: #{tpu_custom_call.1} parent=71 // pred_check_branch
          %625 = sbr.rel (%p623) target = $region100
        $region99: #{tpu_custom_call.1} parent=71 // pred_region
          %627 = dma.done [#allocation12], 96
        $region100: #{tpu_custom_call.1} parent=71 // pred_fallthru
          _
        // Predicated region
        $region101: #{tpu_custom_call.1} parent=71 // pred_check
          %p628 = pneg %p220
        $region102: #{tpu_custom_call.1} parent=71 // pred_check_branch
          %630 = sbr.rel (%p628) target = $region104
        $region103: #{tpu_custom_call.1} parent=71 // pred_region
          %632 = dma.done [#allocation15], 2048
        $region104: #{tpu_custom_call.1} parent=71 // pred_fallthru
          _
        // Predicated region
        $region105: #{tpu_custom_call.1} parent=71 // pred_check
          %p633 = pneg %p241
        $region106: #{tpu_custom_call.1} parent=71 // pred_check_branch
          %635 = sbr.rel (%p633) target = $region108
        $region107: #{tpu_custom_call.1} parent=71 // pred_region
          %637 = dma.done [#allocation15], 32
        $region108: #{tpu_custom_call.1} parent=71 // pred_fallthru
          _
        // Predicated region
        $region109: #{tpu_custom_call.1} parent=71 // pred_check
          %p638 = pneg %p262
        $region110: #{tpu_custom_call.1} parent=71 // pred_check_branch
          %640 = sbr.rel (%p638) target = $region112
        $region111: #{tpu_custom_call.1} parent=71 // pred_region
          %642 = dma.done [#allocation18], 8192
        $region112: #{tpu_custom_call.1} parent=71 // pred_fallthru
          _
        // Predicated region
        $region113: #{tpu_custom_call.1} parent=71 // pred_check
          %p643 = pneg %p304
        $region114: #{tpu_custom_call.1} parent=71 // pred_check_branch
          %645 = sbr.rel (%p643) target = $region116
        $region115: #{tpu_custom_call.1} parent=71 // pred_region
          %647 = dma.done [#allocation18], 8192
        $region116: #{tpu_custom_call.1} parent=71 // pred_fallthru
          _
        %s648 = sand.u32 %s50, 1
        %s649 = scalar_lea.sflag [#allocation3], %s648
        %s650 = sand.u32 %s50, 1
        %s651 = smul.addr %s650, 8
        %s652 = scalar_lea.vmem [#allocation2], %s651
        %p653 = pneg %p63
        %p654 = pneg %p60
        %s655 = sand.u32 %s42, 1
        %s656 = scalar_lea.sflag [#allocation6], %s655
        %s657 = sand.u32 %s76, 1
        %s658 = smul.addr %s657, 16
        %s659 = scalar_lea.vmem [#allocation5], %s658
        %p660 = pneg %p89
        %p661 = pneg %p86
        %s662 = sand.u32 %s42, 1
        %s663 = scalar_lea.sflag [#allocation6], %s662
        %s664 = sand.u32 %s102, 1
        %s665 = scalar_lea.vmem [#allocation7], %s664
        %p666 = pneg %p115
        %p667 = pneg %p112
        %p668 = pneg %p136
        %p669 = pneg %p133
        %p670 = pneg %p157
        %p671 = pneg %p154
        %p672 = pneg %p178
        %p673 = pneg %p175
        %p674 = pneg %p199
        %p675 = pneg %p196
        %p676 = pneg %p220
        %p677 = pneg %p217
        %p678 = pneg %p241
        %p679 = pneg %p238
        %p680 = pneg %p262
        %p681 = pneg %p259
        %p682 = pneg %p283
        %p683 = pneg %p280
        %p684 = pneg %p304
        %p685 = pneg %p301
        %p686 = pneg %p325
        %p687 = pneg %p322
        %p688 = pneg %p351
        %p689 = pneg %p348
        %s690 = sand.u32 %s338, 1
        %s691 = scalar_lea.sflag [#allocation4], %s690
        %s692 = sand.u32 %s338, 1
        %s693 = smul.addr %s692, 8
        %s694 = scalar_lea.vmem [#allocation20], %s693
        %p695 = pneg %p377
        %p696 = pneg %p374
        %s697 = sand.u32 %s364, 1
        %s698 = scalar_lea.sflag [#allocation22], %s697
        %s699 = sand.u32 %s364, 1
        %s700 = smul.addr %s699, 16
        %s701 = scalar_lea.vmem [#allocation21], %s700
        %v703 = vld [vmem:[%s583] sm:$0xff]
        %v704 = vld [vmem:[%s593] sm:$0xff]
        %v705 = vld [vmem:[%s593 + $0x8] sm:$0xff]
        %v706 = vld [vmem:[%s602] sm:$0x1]
        %v707 = vxor.u32 %v706, 2147483648
        %v708 = vmul.f32 %v707, 1.442695
        %v709 = vpow.pop %v708
        %v710 = vadd.f32 %v709, 1.0
        %v711 = vrcp.pop %v710
        %v712 = vmul.f32 %v710, %v711
        %v713 = vsub.f32 1.0, %v712
        %v714 = vmul.f32 %v711, %v713
        %v715 = vadd.f32 %v711, %v714
        %vm716 = vweird.f32 %v710
        %vm717 = vweird.f32 %v711
        %vm718 = vmor %vm716, %vm717
        %v719 = vsel %vm718, %v711, %v715
        %v720 = vand.u32 2147483647, %v710
        %vm721 = vcmp.eq.f32.partialorder %v720, 8.507059e+37
        %v722 = vand.u32 %v710, 2147483648
        %v723 = vor.u32 1.1754944e-38, %v722
        %v724 = vsel %vm721, %v723, %v719
        %v725 = vmul.f32 1.0, %v724
        %v726 = vmul.f32 %v706, %v725
        %v727 = vpack.c.bf16 %v726, %v726
        %v728 = vld [vmem:[#allocation8] sm:$0xff]
        %v729 = vld [vmem:[#allocation8 + $0x8] sm:$0xff]
        %v730 = vld [vmem:[#allocation8 + $0x10] sm:$0xff]
        %v731 = vld [vmem:[#allocation8 + $0x18] sm:$0xff]
        %v732 = vld [vmem:[#allocation8 + $0x20] sm:$0xff]
        %v733 = vld [vmem:[#allocation8 + $0x28] sm:$0xff]
        %v734 = vld [vmem:[#allocation8 + $0x30] sm:$0xff]
        %v735 = vld [vmem:[#allocation8 + $0x38] sm:$0xff]
        %v736 = vld [vmem:[#allocation8 + $0x40] sm:$0xff]
        %v737 = vld [vmem:[#allocation8 + $0x48] sm:$0xff]
        %v738 = vld [vmem:[#allocation8 + $0x50] sm:$0xff]
        %v739 = vld [vmem:[#allocation8 + $0x58] sm:$0xff]
        %v740 = vld [vmem:[#allocation8 + $0x60] sm:$0xff]
        %v741 = vld [vmem:[#allocation8 + $0x68] sm:$0xff]
        %v742 = vld [vmem:[#allocation8 + $0x70] sm:$0xff]
        %v743 = vld [vmem:[#allocation8 + $0x78] sm:$0xff]
        %v744 = vld [vmem:[#allocation8 + $0x80] sm:$0xff]
        %v745 = vld [vmem:[#allocation8 + $0x88] sm:$0xff]
        %v746 = vld [vmem:[#allocation8 + $0x90] sm:$0xff]
        %v747 = vld [vmem:[#allocation8 + $0x98] sm:$0xff]
        %v748 = vld [vmem:[#allocation8 + $0xa0] sm:$0xff]
        %v749 = vld [vmem:[#allocation8 + $0xa8] sm:$0xff]
        %v750 = vld [vmem:[#allocation8 + $0xb0] sm:$0xff]
        %v751 = vld [vmem:[#allocation8 + $0xb8] sm:$0xff]
        %v752 = vld [vmem:[#allocation8 + $0xc0] sm:$0xff]
        %v753 = vld [vmem:[#allocation8 + $0xc8] sm:$0xff]
        %v754 = vld [vmem:[#allocation8 + $0xd0] sm:$0xff]
        %v755 = vld [vmem:[#allocation8 + $0xd8] sm:$0xff]
        %v756 = vld [vmem:[#allocation8 + $0xe0] sm:$0xff]
        %v757 = vld [vmem:[#allocation8 + $0xe8] sm:$0xff]
        %v758 = vld [vmem:[#allocation8 + $0xf0] sm:$0xff]
        %v759 = vld [vmem:[#allocation8 + $0xf8] sm:$0xff]
        %v760 = vld [vmem:[#allocation8 + $0x100] sm:$0xff]
        %v761 = vld [vmem:[#allocation8 + $0x108] sm:$0xff]
        %v762 = vld [vmem:[#allocation8 + $0x110] sm:$0xff]
        %v763 = vld [vmem:[#allocation8 + $0x118] sm:$0xff]
        %v764 = vld [vmem:[#allocation8 + $0x120] sm:$0xff]
        %v765 = vld [vmem:[#allocation8 + $0x128] sm:$0xff]
        %v766 = vld [vmem:[#allocation8 + $0x130] sm:$0xff]
        %v767 = vld [vmem:[#allocation8 + $0x138] sm:$0xff]
        %v768 = vld [vmem:[#allocation8 + $0x140] sm:$0xff]
        %v769 = vld [vmem:[#allocation8 + $0x148] sm:$0xff]
        %v770 = vld [vmem:[#allocation8 + $0x150] sm:$0xff]
        %v771 = vld [vmem:[#allocation8 + $0x158] sm:$0xff]
        %v772 = vld [vmem:[#allocation8 + $0x160] sm:$0xff]
        %v773 = vld [vmem:[#allocation8 + $0x168] sm:$0xff]
        %v774 = vld [vmem:[#allocation8 + $0x170] sm:$0xff]
        %v775 = vld [vmem:[#allocation8 + $0x178] sm:$0xff]
        %v776 = vld [vmem:[#allocation10] sm:$0x3f]
        %v825 = vunpack.c.l.b16 %v728
        %v826 = vunpack.c.h.b16 %v728
        %v827 = vunpack.c.l.b16 %v729
        %v828 = vunpack.c.h.b16 %v729
        %v829 = vunpack.c.l.b16 %v730
        %v830 = vunpack.c.h.b16 %v730
        %v831 = vunpack.c.l.b16 %v731
        %v832 = vunpack.c.h.b16 %v731
        %v833 = vunpack.c.l.b16 %v732
        %v834 = vunpack.c.h.b16 %v732
        %v835 = vunpack.c.l.b16 %v733
        %v836 = vunpack.c.h.b16 %v733
        %v837 = vunpack.c.l.b16 %v734
        %v838 = vunpack.c.h.b16 %v734
        %v839 = vunpack.c.l.b16 %v735
        %v840 = vunpack.c.h.b16 %v735
        %v841 = vunpack.c.l.b16 %v736
        %v842 = vunpack.c.h.b16 %v736
        %v843 = vunpack.c.l.b16 %v737
        %v844 = vunpack.c.h.b16 %v737
        %v845 = vunpack.c.l.b16 %v738
        %v846 = vunpack.c.h.b16 %v738
        %v847 = vunpack.c.l.b16 %v739
        %v848 = vunpack.c.h.b16 %v739
        %v849 = vunpack.c.l.b16 %v740
        %v850 = vunpack.c.h.b16 %v740
        %v851 = vunpack.c.l.b16 %v741
        %v852 = vunpack.c.h.b16 %v741
        %v853 = vunpack.c.l.b16 %v742
        %v854 = vunpack.c.h.b16 %v742
        %v855 = vunpack.c.l.b16 %v743
        %v856 = vunpack.c.h.b16 %v743
        %v857 = vunpack.c.l.b16 %v744
        %v858 = vunpack.c.h.b16 %v744
        %v859 = vunpack.c.l.b16 %v745
        %v860 = vunpack.c.h.b16 %v745
        %v861 = vunpack.c.l.b16 %v746
        %v862 = vunpack.c.h.b16 %v746
        %v863 = vunpack.c.l.b16 %v747
        %v864 = vunpack.c.h.b16 %v747
        %v865 = vunpack.c.l.b16 %v748
        %v866 = vunpack.c.h.b16 %v748
        %v867 = vunpack.c.l.b16 %v749
        %v868 = vunpack.c.h.b16 %v749
        %v869 = vunpack.c.l.b16 %v750
        %v870 = vunpack.c.h.b16 %v750
        %v871 = vunpack.c.l.b16 %v751
        %v872 = vunpack.c.h.b16 %v751
        %v873 = vunpack.c.l.b16 %v752
        %v874 = vunpack.c.h.b16 %v752
        %v875 = vunpack.c.l.b16 %v753
        %v876 = vunpack.c.h.b16 %v753
        %v877 = vunpack.c.l.b16 %v754
        %v878 = vunpack.c.h.b16 %v754
        %v879 = vunpack.c.l.b16 %v755
        %v880 = vunpack.c.h.b16 %v755
        %v881 = vunpack.c.l.b16 %v756
        %v882 = vunpack.c.h.b16 %v756
        %v883 = vunpack.c.l.b16 %v757
        %v884 = vunpack.c.h.b16 %v757
        %v885 = vunpack.c.l.b16 %v758
        %v886 = vunpack.c.h.b16 %v758
        %v887 = vunpack.c.l.b16 %v759
        %v888 = vunpack.c.h.b16 %v759
        %v889 = vunpack.c.l.b16 %v760
        %v890 = vunpack.c.h.b16 %v760
        %v891 = vunpack.c.l.b16 %v761
        %v892 = vunpack.c.h.b16 %v761
        %v893 = vunpack.c.l.b16 %v762
        %v894 = vunpack.c.h.b16 %v762
        %v895 = vunpack.c.l.b16 %v763
        %v896 = vunpack.c.h.b16 %v763
        %v897 = vunpack.c.l.b16 %v764
        %v898 = vunpack.c.h.b16 %v764
        %v899 = vunpack.c.l.b16 %v765
        %v900 = vunpack.c.h.b16 %v765
        %v901 = vunpack.c.l.b16 %v766
        %v902 = vunpack.c.h.b16 %v766
        %v903 = vunpack.c.l.b16 %v767
        %v904 = vunpack.c.h.b16 %v767
        %v905 = vunpack.c.l.b16 %v768
        %v906 = vunpack.c.h.b16 %v768
        %v907 = vunpack.c.l.b16 %v769
        %v908 = vunpack.c.h.b16 %v769
        %v909 = vunpack.c.l.b16 %v770
        %v910 = vunpack.c.h.b16 %v770
        %v911 = vunpack.c.l.b16 %v771
        %v912 = vunpack.c.h.b16 %v771
        %v913 = vunpack.c.l.b16 %v772
        %v914 = vunpack.c.h.b16 %v772
        %v915 = vunpack.c.l.b16 %v773
        %v916 = vunpack.c.h.b16 %v773
        %v917 = vunpack.c.l.b16 %v774
        %v918 = vunpack.c.h.b16 %v774
        %v919 = vunpack.c.l.b16 %v775
        %v920 = vunpack.c.h.b16 %v775
        %v921 = vpack.c.b16 %v831, %v825
        %v922 = vpack.c.b16 %v832, %v826
        %v923 = vpack.c.b16 %v833, %v827
        %v924 = vpack.c.b16 %v834, %v828
        %v925 = vpack.c.b16 %v835, %v829
        %v926 = vpack.c.b16 %v836, %v830
        %v927 = vpack.c.b16 %v843, %v837
        %v928 = vpack.c.b16 %v844, %v838
        %v929 = vpack.c.b16 %v845, %v839
        %v930 = vpack.c.b16 %v846, %v840
        %v931 = vpack.c.b16 %v847, %v841
        %v932 = vpack.c.b16 %v848, %v842
        %v933 = vpack.c.b16 %v855, %v849
        %v934 = vpack.c.b16 %v856, %v850
        %v935 = vpack.c.b16 %v857, %v851
        %v936 = vpack.c.b16 %v858, %v852
        %v937 = vpack.c.b16 %v859, %v853
        %v938 = vpack.c.b16 %v860, %v854
        %v939 = vpack.c.b16 %v867, %v861
        %v940 = vpack.c.b16 %v868, %v862
        %v941 = vpack.c.b16 %v869, %v863
        %v942 = vpack.c.b16 %v870, %v864
        %v943 = vpack.c.b16 %v871, %v865
        %v944 = vpack.c.b16 %v872, %v866
        %v945 = vpack.c.b16 %v879, %v873
        %v946 = vpack.c.b16 %v880, %v874
        %v947 = vpack.c.b16 %v881, %v875
        %v948 = vpack.c.b16 %v882, %v876
        %v949 = vpack.c.b16 %v883, %v877
        %v950 = vpack.c.b16 %v884, %v878
        %v951 = vpack.c.b16 %v891, %v885
        %v952 = vpack.c.b16 %v892, %v886
        %v953 = vpack.c.b16 %v893, %v887
        %v954 = vpack.c.b16 %v894, %v888
        %v955 = vpack.c.b16 %v895, %v889
        %v956 = vpack.c.b16 %v896, %v890
        %v957 = vpack.c.b16 %v903, %v897
        %v958 = vpack.c.b16 %v904, %v898
        %v959 = vpack.c.b16 %v905, %v899
        %v960 = vpack.c.b16 %v906, %v900
        %v961 = vpack.c.b16 %v907, %v901
        %v962 = vpack.c.b16 %v908, %v902
        %v963 = vpack.c.b16 %v915, %v909
        %v964 = vpack.c.b16 %v916, %v910
        %v965 = vpack.c.b16 %v917, %v911
        %v966 = vpack.c.b16 %v918, %v912
        %v967 = vpack.c.b16 %v919, %v913
        %v968 = vpack.c.b16 %v920, %v914
        %v1018 = vperm.slane %v776, 0
        %v1019 = vperm.slane %v776, 1
        %v1020 = vperm.slane %v776, 2
        %v1021 = vperm.slane %v776, 3
        %v1022 = vperm.slane %v776, 4
        %v1023 = vperm.slane %v776, 5
        %1030 = vmatpush.bf16.msra.mxu0 %v963
        %1031 = vmatpush.bf16.msra.mxu0 %v957
        %1032 = vmatpush.bf16.msra.mxu0 %v951
        %1033 = vmatpush.bf16.msra.mxu0 %v945
        %1034 = vmatpush.bf16.msra.mxu0 %v939
        %1035 = vmatpush.bf16.msra.mxu0 %v933
        %1036 = vmatpush.bf16.msra.mxu0 %v927
        %1037 = vmatpush.bf16.msra.mxu0 %v921
        %1038 = vmatmul.bf16.gmra.mxu0 %v727
        %v1039 = vpop.f32.mrf.mxu0
        %v1040 = vadd.f32 %v1018, %v1039
        %v1041 = vpop.f32.mrf.mxu0
        %1042 = vdwg.mxu0
        %1043 = vmatpush.bf16.msra.mxu0 %v964
        %1044 = vmatpush.bf16.msra.mxu0 %v958
        %1045 = vmatpush.bf16.msra.mxu0 %v952
        %1046 = vmatpush.bf16.msra.mxu0 %v946
        %1047 = vmatpush.bf16.msra.mxu0 %v940
        %1048 = vmatpush.bf16.msra.mxu0 %v934
        %1049 = vmatpush.bf16.msra.mxu0 %v928
        %1050 = vmatpush.bf16.msra.mxu0 %v922
        %1051 = vmatmul.bf16.gmra.mxu0 %v727
        %v1052 = vpop.f32.mrf.mxu0
        %v1053 = vadd.f32 %v1019, %v1052
        %v1054 = vpop.f32.mrf.mxu0
        %1055 = vdwg.mxu0
        %1056 = vmatpush.bf16.msra.mxu0 %v965
        %1057 = vmatpush.bf16.msra.mxu0 %v959
        %1058 = vmatpush.bf16.msra.mxu0 %v953
        %1059 = vmatpush.bf16.msra.mxu0 %v947
        %1060 = vmatpush.bf16.msra.mxu0 %v941
        %1061 = vmatpush.bf16.msra.mxu0 %v935
        %1062 = vmatpush.bf16.msra.mxu0 %v929
        %1063 = vmatpush.bf16.msra.mxu0 %v923
        %1064 = vmatmul.bf16.gmra.mxu0 %v727
        %v1065 = vpop.f32.mrf.mxu0
        %v1066 = vadd.f32 %v1020, %v1065
        %v1067 = vpop.f32.mrf.mxu0
        %1068 = vdwg.mxu0
        %1069 = vmatpush.bf16.msra.mxu0 %v966
        %1070 = vmatpush.bf16.msra.mxu0 %v960
        %1071 = vmatpush.bf16.msra.mxu0 %v954
        %1072 = vmatpush.bf16.msra.mxu0 %v948
        %1073 = vmatpush.bf16.msra.mxu0 %v942
        %1074 = vmatpush.bf16.msra.mxu0 %v936
        %1075 = vmatpush.bf16.msra.mxu0 %v930
        %1076 = vmatpush.bf16.msra.mxu0 %v924
        %1077 = vmatmul.bf16.gmra.mxu0 %v727
        %v1078 = vpop.f32.mrf.mxu0
        %v1079 = vadd.f32 %v1021, %v1078
        %v1080 = vpop.f32.mrf.mxu0
        %1081 = vdwg.mxu0
        %1082 = vmatpush.bf16.msra.mxu0 %v967
        %1083 = vmatpush.bf16.msra.mxu0 %v961
        %1084 = vmatpush.bf16.msra.mxu0 %v955
        %1085 = vmatpush.bf16.msra.mxu0 %v949
        %1086 = vmatpush.bf16.msra.mxu0 %v943
        %1087 = vmatpush.bf16.msra.mxu0 %v937
        %1088 = vmatpush.bf16.msra.mxu0 %v931
        %1089 = vmatpush.bf16.msra.mxu0 %v925
        %1090 = vmatmul.bf16.gmra.mxu0 %v727
        %v1091 = vpop.f32.mrf.mxu0
        %v1092 = vadd.f32 %v1022, %v1091
        %v1093 = vpop.f32.mrf.mxu0
        %1094 = vdwg.mxu0
        %1095 = vmatpush.bf16.msra.mxu0 %v968
        %1096 = vmatpush.bf16.msra.mxu0 %v962
        %1097 = vmatpush.bf16.msra.mxu0 %v956
        %1098 = vmatpush.bf16.msra.mxu0 %v950
        %1099 = vmatpush.bf16.msra.mxu0 %v944
        %1100 = vmatpush.bf16.msra.mxu0 %v938
        %1101 = vmatpush.bf16.msra.mxu0 %v932
        %1102 = vmatpush.bf16.msra.mxu0 %v926
        %1103 = vmatmul.bf16.gmra.mxu0 %v727
        %v1104 = vpop.f32.mrf.mxu0
        %v1105 = vadd.f32 %v1023, %v1104
        %v1106 = vpop.f32.mrf.mxu0
        %1107 = vdwg.mxu0
        %s1108 = scalar_lea.vmem [#allocation8], 384
        %v1109 = vld [vmem:[%s1108] sm:$0xff]
        %v1110 = vld [vmem:[%s1108 + $0x8] sm:$0xff]
        %v1111 = vld [vmem:[%s1108 + $0x10] sm:$0xff]
        %v1112 = vld [vmem:[%s1108 + $0x18] sm:$0xff]
        %v1113 = vld [vmem:[%s1108 + $0x20] sm:$0xff]
        %v1114 = vld [vmem:[%s1108 + $0x28] sm:$0xff]
        %v1115 = vld [vmem:[%s1108 + $0x30] sm:$0xff]
        %v1116 = vld [vmem:[%s1108 + $0x38] sm:$0xff]
        %v1117 = vld [vmem:[%s1108 + $0x40] sm:$0xff]
        %v1118 = vld [vmem:[%s1108 + $0x48] sm:$0xff]
        %v1119 = vld [vmem:[%s1108 + $0x50] sm:$0xff]
        %v1120 = vld [vmem:[%s1108 + $0x58] sm:$0xff]
        %v1121 = vld [vmem:[%s1108 + $0x60] sm:$0xff]
        %v1122 = vld [vmem:[%s1108 + $0x68] sm:$0xff]
        %v1123 = vld [vmem:[%s1108 + $0x70] sm:$0xff]
        %v1124 = vld [vmem:[%s1108 + $0x78] sm:$0xff]
        %v1125 = vld [vmem:[%s1108 + $0x80] sm:$0xff]
        %v1126 = vld [vmem:[%s1108 + $0x88] sm:$0xff]
        %v1127 = vld [vmem:[%s1108 + $0x90] sm:$0xff]
        %v1128 = vld [vmem:[%s1108 + $0x98] sm:$0xff]
        %v1129 = vld [vmem:[%s1108 + $0xa0] sm:$0xff]
        %v1130 = vld [vmem:[%s1108 + $0xa8] sm:$0xff]
        %v1131 = vld [vmem:[%s1108 + $0xb0] sm:$0xff]
        %v1132 = vld [vmem:[%s1108 + $0xb8] sm:$0xff]
        %v1133 = vld [vmem:[%s1108 + $0xc0] sm:$0xff]
        %v1134 = vld [vmem:[%s1108 + $0xc8] sm:$0xff]
        %v1135 = vld [vmem:[%s1108 + $0xd0] sm:$0xff]
        %v1136 = vld [vmem:[%s1108 + $0xd8] sm:$0xff]
        %v1137 = vld [vmem:[%s1108 + $0xe0] sm:$0xff]
        %v1138 = vld [vmem:[%s1108 + $0xe8] sm:$0xff]
        %v1139 = vld [vmem:[%s1108 + $0xf0] sm:$0xff]
        %v1140 = vld [vmem:[%s1108 + $0xf8] sm:$0xff]
        %v1141 = vld [vmem:[%s1108 + $0x100] sm:$0xff]
        %v1142 = vld [vmem:[%s1108 + $0x108] sm:$0xff]
        %v1143 = vld [vmem:[%s1108 + $0x110] sm:$0xff]
        %v1144 = vld [vmem:[%s1108 + $0x118] sm:$0xff]
        %v1145 = vld [vmem:[%s1108 + $0x120] sm:$0xff]
        %v1146 = vld [vmem:[%s1108 + $0x128] sm:$0xff]
        %v1147 = vld [vmem:[%s1108 + $0x130] sm:$0xff]
        %v1148 = vld [vmem:[%s1108 + $0x138] sm:$0xff]
        %v1149 = vld [vmem:[%s1108 + $0x140] sm:$0xff]
        %v1150 = vld [vmem:[%s1108 + $0x148] sm:$0xff]
        %v1151 = vld [vmem:[%s1108 + $0x150] sm:$0xff]
        %v1152 = vld [vmem:[%s1108 + $0x158] sm:$0xff]
        %v1153 = vld [vmem:[%s1108 + $0x160] sm:$0xff]
        %v1154 = vld [vmem:[%s1108 + $0x168] sm:$0xff]
        %v1155 = vld [vmem:[%s1108 + $0x170] sm:$0xff]
        %v1156 = vld [vmem:[%s1108 + $0x178] sm:$0xff]
        %s1157 = scalar_lea.vmem [#allocation10], 6
        %v1158 = vld [vmem:[%s1157] sm:$0x3f]
        %v1207 = vunpack.c.l.b16 %v1109
        %v1208 = vunpack.c.h.b16 %v1109
        %v1209 = vunpack.c.l.b16 %v1110
        %v1210 = vunpack.c.h.b16 %v1110
        %v1211 = vunpack.c.l.b16 %v1111
        %v1212 = vunpack.c.h.b16 %v1111
        %v1213 = vunpack.c.l.b16 %v1112
        %v1214 = vunpack.c.h.b16 %v1112
        %v1215 = vunpack.c.l.b16 %v1113
        %v1216 = vunpack.c.h.b16 %v1113
        %v1217 = vunpack.c.l.b16 %v1114
        %v1218 = vunpack.c.h.b16 %v1114
        %v1219 = vunpack.c.l.b16 %v1115
        %v1220 = vunpack.c.h.b16 %v1115
        %v1221 = vunpack.c.l.b16 %v1116
        %v1222 = vunpack.c.h.b16 %v1116
        %v1223 = vunpack.c.l.b16 %v1117
        %v1224 = vunpack.c.h.b16 %v1117
        %v1225 = vunpack.c.l.b16 %v1118
        %v1226 = vunpack.c.h.b16 %v1118
        %v1227 = vunpack.c.l.b16 %v1119
        %v1228 = vunpack.c.h.b16 %v1119
        %v1229 = vunpack.c.l.b16 %v1120
        %v1230 = vunpack.c.h.b16 %v1120
        %v1231 = vunpack.c.l.b16 %v1121
        %v1232 = vunpack.c.h.b16 %v1121
        %v1233 = vunpack.c.l.b16 %v1122
        %v1234 = vunpack.c.h.b16 %v1122
        %v1235 = vunpack.c.l.b16 %v1123
        %v1236 = vunpack.c.h.b16 %v1123
        %v1237 = vunpack.c.l.b16 %v1124
        %v1238 = vunpack.c.h.b16 %v1124
        %v1239 = vunpack.c.l.b16 %v1125
        %v1240 = vunpack.c.h.b16 %v1125
        %v1241 = vunpack.c.l.b16 %v1126
        %v1242 = vunpack.c.h.b16 %v1126
        %v1243 = vunpack.c.l.b16 %v1127
        %v1244 = vunpack.c.h.b16 %v1127
        %v1245 = vunpack.c.l.b16 %v1128
        %v1246 = vunpack.c.h.b16 %v1128
        %v1247 = vunpack.c.l.b16 %v1129
        %v1248 = vunpack.c.h.b16 %v1129
        %v1249 = vunpack.c.l.b16 %v1130
        %v1250 = vunpack.c.h.b16 %v1130
        %v1251 = vunpack.c.l.b16 %v1131
        %v1252 = vunpack.c.h.b16 %v1131
        %v1253 = vunpack.c.l.b16 %v1132
        %v1254 = vunpack.c.h.b16 %v1132
        %v1255 = vunpack.c.l.b16 %v1133
        %v1256 = vunpack.c.h.b16 %v1133
        %v1257 = vunpack.c.l.b16 %v1134
        %v1258 = vunpack.c.h.b16 %v1134
        %v1259 = vunpack.c.l.b16 %v1135
        %v1260 = vunpack.c.h.b16 %v1135
        %v1261 = vunpack.c.l.b16 %v1136
        %v1262 = vunpack.c.h.b16 %v1136
        %v1263 = vunpack.c.l.b16 %v1137
        %v1264 = vunpack.c.h.b16 %v1137
        %v1265 = vunpack.c.l.b16 %v1138
        %v1266 = vunpack.c.h.b16 %v1138
        %v1267 = vunpack.c.l.b16 %v1139
        %v1268 = vunpack.c.h.b16 %v1139
        %v1269 = vunpack.c.l.b16 %v1140
        %v1270 = vunpack.c.h.b16 %v1140
        %v1271 = vunpack.c.l.b16 %v1141
        %v1272 = vunpack.c.h.b16 %v1141
        %v1273 = vunpack.c.l.b16 %v1142
        %v1274 = vunpack.c.h.b16 %v1142
        %v1275 = vunpack.c.l.b16 %v1143
        %v1276 = vunpack.c.h.b16 %v1143
        %v1277 = vunpack.c.l.b16 %v1144
        %v1278 = vunpack.c.h.b16 %v1144
        %v1279 = vunpack.c.l.b16 %v1145
        %v1280 = vunpack.c.h.b16 %v1145
        %v1281 = vunpack.c.l.b16 %v1146
        %v1282 = vunpack.c.h.b16 %v1146
        %v1283 = vunpack.c.l.b16 %v1147
        %v1284 = vunpack.c.h.b16 %v1147
        %v1285 = vunpack.c.l.b16 %v1148
        %v1286 = vunpack.c.h.b16 %v1148
        %v1287 = vunpack.c.l.b16 %v1149
        %v1288 = vunpack.c.h.b16 %v1149
        %v1289 = vunpack.c.l.b16 %v1150
        %v1290 = vunpack.c.h.b16 %v1150
        %v1291 = vunpack.c.l.b16 %v1151
        %v1292 = vunpack.c.h.b16 %v1151
        %v1293 = vunpack.c.l.b16 %v1152
        %v1294 = vunpack.c.h.b16 %v1152
        %v1295 = vunpack.c.l.b16 %v1153
        %v1296 = vunpack.c.h.b16 %v1153
        %v1297 = vunpack.c.l.b16 %v1154
        %v1298 = vunpack.c.h.b16 %v1154
        %v1299 = vunpack.c.l.b16 %v1155
        %v1300 = vunpack.c.h.b16 %v1155
        %v1301 = vunpack.c.l.b16 %v1156
        %v1302 = vunpack.c.h.b16 %v1156
        %v1303 = vpack.c.b16 %v1213, %v1207
        %v1304 = vpack.c.b16 %v1214, %v1208
        %v1305 = vpack.c.b16 %v1215, %v1209
        %v1306 = vpack.c.b16 %v1216, %v1210
        %v1307 = vpack.c.b16 %v1217, %v1211
        %v1308 = vpack.c.b16 %v1218, %v1212
        %v1309 = vpack.c.b16 %v1225, %v1219
        %v1310 = vpack.c.b16 %v1226, %v1220
        %v1311 = vpack.c.b16 %v1227, %v1221
        %v1312 = vpack.c.b16 %v1228, %v1222
        %v1313 = vpack.c.b16 %v1229, %v1223
        %v1314 = vpack.c.b16 %v1230, %v1224
        %v1315 = vpack.c.b16 %v1237, %v1231
        %v1316 = vpack.c.b16 %v1238, %v1232
        %v1317 = vpack.c.b16 %v1239, %v1233
        %v1318 = vpack.c.b16 %v1240, %v1234
        %v1319 = vpack.c.b16 %v1241, %v1235
        %v1320 = vpack.c.b16 %v1242, %v1236
        %v1321 = vpack.c.b16 %v1249, %v1243
        %v1322 = vpack.c.b16 %v1250, %v1244
        %v1323 = vpack.c.b16 %v1251, %v1245
        %v1324 = vpack.c.b16 %v1252, %v1246
        %v1325 = vpack.c.b16 %v1253, %v1247
        %v1326 = vpack.c.b16 %v1254, %v1248
        %v1327 = vpack.c.b16 %v1261, %v1255
        %v1328 = vpack.c.b16 %v1262, %v1256
        %v1329 = vpack.c.b16 %v1263, %v1257
        %v1330 = vpack.c.b16 %v1264, %v1258
        %v1331 = vpack.c.b16 %v1265, %v1259
        %v1332 = vpack.c.b16 %v1266, %v1260
        %v1333 = vpack.c.b16 %v1273, %v1267
        %v1334 = vpack.c.b16 %v1274, %v1268
        %v1335 = vpack.c.b16 %v1275, %v1269
        %v1336 = vpack.c.b16 %v1276, %v1270
        %v1337 = vpack.c.b16 %v1277, %v1271
        %v1338 = vpack.c.b16 %v1278, %v1272
        %v1339 = vpack.c.b16 %v1285, %v1279
        %v1340 = vpack.c.b16 %v1286, %v1280
        %v1341 = vpack.c.b16 %v1287, %v1281
        %v1342 = vpack.c.b16 %v1288, %v1282
        %v1343 = vpack.c.b16 %v1289, %v1283
        %v1344 = vpack.c.b16 %v1290, %v1284
        %v1345 = vpack.c.b16 %v1297, %v1291
        %v1346 = vpack.c.b16 %v1298, %v1292
        %v1347 = vpack.c.b16 %v1299, %v1293
        %v1348 = vpack.c.b16 %v1300, %v1294
        %v1349 = vpack.c.b16 %v1301, %v1295
        %v1350 = vpack.c.b16 %v1302, %v1296
        %v1400 = vperm.slane %v1158, 0
        %v1401 = vperm.slane %v1158, 1
        %v1402 = vperm.slane %v1158, 2
        %v1403 = vperm.slane %v1158, 3
        %v1404 = vperm.slane %v1158, 4
        %v1405 = vperm.slane %v1158, 5
        %1412 = vmatpush.bf16.msra.mxu0 %v1345
        %1413 = vmatpush.bf16.msra.mxu0 %v1339
        %1414 = vmatpush.bf16.msra.mxu0 %v1333
        %1415 = vmatpush.bf16.msra.mxu0 %v1327
        %1416 = vmatpush.bf16.msra.mxu0 %v1321
        %1417 = vmatpush.bf16.msra.mxu0 %v1315
        %1418 = vmatpush.bf16.msra.mxu0 %v1309
        %1419 = vmatpush.bf16.msra.mxu0 %v1303
        %1420 = vmatmul.bf16.gmra.mxu0 %v727
        %v1421 = vpop.f32.mrf.mxu0
        %v1422 = vadd.f32 %v1400, %v1421
        %v1423 = vpop.f32.mrf.mxu0
        %1424 = vdwg.mxu0
        %1425 = vmatpush.bf16.msra.mxu0 %v1346
        %1426 = vmatpush.bf16.msra.mxu0 %v1340
        %1427 = vmatpush.bf16.msra.mxu0 %v1334
        %1428 = vmatpush.bf16.msra.mxu0 %v1328
        %1429 = vmatpush.bf16.msra.mxu0 %v1322
        %1430 = vmatpush.bf16.msra.mxu0 %v1316
        %1431 = vmatpush.bf16.msra.mxu0 %v1310
        %1432 = vmatpush.bf16.msra.mxu0 %v1304
        %1433 = vmatmul.bf16.gmra.mxu0 %v727
        %v1434 = vpop.f32.mrf.mxu0
        %v1435 = vadd.f32 %v1401, %v1434
        %v1436 = vpop.f32.mrf.mxu0
        %1437 = vdwg.mxu0
        %1438 = vmatpush.bf16.msra.mxu0 %v1347
        %1439 = vmatpush.bf16.msra.mxu0 %v1341
        %1440 = vmatpush.bf16.msra.mxu0 %v1335
        %1441 = vmatpush.bf16.msra.mxu0 %v1329
        %1442 = vmatpush.bf16.msra.mxu0 %v1323
        %1443 = vmatpush.bf16.msra.mxu0 %v1317
        %1444 = vmatpush.bf16.msra.mxu0 %v1311
        %1445 = vmatpush.bf16.msra.mxu0 %v1305
        %1446 = vmatmul.bf16.gmra.mxu0 %v727
        %v1447 = vpop.f32.mrf.mxu0
        %v1448 = vadd.f32 %v1402, %v1447
        %v1449 = vpop.f32.mrf.mxu0
        %1450 = vdwg.mxu0
        %1451 = vmatpush.bf16.msra.mxu0 %v1348
        %1452 = vmatpush.bf16.msra.mxu0 %v1342
        %1453 = vmatpush.bf16.msra.mxu0 %v1336
        %1454 = vmatpush.bf16.msra.mxu0 %v1330
        %1455 = vmatpush.bf16.msra.mxu0 %v1324
        %1456 = vmatpush.bf16.msra.mxu0 %v1318
        %1457 = vmatpush.bf16.msra.mxu0 %v1312
        %1458 = vmatpush.bf16.msra.mxu0 %v1306
        %1459 = vmatmul.bf16.gmra.mxu0 %v727
        %v1460 = vpop.f32.mrf.mxu0
        %v1461 = vadd.f32 %v1403, %v1460
        %v1462 = vpop.f32.mrf.mxu0
        %1463 = vdwg.mxu0
        %1464 = vmatpush.bf16.msra.mxu0 %v1349
        %1465 = vmatpush.bf16.msra.mxu0 %v1343
        %1466 = vmatpush.bf16.msra.mxu0 %v1337
        %1467 = vmatpush.bf16.msra.mxu0 %v1331
        %1468 = vmatpush.bf16.msra.mxu0 %v1325
        %1469 = vmatpush.bf16.msra.mxu0 %v1319
        %1470 = vmatpush.bf16.msra.mxu0 %v1313
        %1471 = vmatpush.bf16.msra.mxu0 %v1307
        %1472 = vmatmul.bf16.gmra.mxu0 %v727
        %v1473 = vpop.f32.mrf.mxu0
        %v1474 = vadd.f32 %v1404, %v1473
        %v1475 = vpop.f32.mrf.mxu0
        %1476 = vdwg.mxu0
        %1477 = vmatpush.bf16.msra.mxu0 %v1350
        %1478 = vmatpush.bf16.msra.mxu0 %v1344
        %1479 = vmatpush.bf16.msra.mxu0 %v1338
        %1480 = vmatpush.bf16.msra.mxu0 %v1332
        %1481 = vmatpush.bf16.msra.mxu0 %v1326
        %1482 = vmatpush.bf16.msra.mxu0 %v1320
        %1483 = vmatpush.bf16.msra.mxu0 %v1314
        %1484 = vmatpush.bf16.msra.mxu0 %v1308
        %1485 = vmatmul.bf16.gmra.mxu0 %v727
        %v1486 = vpop.f32.mrf.mxu0
        %v1487 = vadd.f32 %v1405, %v1486
        %v1488 = vpop.f32.mrf.mxu0
        %1489 = vdwg.mxu0
        %1490 = vadd.xlane.f32.xlu0 %v703
        %v1491 = vpop.xlane.xlu0 %1490
        %v1492 = vrcp.pop 128.0
        %v1493 = vmul.f32 128.0, %v1492
        %v1494 = vsub.f32 1.0, %v1493
        %v1495 = vmul.f32 %v1492, %v1494
        %v1496 = vadd.f32 %v1492, %v1495
        %vm1497 = vweird.f32 %v1492
        %v1498 = vsel %vm1497, %v1492, %v1496
        %v1499 = vmul.f32 %v1491, %v1498
        %v1500 = vmul.f32 %v703, %v703
        %1501 = vadd.xlane.f32.xlu0 %v1500
        %v1502 = vpop.xlane.xlu0 %1501
        %v1503 = vmul.f32 %v1502, %v1498
        %v1504 = vmul.f32 %v1499, %v1499
        %v1505 = vsub.f32 %v1503, %v1504
        %v1506 = vsub.f32 %v703, %v1499
        %v1507 = vadd.f32 %v1505, 1e-06
        %v1508 = vrsqrt.pop %v1507
        %v1509 = vmul.f32 %v1508, %v1507
        %v1510 = vmul.f32 %v1509, %v1508
        %v1511 = vmul.f32 0.5, %v1510
        %v1512 = vsub.f32 1.5, %v1511
        %v1513 = vmul.f32 %v1508, %v1512
        %vm1514 = vweird.f32 %v1507
        %vm1515 = vweird.f32 %v1508
        %vm1516 = vmor %vm1514, %vm1515
        %v1517 = vsel %vm1516, %v1508, %v1513
        %v1518 = vmul.f32 %v1506, %v1517
        %v1519 = vadd.f32 %v1053, 1.0
        %v1520 = vperm.slane %v1519, 0
        %v1521 = vmul.f32 %v1518, %v1520
        %v1522 = vperm.slane %v1040, 0
        %v1523 = vadd.f32 %v1521, %v1522
        %v1524 = vpack.c.bf16 %v1523, %v1523
        %v1525 = vld [vmem:[#allocation11] sm:$0xff]
        %v1526 = vld [vmem:[#allocation11 + $0x8] sm:$0xf]
        %v1527 = vld [vmem:[#allocation11 + $0xc] sm:$0xff]
        %v1528 = vld [vmem:[#allocation11 + $0x14] sm:$0xf]
        %v1529 = vld [vmem:[#allocation11 + $0x18] sm:$0xff]
        %v1530 = vld [vmem:[#allocation11 + $0x20] sm:$0xf]
        %v1531 = vld [vmem:[#allocation11 + $0x24] sm:$0xff]
        %v1532 = vld [vmem:[#allocation11 + $0x2c] sm:$0xf]
        %v1533 = vld [vmem:[#allocation11 + $0x30] sm:$0xff]
        %v1534 = vld [vmem:[#allocation11 + $0x38] sm:$0xf]
        %v1535 = vld [vmem:[#allocation11 + $0x3c] sm:$0xff]
        %v1536 = vld [vmem:[#allocation11 + $0x44] sm:$0xf]
        %v1537 = vld [vmem:[#allocation11 + $0x48] sm:$0xff]
        %v1538 = vld [vmem:[#allocation11 + $0x50] sm:$0xf]
        %v1539 = vld [vmem:[#allocation11 + $0x54] sm:$0xff]
        %v1540 = vld [vmem:[#allocation11 + $0x5c] sm:$0xf]
        %v1541 = vld [vmem:[#allocation11 + $0x60] sm:$0xff]
        %v1542 = vld [vmem:[#allocation11 + $0x68] sm:$0xf]
        %v1543 = vld [vmem:[#allocation11 + $0x6c] sm:$0xff]
        %v1544 = vld [vmem:[#allocation11 + $0x74] sm:$0xf]
        %v1545 = vld [vmem:[#allocation11 + $0x78] sm:$0xff]
        %v1546 = vld [vmem:[#allocation11 + $0x80] sm:$0xf]
        %v1547 = vld [vmem:[#allocation11 + $0x84] sm:$0xff]
        %v1548 = vld [vmem:[#allocation11 + $0x8c] sm:$0xf]
        %v1549 = vld [vmem:[#allocation11 + $0x90] sm:$0xff]
        %v1550 = vld [vmem:[#allocation11 + $0x98] sm:$0xf]
        %v1551 = vld [vmem:[#allocation11 + $0x9c] sm:$0xff]
        %v1552 = vld [vmem:[#allocation11 + $0xa4] sm:$0xf]
        %v1553 = vld [vmem:[#allocation11 + $0xa8] sm:$0xff]
        %v1554 = vld [vmem:[#allocation11 + $0xb0] sm:$0xf]
        %v1555 = vld [vmem:[#allocation11 + $0xb4] sm:$0xff]
        %v1556 = vld [vmem:[#allocation11 + $0xbc] sm:$0xf]
        %v1557 = vld [vmem:[#allocation13] sm:$0x7]
        %v1559 = vperm.slane %v1557, 0
        %v1560 = vperm.slane %v1557, 1
        %v1561 = vperm.slane %v1557, 2
        %v1597 = vunpack.c.l.b16 %v1525
        %v1598 = vunpack.c.h.b16 %v1525
        %v1599 = vunpack.c.l.b16 %v1526
        %v1600 = vunpack.c.l.b16 %v1527
        %v1601 = vunpack.c.h.b16 %v1527
        %v1602 = vunpack.c.l.b16 %v1528
        %v1603 = vunpack.c.l.b16 %v1529
        %v1604 = vunpack.c.h.b16 %v1529
        %v1605 = vunpack.c.l.b16 %v1530
        %v1606 = vunpack.c.l.b16 %v1531
        %v1607 = vunpack.c.h.b16 %v1531
        %v1608 = vunpack.c.l.b16 %v1532
        %v1609 = vunpack.c.l.b16 %v1533
        %v1610 = vunpack.c.h.b16 %v1533
        %v1611 = vunpack.c.l.b16 %v1534
        %v1612 = vunpack.c.l.b16 %v1535
        %v1613 = vunpack.c.h.b16 %v1535
        %v1614 = vunpack.c.l.b16 %v1536
        %v1615 = vunpack.c.l.b16 %v1537
        %v1616 = vunpack.c.h.b16 %v1537
        %v1617 = vunpack.c.l.b16 %v1538
        %v1618 = vunpack.c.l.b16 %v1539
        %v1619 = vunpack.c.h.b16 %v1539
        %v1620 = vunpack.c.l.b16 %v1540
        %v1621 = vunpack.c.l.b16 %v1541
        %v1622 = vunpack.c.h.b16 %v1541
        %v1623 = vunpack.c.l.b16 %v1542
        %v1624 = vunpack.c.l.b16 %v1543
        %v1625 = vunpack.c.h.b16 %v1543
        %v1626 = vunpack.c.l.b16 %v1544
        %v1627 = vunpack.c.l.b16 %v1545
        %v1628 = vunpack.c.h.b16 %v1545
        %v1629 = vunpack.c.l.b16 %v1546
        %v1630 = vunpack.c.l.b16 %v1547
        %v1631 = vunpack.c.h.b16 %v1547
        %v1632 = vunpack.c.l.b16 %v1548
        %v1633 = vunpack.c.l.b16 %v1549
        %v1634 = vunpack.c.h.b16 %v1549
        %v1635 = vunpack.c.l.b16 %v1550
        %v1636 = vunpack.c.l.b16 %v1551
        %v1637 = vunpack.c.h.b16 %v1551
        %v1638 = vunpack.c.l.b16 %v1552
        %v1639 = vunpack.c.l.b16 %v1553
        %v1640 = vunpack.c.h.b16 %v1553
        %v1641 = vunpack.c.l.b16 %v1554
        %v1642 = vunpack.c.l.b16 %v1555
        %v1643 = vunpack.c.h.b16 %v1555
        %v1644 = vunpack.c.l.b16 %v1556
        %v1645 = vpack.c.b16 %v1600, %v1597
        %v1646 = vpack.c.b16 %v1601, %v1598
        %v1647 = vpack.c.b16 %v1602, %v1599
        %v1648 = vpack.c.b16 %v1606, %v1603
        %v1649 = vpack.c.b16 %v1607, %v1604
        %v1650 = vpack.c.b16 %v1608, %v1605
        %v1651 = vpack.c.b16 %v1612, %v1609
        %v1652 = vpack.c.b16 %v1613, %v1610
        %v1653 = vpack.c.b16 %v1614, %v1611
        %v1654 = vpack.c.b16 %v1618, %v1615
        %v1655 = vpack.c.b16 %v1619, %v1616
        %v1656 = vpack.c.b16 %v1620, %v1617
        %v1657 = vpack.c.b16 %v1624, %v1621
        %v1658 = vpack.c.b16 %v1625, %v1622
        %v1659 = vpack.c.b16 %v1626, %v1623
        %v1660 = vpack.c.b16 %v1630, %v1627
        %v1661 = vpack.c.b16 %v1631, %v1628
        %v1662 = vpack.c.b16 %v1632, %v1629
        %v1663 = vpack.c.b16 %v1636, %v1633
        %v1664 = vpack.c.b16 %v1637, %v1634
        %v1665 = vpack.c.b16 %v1638, %v1635
        %v1666 = vpack.c.b16 %v1642, %v1639
        %v1667 = vpack.c.b16 %v1643, %v1640
        %v1668 = vpack.c.b16 %v1644, %v1641
        %1693 = vmatpush.bf16.msra.mxu0 %v1666
        %1694 = vmatpush.bf16.msra.mxu0 %v1663
        %1695 = vmatpush.bf16.msra.mxu0 %v1660
        %1696 = vmatpush.bf16.msra.mxu0 %v1657
        %1697 = vmatpush.bf16.msra.mxu0 %v1654
        %1698 = vmatpush.bf16.msra.mxu0 %v1651
        %1699 = vmatpush.bf16.msra.mxu0 %v1648
        %1700 = vmatpush.bf16.msra.mxu0 %v1645
        %1701 = vmatmul.bf16.gmra.mxu0 %v1524
        %v1702 = vpop.f32.mrf.mxu0
        %v1703 = vadd.f32 %v1559, %v1702
        %v1704 = vpop.f32.mrf.mxu0
        %1705 = vdwg.mxu0
        %1706 = vmatpush.bf16.msra.mxu0 %v1667
        %1707 = vmatpush.bf16.msra.mxu0 %v1664
        %1708 = vmatpush.bf16.msra.mxu0 %v1661
        %1709 = vmatpush.bf16.msra.mxu0 %v1658
        %1710 = vmatpush.bf16.msra.mxu0 %v1655
        %1711 = vmatpush.bf16.msra.mxu0 %v1652
        %1712 = vmatpush.bf16.msra.mxu0 %v1649
        %1713 = vmatpush.bf16.msra.mxu0 %v1646
        %1714 = vmatmul.bf16.gmra.mxu0 %v1524
        %v1715 = vpop.f32.mrf.mxu0
        %v1716 = vadd.f32 %v1560, %v1715
        %v1717 = vpop.f32.mrf.mxu0
        %1718 = vdwg.mxu0
        %1719 = vmatpush.bf16.msra.mxu0 %v1668
        %1720 = vmatpush.bf16.msra.mxu0 %v1665
        %1721 = vmatpush.bf16.msra.mxu0 %v1662
        %1722 = vmatpush.bf16.msra.mxu0 %v1659
        %1723 = vmatpush.bf16.msra.mxu0 %v1656
        %1724 = vmatpush.bf16.msra.mxu0 %v1653
        %1725 = vmatpush.bf16.msra.mxu0 %v1650
        %1726 = vmatpush.bf16.msra.mxu0 %v1647
        %1727 = vmatmul.bf16.gmra.mxu0 %v1524
        %v1728 = vpop.f32.mrf.mxu0
        %v1729 = vadd.f32 %v1561, %v1728
        %v1730 = vpop.f32.mrf.mxu0
        %1731 = vdwg.mxu0
        %1732 = vadd.xlane.f32.xlu0 %v704
        %v1733 = vpop.xlane.xlu0 %1732
        %1734 = vadd.xlane.f32.xlu0 %v705
        %v1735 = vpop.xlane.xlu0 %1734
        %v1736 = vmul.f32 %v1733, %v1498
        %v1737 = vmul.f32 %v1735, %v1498
        %v1738 = vmul.f32 %v704, %v704
        %v1739 = vmul.f32 %v705, %v705
        %1740 = vadd.xlane.f32.xlu0 %v1738
        %v1741 = vpop.xlane.xlu0 %1740
        %1742 = vadd.xlane.f32.xlu0 %v1739
        %v1743 = vpop.xlane.xlu0 %1742
        %v1744 = vmul.f32 %v1741, %v1498
        %v1745 = vmul.f32 %v1743, %v1498
        %v1746 = vmul.f32 %v1736, %v1736
        %v1747 = vmul.f32 %v1737, %v1737
        %v1748 = vsub.f32 %v1744, %v1746
        %v1749 = vsub.f32 %v1745, %v1747
        %v1750 = vsub.f32 %v704, %v1736
        %v1751 = vsub.f32 %v705, %v1737
        %v1752 = vadd.f32 %v1748, 1e-06
        %v1753 = vadd.f32 %v1749, 1e-06
        %v1754 = vrsqrt.pop %v1752
        %v1755 = vmul.f32 %v1754, %v1752
        %v1756 = vmul.f32 %v1755, %v1754
        %v1757 = vmul.f32 0.5, %v1756
        %v1758 = vsub.f32 1.5, %v1757
        %v1759 = vmul.f32 %v1754, %v1758
        %vm1760 = vweird.f32 %v1752
        %vm1761 = vweird.f32 %v1754
        %vm1762 = vmor %vm1760, %vm1761
        %v1763 = vsel %vm1762, %v1754, %v1759
        %v1764 = vrsqrt.pop %v1753
        %v1765 = vmul.f32 %v1764, %v1753
        %v1766 = vmul.f32 %v1765, %v1764
        %v1767 = vmul.f32 0.5, %v1766
        %v1768 = vsub.f32 1.5, %v1767
        %v1769 = vmul.f32 %v1764, %v1768
        %vm1770 = vweird.f32 %v1753
        %vm1771 = vweird.f32 %v1764
        %vm1772 = vmor %vm1770, %vm1771
        %v1773 = vsel %vm1772, %v1764, %v1769
        %v1774 = vmul.f32 %v1750, %v1763
        %v1775 = vmul.f32 %v1751, %v1773
        %v1776 = vadd.f32 %v1435, 1.0
        %v1777 = vperm.slane %v1776, 0
        %v1778 = vmul.f32 %v1774, %v1777
        %v1779 = vmul.f32 %v1775, %v1777
        %v1780 = vperm.slane %v1422, 0
        %v1781 = vadd.f32 %v1778, %v1780
        %v1782 = vadd.f32 %v1779, %v1780
        %v1783 = vpack.c.bf16 %v1782, %v1781
        %s1784 = scalar_lea.vmem [#allocation11], 192
        %v1785 = vld [vmem:[%s1784] sm:$0xff]
        %v1786 = vld [vmem:[%s1784 + $0x8] sm:$0xf]
        %v1787 = vld [vmem:[%s1784 + $0xc] sm:$0xff]
        %v1788 = vld [vmem:[%s1784 + $0x14] sm:$0xf]
        %v1789 = vld [vmem:[%s1784 + $0x18] sm:$0xff]
        %v1790 = vld [vmem:[%s1784 + $0x20] sm:$0xf]
        %v1791 = vld [vmem:[%s1784 + $0x24] sm:$0xff]
        %v1792 = vld [vmem:[%s1784 + $0x2c] sm:$0xf]
        %v1793 = vld [vmem:[%s1784 + $0x30] sm:$0xff]
        %v1794 = vld [vmem:[%s1784 + $0x38] sm:$0xf]
        %v1795 = vld [vmem:[%s1784 + $0x3c] sm:$0xff]
        %v1796 = vld [vmem:[%s1784 + $0x44] sm:$0xf]
        %v1797 = vld [vmem:[%s1784 + $0x48] sm:$0xff]
        %v1798 = vld [vmem:[%s1784 + $0x50] sm:$0xf]
        %v1799 = vld [vmem:[%s1784 + $0x54] sm:$0xff]
        %v1800 = vld [vmem:[%s1784 + $0x5c] sm:$0xf]
        %v1801 = vld [vmem:[%s1784 + $0x60] sm:$0xff]
        %v1802 = vld [vmem:[%s1784 + $0x68] sm:$0xf]
        %v1803 = vld [vmem:[%s1784 + $0x6c] sm:$0xff]
        %v1804 = vld [vmem:[%s1784 + $0x74] sm:$0xf]
        %v1805 = vld [vmem:[%s1784 + $0x78] sm:$0xff]
        %v1806 = vld [vmem:[%s1784 + $0x80] sm:$0xf]
        %v1807 = vld [vmem:[%s1784 + $0x84] sm:$0xff]
        %v1808 = vld [vmem:[%s1784 + $0x8c] sm:$0xf]
        %v1809 = vld [vmem:[%s1784 + $0x90] sm:$0xff]
        %v1810 = vld [vmem:[%s1784 + $0x98] sm:$0xf]
        %v1811 = vld [vmem:[%s1784 + $0x9c] sm:$0xff]
        %v1812 = vld [vmem:[%s1784 + $0xa4] sm:$0xf]
        %v1813 = vld [vmem:[%s1784 + $0xa8] sm:$0xff]
        %v1814 = vld [vmem:[%s1784 + $0xb0] sm:$0xf]
        %v1815 = vld [vmem:[%s1784 + $0xb4] sm:$0xff]
        %v1816 = vld [vmem:[%s1784 + $0xbc] sm:$0xf]
        %s1817 = scalar_lea.vmem [#allocation13], 3
        %v1818 = vld [vmem:[%s1817] sm:$0x7]
        %v1820 = vperm.slane %v1818, 0
        %v1821 = vperm.slane %v1818, 1
        %v1822 = vperm.slane %v1818, 2
        %v1858 = vunpack.c.l.b16 %v1785
        %v1859 = vunpack.c.h.b16 %v1785
        %v1860 = vunpack.c.l.b16 %v1786
        %v1861 = vunpack.c.l.b16 %v1787
        %v1862 = vunpack.c.h.b16 %v1787
        %v1863 = vunpack.c.l.b16 %v1788
        %v1864 = vunpack.c.l.b16 %v1789
        %v1865 = vunpack.c.h.b16 %v1789
        %v1866 = vunpack.c.l.b16 %v1790
        %v1867 = vunpack.c.l.b16 %v1791
        %v1868 = vunpack.c.h.b16 %v1791
        %v1869 = vunpack.c.l.b16 %v1792
        %v1870 = vunpack.c.l.b16 %v1793
        %v1871 = vunpack.c.h.b16 %v1793
        %v1872 = vunpack.c.l.b16 %v1794
        %v1873 = vunpack.c.l.b16 %v1795
        %v1874 = vunpack.c.h.b16 %v1795
        %v1875 = vunpack.c.l.b16 %v1796
        %v1876 = vunpack.c.l.b16 %v1797
        %v1877 = vunpack.c.h.b16 %v1797
        %v1878 = vunpack.c.l.b16 %v1798
        %v1879 = vunpack.c.l.b16 %v1799
        %v1880 = vunpack.c.h.b16 %v1799
        %v1881 = vunpack.c.l.b16 %v1800
        %v1882 = vunpack.c.l.b16 %v1801
        %v1883 = vunpack.c.h.b16 %v1801
        %v1884 = vunpack.c.l.b16 %v1802
        %v1885 = vunpack.c.l.b16 %v1803
        %v1886 = vunpack.c.h.b16 %v1803
        %v1887 = vunpack.c.l.b16 %v1804
        %v1888 = vunpack.c.l.b16 %v1805
        %v1889 = vunpack.c.h.b16 %v1805
        %v1890 = vunpack.c.l.b16 %v1806
        %v1891 = vunpack.c.l.b16 %v1807
        %v1892 = vunpack.c.h.b16 %v1807
        %v1893 = vunpack.c.l.b16 %v1808
        %v1894 = vunpack.c.l.b16 %v1809
        %v1895 = vunpack.c.h.b16 %v1809
        %v1896 = vunpack.c.l.b16 %v1810
        %v1897 = vunpack.c.l.b16 %v1811
        %v1898 = vunpack.c.h.b16 %v1811
        %v1899 = vunpack.c.l.b16 %v1812
        %v1900 = vunpack.c.l.b16 %v1813
        %v1901 = vunpack.c.h.b16 %v1813
        %v1902 = vunpack.c.l.b16 %v1814
        %v1903 = vunpack.c.l.b16 %v1815
        %v1904 = vunpack.c.h.b16 %v1815
        %v1905 = vunpack.c.l.b16 %v1816
        %v1906 = vpack.c.b16 %v1861, %v1858
        %v1907 = vpack.c.b16 %v1862, %v1859
        %v1908 = vpack.c.b16 %v1863, %v1860
        %v1909 = vpack.c.b16 %v1867, %v1864
        %v1910 = vpack.c.b16 %v1868, %v1865
        %v1911 = vpack.c.b16 %v1869, %v1866
        %v1912 = vpack.c.b16 %v1873, %v1870
        %v1913 = vpack.c.b16 %v1874, %v1871
        %v1914 = vpack.c.b16 %v1875, %v1872
        %v1915 = vpack.c.b16 %v1879, %v1876
        %v1916 = vpack.c.b16 %v1880, %v1877
        %v1917 = vpack.c.b16 %v1881, %v1878
        %v1918 = vpack.c.b16 %v1885, %v1882
        %v1919 = vpack.c.b16 %v1886, %v1883
        %v1920 = vpack.c.b16 %v1887, %v1884
        %v1921 = vpack.c.b16 %v1891, %v1888
        %v1922 = vpack.c.b16 %v1892, %v1889
        %v1923 = vpack.c.b16 %v1893, %v1890
        %v1924 = vpack.c.b16 %v1897, %v1894
        %v1925 = vpack.c.b16 %v1898, %v1895
        %v1926 = vpack.c.b16 %v1899, %v1896
        %v1927 = vpack.c.b16 %v1903, %v1900
        %v1928 = vpack.c.b16 %v1904, %v1901
        %v1929 = vpack.c.b16 %v1905, %v1902
        %1954 = vmatpush.bf16.msra.mxu0 %v1927
        %1955 = vmatpush.bf16.msra.mxu0 %v1924
        %1956 = vmatpush.bf16.msra.mxu0 %v1921
        %1957 = vmatpush.bf16.msra.mxu0 %v1918
        %1958 = vmatpush.bf16.msra.mxu0 %v1915
        %1959 = vmatpush.bf16.msra.mxu0 %v1912
        %1960 = vmatpush.bf16.msra.mxu0 %v1909
        %1961 = vmatpush.bf16.msra.mxu0 %v1906
        %1962 = vmatmul.bf16.gmra.mxu0 %v1783
        %v1963 = vpop.f32.mrf.mxu0
        %v1964 = vadd.f32 %v1820, %v1963
        %v1965 = vpop.f32.mrf.mxu0
        %v1966 = vadd.f32 %v1820, %v1965
        %1967 = vdwg.mxu0
        %1968 = vmatpush.bf16.msra.mxu0 %v1928
        %1969 = vmatpush.bf16.msra.mxu0 %v1925
        %1970 = vmatpush.bf16.msra.mxu0 %v1922
        %1971 = vmatpush.bf16.msra.mxu0 %v1919
        %1972 = vmatpush.bf16.msra.mxu0 %v1916
        %1973 = vmatpush.bf16.msra.mxu0 %v1913
        %1974 = vmatpush.bf16.msra.mxu0 %v1910
        %1975 = vmatpush.bf16.msra.mxu0 %v1907
        %1976 = vmatmul.bf16.gmra.mxu0 %v1783
        %v1977 = vpop.f32.mrf.mxu0
        %v1978 = vadd.f32 %v1821, %v1977
        %v1979 = vpop.f32.mrf.mxu0
        %v1980 = vadd.f32 %v1821, %v1979
        %1981 = vdwg.mxu0
        %1982 = vmatpush.bf16.msra.mxu0 %v1929
        %1983 = vmatpush.bf16.msra.mxu0 %v1926
        %1984 = vmatpush.bf16.msra.mxu0 %v1923
        %1985 = vmatpush.bf16.msra.mxu0 %v1920
        %1986 = vmatpush.bf16.msra.mxu0 %v1917
        %1987 = vmatpush.bf16.msra.mxu0 %v1914
        %1988 = vmatpush.bf16.msra.mxu0 %v1911
        %1989 = vmatpush.bf16.msra.mxu0 %v1908
        %1990 = vmatmul.bf16.gmra.mxu0 %v1783
        %v1991 = vpop.f32.mrf.mxu0
        %v1992 = vadd.f32 %v1822, %v1991
        %v1993 = vpop.f32.mrf.mxu0
        %v1994 = vadd.f32 %v1822, %v1993
        %1995 = vdwg.mxu0
        %v1996 = vmul.f32 %v1703, 0.125
        %v1997 = vmul.f32 %v1964, 0.125
        %v1998 = vmul.f32 %v1966, 0.125
        %2002 = vrot.lane.b32.xlu0 %v1996, 64
        %v2003 = vpop.permute.xlu0 %2002
        %2004 = vrot.lane.b32.xlu0 %v1997, 64
        %v2005 = vpop.permute.xlu0 %2004
        %2006 = vrot.lane.b32.xlu0 %v1998, 64
        %v2007 = vpop.permute.xlu0 %2006
        %v2011 = vrot.slane %v1996, 4
        %vm2012 = vcmask 1047556
        %v2013 = vsel %vm2012, 0.0, %v2011
        %v2015 = vunpack.c.l.s4 1983009808
        %v2016 = vunpack.c.0.s8 %v2015
        %v2017 = vperm.slane %v1996, %v2016
        %v2019 = vunpack.c.l.s4 1983009808
        %v2020 = vunpack.c.0.s8 %v2019
        %v2021 = vperm.slane %v2013, %v2020
        %v2022 = vrot.slane %v2003, 4
        %v2023 = vsel %vm2012, 0.0, %v2022
        %v2025 = vunpack.c.l.s4 1983009808
        %v2026 = vunpack.c.0.s8 %v2025
        %v2027 = vperm.slane %v2003, %v2026
        %v2029 = vunpack.c.l.s4 1983009808
        %v2030 = vunpack.c.0.s8 %v2029
        %v2031 = vperm.slane %v2023, %v2030
        %v2032 = vrot.slane %v2027, 4
        %v2033 = vsel %vm2012, %v2032, %v2017
        %v2034 = vrot.slane %v2017, 4
        %v2035 = vsel %vm2012, %v2027, %v2034
        %v2037 = vunpack.c.l.s4 1934713408
        %v2038 = vunpack.c.0.s8 %v2037
        %v2039 = vperm.slane %v2033, %v2038
        %v2041 = vunpack.c.l.s4 1934713408
        %v2042 = vunpack.c.0.s8 %v2041
        %v2043 = vperm.slane %v2035, %v2042
        %v2044 = vrot.slane %v2031, 4
        %v2045 = vsel %vm2012, %v2044, %v2021
        %v2046 = vrot.slane %v2021, 4
        %v2047 = vsel %vm2012, %v2031, %v2046
        %v2049 = vunpack.c.l.s4 1934713408
        %v2050 = vunpack.c.0.s8 %v2049
        %v2051 = vperm.slane %v2045, %v2050
        %v2053 = vunpack.c.l.s4 1934713408
        %v2054 = vunpack.c.0.s8 %v2053
        %v2055 = vperm.slane %v2047, %v2054
        %v2056 = vrot.slane %v2039, 4
        %v2057 = vsel %vm2012, 0.0, %v2056
        %v2058 = vrot.slane %v2043, 4
        %v2059 = vsel %vm2012, 0.0, %v2058
        %v2060 = vrot.slane %v2051, 4
        %v2061 = vsel %vm2012, 0.0, %v2060
        %v2062 = vrot.slane %v2055, 4
        %v2063 = vsel %vm2012, 0.0, %v2062
        %v2064 = vrot.slane %v1997, 4
        %v2065 = vsel %vm2012, 0.0, %v2064
        %v2067 = vunpack.c.l.s4 1983009808
        %v2068 = vunpack.c.0.s8 %v2067
        %v2069 = vperm.slane %v1997, %v2068
        %v2071 = vunpack.c.l.s4 1983009808
        %v2072 = vunpack.c.0.s8 %v2071
        %v2073 = vperm.slane %v2065, %v2072
        %v2074 = vrot.slane %v2005, 4
        %v2075 = vsel %vm2012, 0.0, %v2074
        %v2077 = vunpack.c.l.s4 1983009808
        %v2078 = vunpack.c.0.s8 %v2077
        %v2079 = vperm.slane %v2005, %v2078
        %v2081 = vunpack.c.l.s4 1983009808
        %v2082 = vunpack.c.0.s8 %v2081
        %v2083 = vperm.slane %v2075, %v2082
        %v2084 = vrot.slane %v2079, 4
        %v2085 = vsel %vm2012, %v2084, %v2069
        %v2086 = vrot.slane %v2069, 4
        %v2087 = vsel %vm2012, %v2079, %v2086
        %v2089 = vunpack.c.l.s4 1934713408
        %v2090 = vunpack.c.0.s8 %v2089
        %v2091 = vperm.slane %v2085, %v2090
        %v2093 = vunpack.c.l.s4 1934713408
        %v2094 = vunpack.c.0.s8 %v2093
        %v2095 = vperm.slane %v2087, %v2094
        %v2096 = vrot.slane %v2083, 4
        %v2097 = vsel %vm2012, %v2096, %v2073
        %v2098 = vrot.slane %v2073, 4
        %v2099 = vsel %vm2012, %v2083, %v2098
        %v2101 = vunpack.c.l.s4 1934713408
        %v2102 = vunpack.c.0.s8 %v2101
        %v2103 = vperm.slane %v2097, %v2102
        %v2105 = vunpack.c.l.s4 1934713408
        %v2106 = vunpack.c.0.s8 %v2105
        %v2107 = vperm.slane %v2099, %v2106
        %v2108 = vrot.slane %v2091, 4
        %v2109 = vsel %vm2012, 0.0, %v2108
        %v2110 = vrot.slane %v2095, 4
        %v2111 = vsel %vm2012, 0.0, %v2110
        %v2112 = vrot.slane %v2103, 4
        %v2113 = vsel %vm2012, 0.0, %v2112
        %v2114 = vrot.slane %v2107, 4
        %v2115 = vsel %vm2012, 0.0, %v2114
        %v2116 = vrot.slane %v1998, 4
        %v2117 = vsel %vm2012, 0.0, %v2116
        %v2119 = vunpack.c.l.s4 1983009808
        %v2120 = vunpack.c.0.s8 %v2119
        %v2121 = vperm.slane %v1998, %v2120
        %v2123 = vunpack.c.l.s4 1983009808
        %v2124 = vunpack.c.0.s8 %v2123
        %v2125 = vperm.slane %v2117, %v2124
        %v2126 = vrot.slane %v2007, 4
        %v2127 = vsel %vm2012, 0.0, %v2126
        %v2129 = vunpack.c.l.s4 1983009808
        %v2130 = vunpack.c.0.s8 %v2129
        %v2131 = vperm.slane %v2007, %v2130
        %v2133 = vunpack.c.l.s4 1983009808
        %v2134 = vunpack.c.0.s8 %v2133
        %v2135 = vperm.slane %v2127, %v2134
        %v2136 = vrot.slane %v2131, 4
        %v2137 = vsel %vm2012, %v2136, %v2121
        %v2138 = vrot.slane %v2121, 4
        %v2139 = vsel %vm2012, %v2131, %v2138
        %v2141 = vunpack.c.l.s4 1934713408
        %v2142 = vunpack.c.0.s8 %v2141
        %v2143 = vperm.slane %v2137, %v2142
        %v2145 = vunpack.c.l.s4 1934713408
        %v2146 = vunpack.c.0.s8 %v2145
        %v2147 = vperm.slane %v2139, %v2146
        %v2148 = vrot.slane %v2135, 4
        %v2149 = vsel %vm2012, %v2148, %v2125
        %v2150 = vrot.slane %v2125, 4
        %v2151 = vsel %vm2012, %v2135, %v2150
        %v2153 = vunpack.c.l.s4 1934713408
        %v2154 = vunpack.c.0.s8 %v2153
        %v2155 = vperm.slane %v2149, %v2154
        %v2157 = vunpack.c.l.s4 1934713408
        %v2158 = vunpack.c.0.s8 %v2157
        %v2159 = vperm.slane %v2151, %v2158
        %v2160 = vrot.slane %v2143, 4
        %v2161 = vsel %vm2012, 0.0, %v2160
        %v2162 = vrot.slane %v2147, 4
        %v2163 = vsel %vm2012, 0.0, %v2162
        %v2164 = vrot.slane %v2155, 4
        %v2165 = vsel %vm2012, 0.0, %v2164
        %v2166 = vrot.slane %v2159, 4
        %v2167 = vsel %vm2012, 0.0, %v2166
        %v2168 = vsel %vm2012, %v2058, %v2039
        %v2170 = vunpack.c.l.s4 1983009808
        %v2171 = vunpack.c.0.s8 %v2170
        %v2172 = vperm.slane %v2168, %v2171
        %v2173 = vrot.slane %v2059, 4
        %v2174 = vsel %vm2012, %v2173, %v2057
        %v2176 = vunpack.c.l.s4 1983009808
        %v2177 = vunpack.c.0.s8 %v2176
        %v2178 = vperm.slane %v2174, %v2177
        %v2179 = vsel %vm2012, %v2062, %v2051
        %v2181 = vunpack.c.l.s4 1983009808
        %v2182 = vunpack.c.0.s8 %v2181
        %v2183 = vperm.slane %v2179, %v2182
        %v2184 = vrot.slane %v2063, 4
        %v2185 = vsel %vm2012, %v2184, %v2061
        %v2187 = vunpack.c.l.s4 1983009808
        %v2188 = vunpack.c.0.s8 %v2187
        %v2189 = vperm.slane %v2185, %v2188
        %v2190 = vrot.slane %v2178, 4
        %v2191 = vsel %vm2012, %v2190, %v2172
        %v2193 = vunpack.c.l.s4 1934713408
        %v2194 = vunpack.c.0.s8 %v2193
        %v2195 = vperm.slane %v2191, %v2194
        %v2196 = vrot.slane %v2189, 4
        %v2197 = vsel %vm2012, %v2196, %v2183
        %v2199 = vunpack.c.l.s4 1934713408
        %v2200 = vunpack.c.0.s8 %v2199
        %v2201 = vperm.slane %v2197, %v2200
        %v2202 = vrot.slane %v2201, 4
        %v2203 = vsel %vm2012, %v2202, %v2195
        %v2204 = vrot.slane %v2195, 4
        %v2205 = vsel %vm2012, %v2201, %v2204
        %v2206 = vsel %vm2012, %v2110, %v2091
        %v2208 = vunpack.c.l.s4 1983009808
        %v2209 = vunpack.c.0.s8 %v2208
        %v2210 = vperm.slane %v2206, %v2209
        %v2211 = vrot.slane %v2111, 4
        %v2212 = vsel %vm2012, %v2211, %v2109
        %v2214 = vunpack.c.l.s4 1983009808
        %v2215 = vunpack.c.0.s8 %v2214
        %v2216 = vperm.slane %v2212, %v2215
        %v2217 = vsel %vm2012, %v2114, %v2103
        %v2219 = vunpack.c.l.s4 1983009808
        %v2220 = vunpack.c.0.s8 %v2219
        %v2221 = vperm.slane %v2217, %v2220
        %v2222 = vrot.slane %v2115, 4
        %v2223 = vsel %vm2012, %v2222, %v2113
        %v2225 = vunpack.c.l.s4 1983009808
        %v2226 = vunpack.c.0.s8 %v2225
        %v2227 = vperm.slane %v2223, %v2226
        %v2228 = vrot.slane %v2216, 4
        %v2229 = vsel %vm2012, %v2228, %v2210
        %v2231 = vunpack.c.l.s4 1934713408
        %v2232 = vunpack.c.0.s8 %v2231
        %v2233 = vperm.slane %v2229, %v2232
        %v2234 = vrot.slane %v2227, 4
        %v2235 = vsel %vm2012, %v2234, %v2221
        %v2237 = vunpack.c.l.s4 1934713408
        %v2238 = vunpack.c.0.s8 %v2237
        %v2239 = vperm.slane %v2235, %v2238
        %v2240 = vrot.slane %v2239, 4
        %v2241 = vsel %vm2012, %v2240, %v2233
        %v2242 = vrot.slane %v2233, 4
        %v2243 = vsel %vm2012, %v2239, %v2242
        %v2244 = vsel %vm2012, %v2162, %v2143
        %v2246 = vunpack.c.l.s4 1983009808
        %v2247 = vunpack.c.0.s8 %v2246
        %v2248 = vperm.slane %v2244, %v2247
        %v2249 = vrot.slane %v2163, 4
        %v2250 = vsel %vm2012, %v2249, %v2161
        %v2252 = vunpack.c.l.s4 1983009808
        %v2253 = vunpack.c.0.s8 %v2252
        %v2254 = vperm.slane %v2250, %v2253
        %v2255 = vsel %vm2012, %v2166, %v2155
        %v2257 = vunpack.c.l.s4 1983009808
        %v2258 = vunpack.c.0.s8 %v2257
        %v2259 = vperm.slane %v2255, %v2258
        %v2260 = vrot.slane %v2167, 4
        %v2261 = vsel %vm2012, %v2260, %v2165
        %v2263 = vunpack.c.l.s4 1983009808
        %v2264 = vunpack.c.0.s8 %v2263
        %v2265 = vperm.slane %v2261, %v2264
        %v2266 = vrot.slane %v2254, 4
        %v2267 = vsel %vm2012, %v2266, %v2248
        %v2269 = vunpack.c.l.s4 1934713408
        %v2270 = vunpack.c.0.s8 %v2269
        %v2271 = vperm.slane %v2267, %v2270
        %v2272 = vrot.slane %v2265, 4
        %v2273 = vsel %vm2012, %v2272, %v2259
        %v2275 = vunpack.c.l.s4 1934713408
        %v2276 = vunpack.c.0.s8 %v2275
        %v2277 = vperm.slane %v2273, %v2276
        %v2278 = vrot.slane %v2277, 4
        %v2279 = vsel %vm2012, %v2278, %v2271
        %v2280 = vrot.slane %v2271, 4
        %v2281 = vsel %vm2012, %v2277, %v2280
        %v2282 = vpack.c.bf16 %v2203, %v2203
        %v2283 = vpack.c.bf16 %v2241, %v2241
        %v2284 = vpack.c.bf16 %v2279, %v2279
        %v2285 = vpack.c.bf16 %v2205, %v2205
        %v2286 = vpack.c.bf16 %v2243, %v2243
        %v2287 = vpack.c.bf16 %v2281, %v2281
        %2291 = vrot.lane.b32.xlu0 %v1716, 64
        %v2292 = vpop.permute.xlu0 %2291
        %2293 = vrot.lane.b32.xlu0 %v1978, 64
        %v2294 = vpop.permute.xlu0 %2293
        %2295 = vrot.lane.b32.xlu0 %v1980, 64
        %v2296 = vpop.permute.xlu0 %2295
        %v2300 = vrot.slane %v1716, 4
        %v2301 = vsel %vm2012, 0.0, %v2300
        %v2303 = vunpack.c.l.s4 1983009808
        %v2304 = vunpack.c.0.s8 %v2303
        %v2305 = vperm.slane %v1716, %v2304
        %v2307 = vunpack.c.l.s4 1983009808
        %v2308 = vunpack.c.0.s8 %v2307
        %v2309 = vperm.slane %v2301, %v2308
        %v2310 = vrot.slane %v2292, 4
        %v2311 = vsel %vm2012, 0.0, %v2310
        %v2313 = vunpack.c.l.s4 1983009808
        %v2314 = vunpack.c.0.s8 %v2313
        %v2315 = vperm.slane %v2292, %v2314
        %v2317 = vunpack.c.l.s4 1983009808
        %v2318 = vunpack.c.0.s8 %v2317
        %v2319 = vperm.slane %v2311, %v2318
        %v2320 = vrot.slane %v2315, 4
        %v2321 = vsel %vm2012, %v2320, %v2305
        %v2322 = vrot.slane %v2305, 4
        %v2323 = vsel %vm2012, %v2315, %v2322
        %v2325 = vunpack.c.l.s4 1934713408
        %v2326 = vunpack.c.0.s8 %v2325
        %v2327 = vperm.slane %v2321, %v2326
        %v2329 = vunpack.c.l.s4 1934713408
        %v2330 = vunpack.c.0.s8 %v2329
        %v2331 = vperm.slane %v2323, %v2330
        %v2332 = vrot.slane %v2319, 4
        %v2333 = vsel %vm2012, %v2332, %v2309
        %v2334 = vrot.slane %v2309, 4
        %v2335 = vsel %vm2012, %v2319, %v2334
        %v2337 = vunpack.c.l.s4 1934713408
        %v2338 = vunpack.c.0.s8 %v2337
        %v2339 = vperm.slane %v2333, %v2338
        %v2341 = vunpack.c.l.s4 1934713408
        %v2342 = vunpack.c.0.s8 %v2341
        %v2343 = vperm.slane %v2335, %v2342
        %v2344 = vrot.slane %v2327, 4
        %v2345 = vsel %vm2012, 0.0, %v2344
        %v2346 = vrot.slane %v2331, 4
        %v2347 = vsel %vm2012, 0.0, %v2346
        %v2348 = vrot.slane %v2339, 4
        %v2349 = vsel %vm2012, 0.0, %v2348
        %v2350 = vrot.slane %v2343, 4
        %v2351 = vsel %vm2012, 0.0, %v2350
        %v2352 = vrot.slane %v1978, 4
        %v2353 = vsel %vm2012, 0.0, %v2352
        %v2355 = vunpack.c.l.s4 1983009808
        %v2356 = vunpack.c.0.s8 %v2355
        %v2357 = vperm.slane %v1978, %v2356
        %v2359 = vunpack.c.l.s4 1983009808
        %v2360 = vunpack.c.0.s8 %v2359
        %v2361 = vperm.slane %v2353, %v2360
        %v2362 = vrot.slane %v2294, 4
        %v2363 = vsel %vm2012, 0.0, %v2362
        %v2365 = vunpack.c.l.s4 1983009808
        %v2366 = vunpack.c.0.s8 %v2365
        %v2367 = vperm.slane %v2294, %v2366
        %v2369 = vunpack.c.l.s4 1983009808
        %v2370 = vunpack.c.0.s8 %v2369
        %v2371 = vperm.slane %v2363, %v2370
        %v2372 = vrot.slane %v2367, 4
        %v2373 = vsel %vm2012, %v2372, %v2357
        %v2374 = vrot.slane %v2357, 4
        %v2375 = vsel %vm2012, %v2367, %v2374
        %v2377 = vunpack.c.l.s4 1934713408
        %v2378 = vunpack.c.0.s8 %v2377
        %v2379 = vperm.slane %v2373, %v2378
        %v2381 = vunpack.c.l.s4 1934713408
        %v2382 = vunpack.c.0.s8 %v2381
        %v2383 = vperm.slane %v2375, %v2382
        %v2384 = vrot.slane %v2371, 4
        %v2385 = vsel %vm2012, %v2384, %v2361
        %v2386 = vrot.slane %v2361, 4
        %v2387 = vsel %vm2012, %v2371, %v2386
        %v2389 = vunpack.c.l.s4 1934713408
        %v2390 = vunpack.c.0.s8 %v2389
        %v2391 = vperm.slane %v2385, %v2390
        %v2393 = vunpack.c.l.s4 1934713408
        %v2394 = vunpack.c.0.s8 %v2393
        %v2395 = vperm.slane %v2387, %v2394
        %v2396 = vrot.slane %v2379, 4
        %v2397 = vsel %vm2012, 0.0, %v2396
        %v2398 = vrot.slane %v2383, 4
        %v2399 = vsel %vm2012, 0.0, %v2398
        %v2400 = vrot.slane %v2391, 4
        %v2401 = vsel %vm2012, 0.0, %v2400
        %v2402 = vrot.slane %v2395, 4
        %v2403 = vsel %vm2012, 0.0, %v2402
        %v2404 = vrot.slane %v1980, 4
        %v2405 = vsel %vm2012, 0.0, %v2404
        %v2407 = vunpack.c.l.s4 1983009808
        %v2408 = vunpack.c.0.s8 %v2407
        %v2409 = vperm.slane %v1980, %v2408
        %v2411 = vunpack.c.l.s4 1983009808
        %v2412 = vunpack.c.0.s8 %v2411
        %v2413 = vperm.slane %v2405, %v2412
        %v2414 = vrot.slane %v2296, 4
        %v2415 = vsel %vm2012, 0.0, %v2414
        %v2417 = vunpack.c.l.s4 1983009808
        %v2418 = vunpack.c.0.s8 %v2417
        %v2419 = vperm.slane %v2296, %v2418
        %v2421 = vunpack.c.l.s4 1983009808
        %v2422 = vunpack.c.0.s8 %v2421
        %v2423 = vperm.slane %v2415, %v2422
        %v2424 = vrot.slane %v2419, 4
        %v2425 = vsel %vm2012, %v2424, %v2409
        %v2426 = vrot.slane %v2409, 4
        %v2427 = vsel %vm2012, %v2419, %v2426
        %v2429 = vunpack.c.l.s4 1934713408
        %v2430 = vunpack.c.0.s8 %v2429
        %v2431 = vperm.slane %v2425, %v2430
        %v2433 = vunpack.c.l.s4 1934713408
        %v2434 = vunpack.c.0.s8 %v2433
        %v2435 = vperm.slane %v2427, %v2434
        %v2436 = vrot.slane %v2423, 4
        %v2437 = vsel %vm2012, %v2436, %v2413
        %v2438 = vrot.slane %v2413, 4
        %v2439 = vsel %vm2012, %v2423, %v2438
        %v2441 = vunpack.c.l.s4 1934713408
        %v2442 = vunpack.c.0.s8 %v2441
        %v2443 = vperm.slane %v2437, %v2442
        %v2445 = vunpack.c.l.s4 1934713408
        %v2446 = vunpack.c.0.s8 %v2445
        %v2447 = vperm.slane %v2439, %v2446
        %v2448 = vrot.slane %v2431, 4
        %v2449 = vsel %vm2012, 0.0, %v2448
        %v2450 = vrot.slane %v2435, 4
        %v2451 = vsel %vm2012, 0.0, %v2450
        %v2452 = vrot.slane %v2443, 4
        %v2453 = vsel %vm2012, 0.0, %v2452
        %v2454 = vrot.slane %v2447, 4
        %v2455 = vsel %vm2012, 0.0, %v2454
        %v2456 = vsel %vm2012, %v2346, %v2327
        %v2458 = vunpack.c.l.s4 1983009808
        %v2459 = vunpack.c.0.s8 %v2458
        %v2460 = vperm.slane %v2456, %v2459
        %v2461 = vrot.slane %v2347, 4
        %v2462 = vsel %vm2012, %v2461, %v2345
        %v2464 = vunpack.c.l.s4 1983009808
        %v2465 = vunpack.c.0.s8 %v2464
        %v2466 = vperm.slane %v2462, %v2465
        %v2467 = vsel %vm2012, %v2350, %v2339
        %v2469 = vunpack.c.l.s4 1983009808
        %v2470 = vunpack.c.0.s8 %v2469
        %v2471 = vperm.slane %v2467, %v2470
        %v2472 = vrot.slane %v2351, 4
        %v2473 = vsel %vm2012, %v2472, %v2349
        %v2475 = vunpack.c.l.s4 1983009808
        %v2476 = vunpack.c.0.s8 %v2475
        %v2477 = vperm.slane %v2473, %v2476
        %v2478 = vrot.slane %v2466, 4
        %v2479 = vsel %vm2012, %v2478, %v2460
        %v2481 = vunpack.c.l.s4 1934713408
        %v2482 = vunpack.c.0.s8 %v2481
        %v2483 = vperm.slane %v2479, %v2482
        %v2484 = vrot.slane %v2477, 4
        %v2485 = vsel %vm2012, %v2484, %v2471
        %v2487 = vunpack.c.l.s4 1934713408
        %v2488 = vunpack.c.0.s8 %v2487
        %v2489 = vperm.slane %v2485, %v2488
        %v2490 = vrot.slane %v2489, 4
        %v2491 = vsel %vm2012, %v2490, %v2483
        %v2492 = vrot.slane %v2483, 4
        %v2493 = vsel %vm2012, %v2489, %v2492
        %v2494 = vsel %vm2012, %v2398, %v2379
        %v2496 = vunpack.c.l.s4 1983009808
        %v2497 = vunpack.c.0.s8 %v2496
        %v2498 = vperm.slane %v2494, %v2497
        %v2499 = vrot.slane %v2399, 4
        %v2500 = vsel %vm2012, %v2499, %v2397
        %v2502 = vunpack.c.l.s4 1983009808
        %v2503 = vunpack.c.0.s8 %v2502
        %v2504 = vperm.slane %v2500, %v2503
        %v2505 = vsel %vm2012, %v2402, %v2391
        %v2507 = vunpack.c.l.s4 1983009808
        %v2508 = vunpack.c.0.s8 %v2507
        %v2509 = vperm.slane %v2505, %v2508
        %v2510 = vrot.slane %v2403, 4
        %v2511 = vsel %vm2012, %v2510, %v2401
        %v2513 = vunpack.c.l.s4 1983009808
        %v2514 = vunpack.c.0.s8 %v2513
        %v2515 = vperm.slane %v2511, %v2514
        %v2516 = vrot.slane %v2504, 4
        %v2517 = vsel %vm2012, %v2516, %v2498
        %v2519 = vunpack.c.l.s4 1934713408
        %v2520 = vunpack.c.0.s8 %v2519
        %v2521 = vperm.slane %v2517, %v2520
        %v2522 = vrot.slane %v2515, 4
        %v2523 = vsel %vm2012, %v2522, %v2509
        %v2525 = vunpack.c.l.s4 1934713408
        %v2526 = vunpack.c.0.s8 %v2525
        %v2527 = vperm.slane %v2523, %v2526
        %v2528 = vrot.slane %v2527, 4
        %v2529 = vsel %vm2012, %v2528, %v2521
        %v2530 = vrot.slane %v2521, 4
        %v2531 = vsel %vm2012, %v2527, %v2530
        %v2532 = vsel %vm2012, %v2450, %v2431
        %v2534 = vunpack.c.l.s4 1983009808
        %v2535 = vunpack.c.0.s8 %v2534
        %v2536 = vperm.slane %v2532, %v2535
        %v2537 = vrot.slane %v2451, 4
        %v2538 = vsel %vm2012, %v2537, %v2449
        %v2540 = vunpack.c.l.s4 1983009808
        %v2541 = vunpack.c.0.s8 %v2540
        %v2542 = vperm.slane %v2538, %v2541
        %v2543 = vsel %vm2012, %v2454, %v2443
        %v2545 = vunpack.c.l.s4 1983009808
        %v2546 = vunpack.c.0.s8 %v2545
        %v2547 = vperm.slane %v2543, %v2546
        %v2548 = vrot.slane %v2455, 4
        %v2549 = vsel %vm2012, %v2548, %v2453
        %v2551 = vunpack.c.l.s4 1983009808
        %v2552 = vunpack.c.0.s8 %v2551
        %v2553 = vperm.slane %v2549, %v2552
        %v2554 = vrot.slane %v2542, 4
        %v2555 = vsel %vm2012, %v2554, %v2536
        %v2557 = vunpack.c.l.s4 1934713408
        %v2558 = vunpack.c.0.s8 %v2557
        %v2559 = vperm.slane %v2555, %v2558
        %v2560 = vrot.slane %v2553, 4
        %v2561 = vsel %vm2012, %v2560, %v2547
        %v2563 = vunpack.c.l.s4 1934713408
        %v2564 = vunpack.c.0.s8 %v2563
        %v2565 = vperm.slane %v2561, %v2564
        %v2566 = vrot.slane %v2565, 4
        %v2567 = vsel %vm2012, %v2566, %v2559
        %v2568 = vrot.slane %v2559, 4
        %v2569 = vsel %vm2012, %v2565, %v2568
        %v2570 = vpack.c.bf16 %v2491, %v2491
        %v2571 = vpack.c.bf16 %v2529, %v2529
        %v2572 = vpack.c.bf16 %v2567, %v2567
        %v2573 = vpack.c.bf16 %v2493, %v2493
        %v2574 = vpack.c.bf16 %v2531, %v2531
        %v2575 = vpack.c.bf16 %v2569, %v2569
        %2579 = vrot.lane.b32.xlu0 %v1729, 64
        %v2580 = vpop.permute.xlu0 %2579
        %2581 = vrot.lane.b32.xlu0 %v1992, 64
        %v2582 = vpop.permute.xlu0 %2581
        %2583 = vrot.lane.b32.xlu0 %v1994, 64
        %v2584 = vpop.permute.xlu0 %2583
        %v2588 = vrot.slane %v1729, 4
        %v2589 = vsel %vm2012, 0.0, %v2588
        %v2591 = vunpack.c.l.s4 1983009808
        %v2592 = vunpack.c.0.s8 %v2591
        %v2593 = vperm.slane %v1729, %v2592
        %v2595 = vunpack.c.l.s4 1983009808
        %v2596 = vunpack.c.0.s8 %v2595
        %v2597 = vperm.slane %v2589, %v2596
        %v2598 = vrot.slane %v2580, 4
        %v2599 = vsel %vm2012, 0.0, %v2598
        %v2601 = vunpack.c.l.s4 1983009808
        %v2602 = vunpack.c.0.s8 %v2601
        %v2603 = vperm.slane %v2580, %v2602
        %v2605 = vunpack.c.l.s4 1983009808
        %v2606 = vunpack.c.0.s8 %v2605
        %v2607 = vperm.slane %v2599, %v2606
        %v2608 = vrot.slane %v2603, 4
        %v2609 = vsel %vm2012, %v2608, %v2593
        %v2610 = vrot.slane %v2593, 4
        %v2611 = vsel %vm2012, %v2603, %v2610
        %v2613 = vunpack.c.l.s4 1934713408
        %v2614 = vunpack.c.0.s8 %v2613
        %v2615 = vperm.slane %v2609, %v2614
        %v2617 = vunpack.c.l.s4 1934713408
        %v2618 = vunpack.c.0.s8 %v2617
        %v2619 = vperm.slane %v2611, %v2618
        %v2620 = vrot.slane %v2607, 4
        %v2621 = vsel %vm2012, %v2620, %v2597
        %v2622 = vrot.slane %v2597, 4
        %v2623 = vsel %vm2012, %v2607, %v2622
        %v2625 = vunpack.c.l.s4 1934713408
        %v2626 = vunpack.c.0.s8 %v2625
        %v2627 = vperm.slane %v2621, %v2626
        %v2629 = vunpack.c.l.s4 1934713408
        %v2630 = vunpack.c.0.s8 %v2629
        %v2631 = vperm.slane %v2623, %v2630
        %v2632 = vrot.slane %v2615, 4
        %v2633 = vsel %vm2012, 0.0, %v2632
        %v2634 = vrot.slane %v2619, 4
        %v2635 = vsel %vm2012, 0.0, %v2634
        %v2636 = vrot.slane %v2627, 4
        %v2637 = vsel %vm2012, 0.0, %v2636
        %v2638 = vrot.slane %v2631, 4
        %v2639 = vsel %vm2012, 0.0, %v2638
        %v2640 = vrot.slane %v1992, 4
        %v2641 = vsel %vm2012, 0.0, %v2640
        %v2643 = vunpack.c.l.s4 1983009808
        %v2644 = vunpack.c.0.s8 %v2643
        %v2645 = vperm.slane %v1992, %v2644
        %v2647 = vunpack.c.l.s4 1983009808
        %v2648 = vunpack.c.0.s8 %v2647
        %v2649 = vperm.slane %v2641, %v2648
        %v2650 = vrot.slane %v2582, 4
        %v2651 = vsel %vm2012, 0.0, %v2650
        %v2653 = vunpack.c.l.s4 1983009808
        %v2654 = vunpack.c.0.s8 %v2653
        %v2655 = vperm.slane %v2582, %v2654
        %v2657 = vunpack.c.l.s4 1983009808
        %v2658 = vunpack.c.0.s8 %v2657
        %v2659 = vperm.slane %v2651, %v2658
        %v2660 = vrot.slane %v2655, 4
        %v2661 = vsel %vm2012, %v2660, %v2645
        %v2662 = vrot.slane %v2645, 4
        %v2663 = vsel %vm2012, %v2655, %v2662
        %v2665 = vunpack.c.l.s4 1934713408
        %v2666 = vunpack.c.0.s8 %v2665
        %v2667 = vperm.slane %v2661, %v2666
        %v2669 = vunpack.c.l.s4 1934713408
        %v2670 = vunpack.c.0.s8 %v2669
        %v2671 = vperm.slane %v2663, %v2670
        %v2672 = vrot.slane %v2659, 4
        %v2673 = vsel %vm2012, %v2672, %v2649
        %v2674 = vrot.slane %v2649, 4
        %v2675 = vsel %vm2012, %v2659, %v2674
        %v2677 = vunpack.c.l.s4 1934713408
        %v2678 = vunpack.c.0.s8 %v2677
        %v2679 = vperm.slane %v2673, %v2678
        %v2681 = vunpack.c.l.s4 1934713408
        %v2682 = vunpack.c.0.s8 %v2681
        %v2683 = vperm.slane %v2675, %v2682
        %v2684 = vrot.slane %v2667, 4
        %v2685 = vsel %vm2012, 0.0, %v2684
        %v2686 = vrot.slane %v2671, 4
        %v2687 = vsel %vm2012, 0.0, %v2686
        %v2688 = vrot.slane %v2679, 4
        %v2689 = vsel %vm2012, 0.0, %v2688
        %v2690 = vrot.slane %v2683, 4
        %v2691 = vsel %vm2012, 0.0, %v2690
        %v2692 = vrot.slane %v1994, 4
        %v2693 = vsel %vm2012, 0.0, %v2692
        %v2695 = vunpack.c.l.s4 1983009808
        %v2696 = vunpack.c.0.s8 %v2695
        %v2697 = vperm.slane %v1994, %v2696
        %v2699 = vunpack.c.l.s4 1983009808
        %v2700 = vunpack.c.0.s8 %v2699
        %v2701 = vperm.slane %v2693, %v2700
        %v2702 = vrot.slane %v2584, 4
        %v2703 = vsel %vm2012, 0.0, %v2702
        %v2705 = vunpack.c.l.s4 1983009808
        %v2706 = vunpack.c.0.s8 %v2705
        %v2707 = vperm.slane %v2584, %v2706
        %v2709 = vunpack.c.l.s4 1983009808
        %v2710 = vunpack.c.0.s8 %v2709
        %v2711 = vperm.slane %v2703, %v2710
        %v2712 = vrot.slane %v2707, 4
        %v2713 = vsel %vm2012, %v2712, %v2697
        %v2714 = vrot.slane %v2697, 4
        %v2715 = vsel %vm2012, %v2707, %v2714
        %v2717 = vunpack.c.l.s4 1934713408
        %v2718 = vunpack.c.0.s8 %v2717
        %v2719 = vperm.slane %v2713, %v2718
        %v2721 = vunpack.c.l.s4 1934713408
        %v2722 = vunpack.c.0.s8 %v2721
        %v2723 = vperm.slane %v2715, %v2722
        %v2724 = vrot.slane %v2711, 4
        %v2725 = vsel %vm2012, %v2724, %v2701
        %v2726 = vrot.slane %v2701, 4
        %v2727 = vsel %vm2012, %v2711, %v2726
        %v2729 = vunpack.c.l.s4 1934713408
        %v2730 = vunpack.c.0.s8 %v2729
        %v2731 = vperm.slane %v2725, %v2730
        %v2733 = vunpack.c.l.s4 1934713408
        %v2734 = vunpack.c.0.s8 %v2733
        %v2735 = vperm.slane %v2727, %v2734
        %v2736 = vrot.slane %v2719, 4
        %v2737 = vsel %vm2012, 0.0, %v2736
        %v2738 = vrot.slane %v2723, 4
        %v2739 = vsel %vm2012, 0.0, %v2738
        %v2740 = vrot.slane %v2731, 4
        %v2741 = vsel %vm2012, 0.0, %v2740
        %v2742 = vrot.slane %v2735, 4
        %v2743 = vsel %vm2012, 0.0, %v2742
        %v2744 = vsel %vm2012, %v2634, %v2615
        %v2746 = vunpack.c.l.s4 1983009808
        %v2747 = vunpack.c.0.s8 %v2746
        %v2748 = vperm.slane %v2744, %v2747
        %v2749 = vrot.slane %v2635, 4
        %v2750 = vsel %vm2012, %v2749, %v2633
        %v2752 = vunpack.c.l.s4 1983009808
        %v2753 = vunpack.c.0.s8 %v2752
        %v2754 = vperm.slane %v2750, %v2753
        %v2755 = vsel %vm2012, %v2638, %v2627
        %v2757 = vunpack.c.l.s4 1983009808
        %v2758 = vunpack.c.0.s8 %v2757
        %v2759 = vperm.slane %v2755, %v2758
        %v2760 = vrot.slane %v2639, 4
        %v2761 = vsel %vm2012, %v2760, %v2637
        %v2763 = vunpack.c.l.s4 1983009808
        %v2764 = vunpack.c.0.s8 %v2763
        %v2765 = vperm.slane %v2761, %v2764
        %v2766 = vrot.slane %v2754, 4
        %v2767 = vsel %vm2012, %v2766, %v2748
        %v2769 = vunpack.c.l.s4 1934713408
        %v2770 = vunpack.c.0.s8 %v2769
        %v2771 = vperm.slane %v2767, %v2770
        %v2772 = vrot.slane %v2765, 4
        %v2773 = vsel %vm2012, %v2772, %v2759
        %v2775 = vunpack.c.l.s4 1934713408
        %v2776 = vunpack.c.0.s8 %v2775
        %v2777 = vperm.slane %v2773, %v2776
        %v2778 = vrot.slane %v2777, 4
        %v2779 = vsel %vm2012, %v2778, %v2771
        %v2780 = vrot.slane %v2771, 4
        %v2781 = vsel %vm2012, %v2777, %v2780
        %v2782 = vsel %vm2012, %v2686, %v2667
        %v2784 = vunpack.c.l.s4 1983009808
        %v2785 = vunpack.c.0.s8 %v2784
        %v2786 = vperm.slane %v2782, %v2785
        %v2787 = vrot.slane %v2687, 4
        %v2788 = vsel %vm2012, %v2787, %v2685
        %v2790 = vunpack.c.l.s4 1983009808
        %v2791 = vunpack.c.0.s8 %v2790
        %v2792 = vperm.slane %v2788, %v2791
        %v2793 = vsel %vm2012, %v2690, %v2679
        %v2795 = vunpack.c.l.s4 1983009808
        %v2796 = vunpack.c.0.s8 %v2795
        %v2797 = vperm.slane %v2793, %v2796
        %v2798 = vrot.slane %v2691, 4
        %v2799 = vsel %vm2012, %v2798, %v2689
        %v2801 = vunpack.c.l.s4 1983009808
        %v2802 = vunpack.c.0.s8 %v2801
        %v2803 = vperm.slane %v2799, %v2802
        %v2804 = vrot.slane %v2792, 4
        %v2805 = vsel %vm2012, %v2804, %v2786
        %v2807 = vunpack.c.l.s4 1934713408
        %v2808 = vunpack.c.0.s8 %v2807
        %v2809 = vperm.slane %v2805, %v2808
        %v2810 = vrot.slane %v2803, 4
        %v2811 = vsel %vm2012, %v2810, %v2797
        %v2813 = vunpack.c.l.s4 1934713408
        %v2814 = vunpack.c.0.s8 %v2813
        %v2815 = vperm.slane %v2811, %v2814
        %v2816 = vrot.slane %v2815, 4
        %v2817 = vsel %vm2012, %v2816, %v2809
        %v2818 = vrot.slane %v2809, 4
        %v2819 = vsel %vm2012, %v2815, %v2818
        %v2820 = vsel %vm2012, %v2738, %v2719
        %v2822 = vunpack.c.l.s4 1983009808
        %v2823 = vunpack.c.0.s8 %v2822
        %v2824 = vperm.slane %v2820, %v2823
        %v2825 = vrot.slane %v2739, 4
        %v2826 = vsel %vm2012, %v2825, %v2737
        %v2828 = vunpack.c.l.s4 1983009808
        %v2829 = vunpack.c.0.s8 %v2828
        %v2830 = vperm.slane %v2826, %v2829
        %v2831 = vsel %vm2012, %v2742, %v2731
        %v2833 = vunpack.c.l.s4 1983009808
        %v2834 = vunpack.c.0.s8 %v2833
        %v2835 = vperm.slane %v2831, %v2834
        %v2836 = vrot.slane %v2743, 4
        %v2837 = vsel %vm2012, %v2836, %v2741
        %v2839 = vunpack.c.l.s4 1983009808
        %v2840 = vunpack.c.0.s8 %v2839
        %v2841 = vperm.slane %v2837, %v2840
        %v2842 = vrot.slane %v2830, 4
        %v2843 = vsel %vm2012, %v2842, %v2824
        %v2845 = vunpack.c.l.s4 1934713408
        %v2846 = vunpack.c.0.s8 %v2845
        %v2847 = vperm.slane %v2843, %v2846
        %v2848 = vrot.slane %v2841, 4
        %v2849 = vsel %vm2012, %v2848, %v2835
        %v2851 = vunpack.c.l.s4 1934713408
        %v2852 = vunpack.c.0.s8 %v2851
        %v2853 = vperm.slane %v2849, %v2852
        %v2854 = vrot.slane %v2853, 4
        %v2855 = vsel %vm2012, %v2854, %v2847
        %v2856 = vrot.slane %v2847, 4
        %v2857 = vsel %vm2012, %v2853, %v2856
        %v2858 = vpack.c.bf16 %v2779, %v2779
        %v2859 = vpack.c.bf16 %v2817, %v2817
        %v2860 = vpack.c.bf16 %v2855, %v2855
        %v2861 = vpack.c.bf16 %v2781, %v2781
        %v2862 = vpack.c.bf16 %v2819, %v2819
        %v2863 = vpack.c.bf16 %v2857, %v2857
        %v2867 = vunpack.c.l.b16 %v2282
        %v2868 = vunpack.c.l.b16 %v2283
        %v2869 = vunpack.c.l.b16 %v2284
        %v2870 = vpack.c.b16 %v2868, %v2867
        %v2871 = vpack.c.b16 %v2869, %v2869
        %v2875 = vunpack.c.l.b16 %v2570
        %v2876 = vunpack.c.l.b16 %v2571
        %v2877 = vunpack.c.l.b16 %v2572
        %v2878 = vpack.c.b16 %v2876, %v2875
        %v2879 = vpack.c.b16 %v2877, %v2877
        %vm2880 = vcmask 523264
        %v2882 = vsel %vm2880, %v2870, 0
        %v2885 = vsel %vm2880, %v2871, 0
        %v2888 = vsel %vm2880, %v2878, 0
        %v2891 = vsel %vm2880, %v2879, 0
        %2893 = vmatpush.bf16.xpose.msra.mxu0 0
        %2894 = vmatpush.bf16.xpose.msra.mxu0 0
        %2895 = vmatpush.bf16.xpose.msra.mxu0 0
        %2896 = vmatpush.bf16.xpose.msra.mxu0 0
        %2897 = vmatpush.bf16.xpose.msra.mxu0 0
        %2898 = vmatpush.bf16.xpose.msra.mxu0 0
        %2899 = vmatpush.bf16.xpose.msra.mxu0 %v2891
        %2900 = vmatpush.bf16.xpose.msra.mxu0 %v2888
        %2901 = vmatmul.bf16.gmra.mxu0 %v2882
        %v2902 = vpop.f32.mrf.mxu0
        %v2903 = vadd.f32 0.0, %v2902
        %v2904 = vpop.f32.mrf.mxu0
        %v2905 = vadd.f32 0.0, %v2904
        %2906 = vmatmul.bf16.gmra.mxu0 %v2885
        %v2907 = vpop.f32.mrf.mxu0
        %v2908 = vadd.f32 0.0, %v2907
        %v2909 = vpop.f32.mrf.mxu0
        %2910 = vdwg.mxu0
        %v2914 = vunpack.c.l.b16 %v2285
        %v2915 = vunpack.c.l.b16 %v2286
        %v2916 = vunpack.c.l.b16 %v2287
        %v2917 = vpack.c.b16 %v2915, %v2914
        %v2918 = vpack.c.b16 %v2916, %v2916
        %v2922 = vunpack.c.l.b16 %v2573
        %v2923 = vunpack.c.l.b16 %v2574
        %v2924 = vunpack.c.l.b16 %v2575
        %v2925 = vpack.c.b16 %v2923, %v2922
        %v2926 = vpack.c.b16 %v2924, %v2924
        %v2928 = vsel %vm2880, %v2917, 0
        %v2931 = vsel %vm2880, %v2918, 0
        %v2934 = vsel %vm2880, %v2925, 0
        %v2937 = vsel %vm2880, %v2926, 0
        %2939 = vmatpush.bf16.xpose.msra.mxu0 0
        %2940 = vmatpush.bf16.xpose.msra.mxu0 0
        %2941 = vmatpush.bf16.xpose.msra.mxu0 0
        %2942 = vmatpush.bf16.xpose.msra.mxu0 0
        %2943 = vmatpush.bf16.xpose.msra.mxu0 0
        %2944 = vmatpush.bf16.xpose.msra.mxu0 0
        %2945 = vmatpush.bf16.xpose.msra.mxu0 %v2937
        %2946 = vmatpush.bf16.xpose.msra.mxu0 %v2934
        %2947 = vmatmul.bf16.gmra.mxu0 %v2928
        %v2948 = vpop.f32.mrf.mxu0
        %v2949 = vadd.f32 0.0, %v2948
        %v2950 = vpop.f32.mrf.mxu0
        %v2951 = vadd.f32 0.0, %v2950
        %2952 = vmatmul.bf16.gmra.mxu0 %v2931
        %v2953 = vpop.f32.mrf.mxu0
        %v2954 = vadd.f32 0.0, %v2953
        %v2955 = vpop.f32.mrf.mxu0
        %2956 = vdwg.mxu0
        %vm2957 = vcmask 195584
        %v2958 = vsel %vm2957, %v2903, -inf
        %2959 = vmax.xlane.f32.xlu0 %v2958
        %v2960 = vpop.xlane.xlu0 %2959
        %v2961 = vsel %vm2957, %v2905, -inf
        %2962 = vmax.xlane.f32.xlu0 %v2961
        %v2963 = vpop.xlane.xlu0 %2962
        %v2964 = vsel %vm2957, %v2908, -inf
        %2965 = vmax.xlane.f32.xlu0 %v2964
        %v2966 = vpop.xlane.xlu0 %2965
        %v2967 = vsel %vm2957, %v2949, -inf
        %2968 = vmax.xlane.f32.xlu0 %v2967
        %v2969 = vpop.xlane.xlu0 %2968
        %v2970 = vsel %vm2957, %v2951, -inf
        %2971 = vmax.xlane.f32.xlu0 %v2970
        %v2972 = vpop.xlane.xlu0 %2971
        %v2973 = vsel %vm2957, %v2954, -inf
        %2974 = vmax.xlane.f32.xlu0 %v2973
        %v2975 = vpop.xlane.xlu0 %2974
        %v2976 = vsub.f32 %v2903, %v2960
        %v2977 = vsub.f32 %v2905, %v2963
        %v2978 = vsub.f32 %v2908, %v2966
        %v2979 = vsub.f32 %v2949, %v2969
        %v2980 = vsub.f32 %v2951, %v2972
        %v2981 = vsub.f32 %v2954, %v2975
        %v2982 = vmul.f32 %v2976, 1.442695
        %v2983 = vpow.pop %v2982
        %v2984 = vmul.f32 %v2977, 1.442695
        %v2985 = vpow.pop %v2984
        %v2986 = vmul.f32 %v2978, 1.442695
        %v2987 = vpow.pop %v2986
        %v2988 = vmul.f32 %v2979, 1.442695
        %v2989 = vpow.pop %v2988
        %v2990 = vmul.f32 %v2980, 1.442695
        %v2991 = vpow.pop %v2990
        %v2992 = vmul.f32 %v2981, 1.442695
        %v2993 = vpow.pop %v2992
        %v2994 = vsel %vm2957, %v2983, 0.0
        %2995 = vadd.xlane.f32.xlu0 %v2994
        %v2996 = vpop.xlane.xlu0 %2995
        %v2997 = vsel %vm2957, %v2985, 0.0
        %2998 = vadd.xlane.f32.xlu0 %v2997
        %v2999 = vpop.xlane.xlu0 %2998
        %v3000 = vsel %vm2957, %v2987, 0.0
        %3001 = vadd.xlane.f32.xlu0 %v3000
        %v3002 = vpop.xlane.xlu0 %3001
        %v3003 = vsel %vm2957, %v2989, 0.0
        %3004 = vadd.xlane.f32.xlu0 %v3003
        %v3005 = vpop.xlane.xlu0 %3004
        %v3006 = vsel %vm2957, %v2991, 0.0
        %3007 = vadd.xlane.f32.xlu0 %v3006
        %v3008 = vpop.xlane.xlu0 %3007
        %v3009 = vsel %vm2957, %v2993, 0.0
        %3010 = vadd.xlane.f32.xlu0 %v3009
        %v3011 = vpop.xlane.xlu0 %3010
        %v3012 = vrcp.pop %v2996
        %v3013 = vrcp.pop %v2999
        %v3014 = vrcp.pop %v3002
        %v3015 = vrcp.pop %v3005
        %v3016 = vrcp.pop %v3008
        %v3017 = vrcp.pop %v3011
        %v3018 = vmul.f32 %v2983, %v3012
        %v3019 = vmul.f32 %v2985, %v3013
        %v3020 = vmul.f32 %v2987, %v3014
        %v3021 = vmul.f32 %v2989, %v3015
        %v3022 = vmul.f32 %v2991, %v3016
        %v3023 = vmul.f32 %v2993, %v3017
        %v3024 = vpack.c.bf16 %v3018, %v3018
        %v3025 = vpack.c.bf16 %v3019, %v3019
        %v3026 = vpack.c.bf16 %v3020, %v3020
        %v3027 = vpack.c.bf16 %v3021, %v3021
        %v3028 = vpack.c.bf16 %v3022, %v3022
        %v3029 = vpack.c.bf16 %v3023, %v3023
        %v3033 = vunpack.c.l.b16 %v3024
        %v3034 = vunpack.c.l.b16 %v3025
        %v3035 = vunpack.c.l.b16 %v3026
        %v3036 = vpack.c.b16 %v3034, %v3033
        %v3037 = vpack.c.b16 %v3035, %v3035
        %v3041 = vunpack.c.l.b16 %v2858
        %v3042 = vunpack.c.l.b16 %v2859
        %v3043 = vunpack.c.l.b16 %v2860
        %v3044 = vpack.c.b16 %v3042, %v3041
        %v3045 = vpack.c.b16 %v3043, %v3043
        %v3048 = vsel %vm2957, %v3036, 0
        %v3051 = vsel %vm2957, %v3037, 0
        %vm3053 = vcmask 1043456
        %v3055 = vsel %vm3053, %v3045, 0
        %3057 = vmatpush.bf16.msra.mxu0 0
        %3058 = vmatpush.bf16.msra.mxu0 0
        %3059 = vmatpush.bf16.msra.mxu0 0
        %3060 = vmatpush.bf16.msra.mxu0 0
        %3061 = vmatpush.bf16.msra.mxu0 0
        %3062 = vmatpush.bf16.msra.mxu0 0
        %3063 = vmatpush.bf16.msra.mxu0 %v3055
        %3064 = vmatpush.bf16.msra.mxu0 %v3044
        %3065 = vmatmul.bf16.gmra.mxu0 %v3048
        %v3066 = vpop.f32.mrf.mxu0
        %v3067 = vadd.f32 0.0, %v3066
        %v3068 = vpop.f32.mrf.mxu0
        %v3069 = vadd.f32 0.0, %v3068
        %3070 = vmatmul.bf16.gmra.mxu0 %v3051
        %v3071 = vpop.f32.mrf.mxu0
        %v3072 = vadd.f32 0.0, %v3071
        %v3073 = vpop.f32.mrf.mxu0
        %3074 = vdwg.mxu0
        %v3078 = vunpack.c.l.b16 %v3027
        %v3079 = vunpack.c.l.b16 %v3028
        %v3080 = vunpack.c.l.b16 %v3029
        %v3081 = vpack.c.b16 %v3079, %v3078
        %v3082 = vpack.c.b16 %v3080, %v3080
        %v3086 = vunpack.c.l.b16 %v2861
        %v3087 = vunpack.c.l.b16 %v2862
        %v3088 = vunpack.c.l.b16 %v2863
        %v3089 = vpack.c.b16 %v3087, %v3086
        %v3090 = vpack.c.b16 %v3088, %v3088
        %v3093 = vsel %vm2957, %v3081, 0
        %v3096 = vsel %vm2957, %v3082, 0
        %v3099 = vsel %vm3053, %v3090, 0
        %3101 = vmatpush.bf16.msra.mxu0 0
        %3102 = vmatpush.bf16.msra.mxu0 0
        %3103 = vmatpush.bf16.msra.mxu0 0
        %3104 = vmatpush.bf16.msra.mxu0 0
        %3105 = vmatpush.bf16.msra.mxu0 0
        %3106 = vmatpush.bf16.msra.mxu0 0
        %3107 = vmatpush.bf16.msra.mxu0 %v3099
        %3108 = vmatpush.bf16.msra.mxu0 %v3089
        %3109 = vmatmul.bf16.gmra.mxu0 %v3093
        %v3110 = vpop.f32.mrf.mxu0
        %v3111 = vadd.f32 0.0, %v3110
        %v3112 = vpop.f32.mrf.mxu0
        %v3113 = vadd.f32 0.0, %v3112
        %3114 = vmatmul.bf16.gmra.mxu0 %v3096
        %v3115 = vpop.f32.mrf.mxu0
        %v3116 = vadd.f32 0.0, %v3115
        %v3117 = vpop.f32.mrf.mxu0
        %3118 = vdwg.mxu0
        %v3119 = vrot.slane %v3067, 4
        %v3120 = vsel %vm2012, 0.0, %v3119
        %v3122 = vunpack.c.l.s4 1983009808
        %v3123 = vunpack.c.0.s8 %v3122
        %v3124 = vperm.slane %v3067, %v3123
        %v3126 = vunpack.c.l.s4 1983009808
        %v3127 = vunpack.c.0.s8 %v3126
        %v3128 = vperm.slane %v3120, %v3127
        %v3129 = vrot.slane %v3111, 4
        %v3130 = vsel %vm2012, 0.0, %v3129
        %v3132 = vunpack.c.l.s4 1983009808
        %v3133 = vunpack.c.0.s8 %v3132
        %v3134 = vperm.slane %v3111, %v3133
        %v3136 = vunpack.c.l.s4 1983009808
        %v3137 = vunpack.c.0.s8 %v3136
        %v3138 = vperm.slane %v3130, %v3137
        %v3139 = vrot.slane %v3134, 4
        %v3140 = vsel %vm2012, %v3139, %v3124
        %v3141 = vrot.slane %v3124, 4
        %v3142 = vsel %vm2012, %v3134, %v3141
        %v3144 = vunpack.c.l.s4 1934713408
        %v3145 = vunpack.c.0.s8 %v3144
        %v3146 = vperm.slane %v3140, %v3145
        %v3148 = vunpack.c.l.s4 1934713408
        %v3149 = vunpack.c.0.s8 %v3148
        %v3150 = vperm.slane %v3142, %v3149
        %v3151 = vrot.slane %v3138, 4
        %v3152 = vsel %vm2012, %v3151, %v3128
        %v3153 = vrot.slane %v3128, 4
        %v3154 = vsel %vm2012, %v3138, %v3153
        %v3156 = vunpack.c.l.s4 1934713408
        %v3157 = vunpack.c.0.s8 %v3156
        %v3158 = vperm.slane %v3152, %v3157
        %v3160 = vunpack.c.l.s4 1934713408
        %v3161 = vunpack.c.0.s8 %v3160
        %v3162 = vperm.slane %v3154, %v3161
        %v3163 = vrot.slane %v3146, 4
        %v3164 = vsel %vm2012, 0.0, %v3163
        %v3165 = vrot.slane %v3150, 4
        %v3166 = vsel %vm2012, 0.0, %v3165
        %v3167 = vrot.slane %v3158, 4
        %v3168 = vsel %vm2012, 0.0, %v3167
        %v3169 = vrot.slane %v3162, 4
        %v3170 = vsel %vm2012, 0.0, %v3169
        %v3171 = vrot.slane %v3069, 4
        %v3172 = vsel %vm2012, 0.0, %v3171
        %v3174 = vunpack.c.l.s4 1983009808
        %v3175 = vunpack.c.0.s8 %v3174
        %v3176 = vperm.slane %v3069, %v3175
        %v3178 = vunpack.c.l.s4 1983009808
        %v3179 = vunpack.c.0.s8 %v3178
        %v3180 = vperm.slane %v3172, %v3179
        %v3181 = vrot.slane %v3113, 4
        %v3182 = vsel %vm2012, 0.0, %v3181
        %v3184 = vunpack.c.l.s4 1983009808
        %v3185 = vunpack.c.0.s8 %v3184
        %v3186 = vperm.slane %v3113, %v3185
        %v3188 = vunpack.c.l.s4 1983009808
        %v3189 = vunpack.c.0.s8 %v3188
        %v3190 = vperm.slane %v3182, %v3189
        %v3191 = vrot.slane %v3186, 4
        %v3192 = vsel %vm2012, %v3191, %v3176
        %v3193 = vrot.slane %v3176, 4
        %v3194 = vsel %vm2012, %v3186, %v3193
        %v3196 = vunpack.c.l.s4 1934713408
        %v3197 = vunpack.c.0.s8 %v3196
        %v3198 = vperm.slane %v3192, %v3197
        %v3200 = vunpack.c.l.s4 1934713408
        %v3201 = vunpack.c.0.s8 %v3200
        %v3202 = vperm.slane %v3194, %v3201
        %v3203 = vrot.slane %v3190, 4
        %v3204 = vsel %vm2012, %v3203, %v3180
        %v3205 = vrot.slane %v3180, 4
        %v3206 = vsel %vm2012, %v3190, %v3205
        %v3208 = vunpack.c.l.s4 1934713408
        %v3209 = vunpack.c.0.s8 %v3208
        %v3210 = vperm.slane %v3204, %v3209
        %v3212 = vunpack.c.l.s4 1934713408
        %v3213 = vunpack.c.0.s8 %v3212
        %v3214 = vperm.slane %v3206, %v3213
        %v3215 = vrot.slane %v3198, 4
        %v3216 = vsel %vm2012, 0.0, %v3215
        %v3217 = vrot.slane %v3202, 4
        %v3218 = vsel %vm2012, 0.0, %v3217
        %v3219 = vrot.slane %v3210, 4
        %v3220 = vsel %vm2012, 0.0, %v3219
        %v3221 = vrot.slane %v3214, 4
        %v3222 = vsel %vm2012, 0.0, %v3221
        %v3223 = vrot.slane %v3072, 4
        %v3224 = vsel %vm2012, 0.0, %v3223
        %v3226 = vunpack.c.l.s4 1983009808
        %v3227 = vunpack.c.0.s8 %v3226
        %v3228 = vperm.slane %v3072, %v3227
        %v3230 = vunpack.c.l.s4 1983009808
        %v3231 = vunpack.c.0.s8 %v3230
        %v3232 = vperm.slane %v3224, %v3231
        %v3233 = vrot.slane %v3116, 4
        %v3234 = vsel %vm2012, 0.0, %v3233
        %v3236 = vunpack.c.l.s4 1983009808
        %v3237 = vunpack.c.0.s8 %v3236
        %v3238 = vperm.slane %v3116, %v3237
        %v3240 = vunpack.c.l.s4 1983009808
        %v3241 = vunpack.c.0.s8 %v3240
        %v3242 = vperm.slane %v3234, %v3241
        %v3243 = vrot.slane %v3238, 4
        %v3244 = vsel %vm2012, %v3243, %v3228
        %v3245 = vrot.slane %v3228, 4
        %v3246 = vsel %vm2012, %v3238, %v3245
        %v3248 = vunpack.c.l.s4 1934713408
        %v3249 = vunpack.c.0.s8 %v3248
        %v3250 = vperm.slane %v3244, %v3249
        %v3252 = vunpack.c.l.s4 1934713408
        %v3253 = vunpack.c.0.s8 %v3252
        %v3254 = vperm.slane %v3246, %v3253
        %v3255 = vrot.slane %v3242, 4
        %v3256 = vsel %vm2012, %v3255, %v3232
        %v3257 = vrot.slane %v3232, 4
        %v3258 = vsel %vm2012, %v3242, %v3257
        %v3260 = vunpack.c.l.s4 1934713408
        %v3261 = vunpack.c.0.s8 %v3260
        %v3262 = vperm.slane %v3256, %v3261
        %v3264 = vunpack.c.l.s4 1934713408
        %v3265 = vunpack.c.0.s8 %v3264
        %v3266 = vperm.slane %v3258, %v3265
        %v3267 = vrot.slane %v3250, 4
        %v3268 = vsel %vm2012, 0.0, %v3267
        %v3269 = vrot.slane %v3254, 4
        %v3270 = vsel %vm2012, 0.0, %v3269
        %v3271 = vrot.slane %v3262, 4
        %v3272 = vsel %vm2012, 0.0, %v3271
        %v3273 = vrot.slane %v3266, 4
        %v3274 = vsel %vm2012, 0.0, %v3273
        %v3275 = vsel %vm2012, %v3165, %v3146
        %v3277 = vunpack.c.l.s4 1983009808
        %v3278 = vunpack.c.0.s8 %v3277
        %v3279 = vperm.slane %v3275, %v3278
        %v3280 = vrot.slane %v3166, 4
        %v3281 = vsel %vm2012, %v3280, %v3164
        %v3283 = vunpack.c.l.s4 1983009808
        %v3284 = vunpack.c.0.s8 %v3283
        %v3285 = vperm.slane %v3281, %v3284
        %v3286 = vsel %vm2012, %v3169, %v3158
        %v3288 = vunpack.c.l.s4 1983009808
        %v3289 = vunpack.c.0.s8 %v3288
        %v3290 = vperm.slane %v3286, %v3289
        %v3291 = vrot.slane %v3170, 4
        %v3292 = vsel %vm2012, %v3291, %v3168
        %v3294 = vunpack.c.l.s4 1983009808
        %v3295 = vunpack.c.0.s8 %v3294
        %v3296 = vperm.slane %v3292, %v3295
        %v3297 = vrot.slane %v3285, 4
        %v3298 = vsel %vm2012, %v3297, %v3279
        %v3300 = vunpack.c.l.s4 1934713408
        %v3301 = vunpack.c.0.s8 %v3300
        %v3302 = vperm.slane %v3298, %v3301
        %v3303 = vrot.slane %v3296, 4
        %v3304 = vsel %vm2012, %v3303, %v3290
        %v3306 = vunpack.c.l.s4 1934713408
        %v3307 = vunpack.c.0.s8 %v3306
        %v3308 = vperm.slane %v3304, %v3307
        %v3309 = vrot.slane %v3308, 4
        %v3310 = vsel %vm2012, %v3309, %v3302
        %v3311 = vrot.slane %v3302, 4
        %v3312 = vsel %vm2012, %v3308, %v3311
        %v3313 = vsel %vm2012, %v3217, %v3198
        %v3315 = vunpack.c.l.s4 1983009808
        %v3316 = vunpack.c.0.s8 %v3315
        %v3317 = vperm.slane %v3313, %v3316
        %v3318 = vrot.slane %v3218, 4
        %v3319 = vsel %vm2012, %v3318, %v3216
        %v3321 = vunpack.c.l.s4 1983009808
        %v3322 = vunpack.c.0.s8 %v3321
        %v3323 = vperm.slane %v3319, %v3322
        %v3324 = vsel %vm2012, %v3221, %v3210
        %v3326 = vunpack.c.l.s4 1983009808
        %v3327 = vunpack.c.0.s8 %v3326
        %v3328 = vperm.slane %v3324, %v3327
        %v3329 = vrot.slane %v3222, 4
        %v3330 = vsel %vm2012, %v3329, %v3220
        %v3332 = vunpack.c.l.s4 1983009808
        %v3333 = vunpack.c.0.s8 %v3332
        %v3334 = vperm.slane %v3330, %v3333
        %v3335 = vrot.slane %v3323, 4
        %v3336 = vsel %vm2012, %v3335, %v3317
        %v3338 = vunpack.c.l.s4 1934713408
        %v3339 = vunpack.c.0.s8 %v3338
        %v3340 = vperm.slane %v3336, %v3339
        %v3341 = vrot.slane %v3334, 4
        %v3342 = vsel %vm2012, %v3341, %v3328
        %v3344 = vunpack.c.l.s4 1934713408
        %v3345 = vunpack.c.0.s8 %v3344
        %v3346 = vperm.slane %v3342, %v3345
        %v3347 = vrot.slane %v3346, 4
        %v3348 = vsel %vm2012, %v3347, %v3340
        %v3349 = vrot.slane %v3340, 4
        %v3350 = vsel %vm2012, %v3346, %v3349
        %v3351 = vsel %vm2012, %v3269, %v3250
        %v3353 = vunpack.c.l.s4 1983009808
        %v3354 = vunpack.c.0.s8 %v3353
        %v3355 = vperm.slane %v3351, %v3354
        %v3356 = vrot.slane %v3270, 4
        %v3357 = vsel %vm2012, %v3356, %v3268
        %v3359 = vunpack.c.l.s4 1983009808
        %v3360 = vunpack.c.0.s8 %v3359
        %v3361 = vperm.slane %v3357, %v3360
        %v3362 = vsel %vm2012, %v3273, %v3262
        %v3364 = vunpack.c.l.s4 1983009808
        %v3365 = vunpack.c.0.s8 %v3364
        %v3366 = vperm.slane %v3362, %v3365
        %v3367 = vrot.slane %v3274, 4
        %v3368 = vsel %vm2012, %v3367, %v3272
        %v3370 = vunpack.c.l.s4 1983009808
        %v3371 = vunpack.c.0.s8 %v3370
        %v3372 = vperm.slane %v3368, %v3371
        %v3373 = vrot.slane %v3361, 4
        %v3374 = vsel %vm2012, %v3373, %v3355
        %v3376 = vunpack.c.l.s4 1934713408
        %v3377 = vunpack.c.0.s8 %v3376
        %v3378 = vperm.slane %v3374, %v3377
        %v3379 = vrot.slane %v3372, 4
        %v3380 = vsel %vm2012, %v3379, %v3366
        %v3382 = vunpack.c.l.s4 1934713408
        %v3383 = vunpack.c.0.s8 %v3382
        %v3384 = vperm.slane %v3380, %v3383
        %v3385 = vrot.slane %v3384, 4
        %v3386 = vsel %vm2012, %v3385, %v3378
        %v3387 = vrot.slane %v3378, 4
        %v3388 = vsel %vm2012, %v3384, %v3387
        %3392 = vrot.lane.b32.xlu0 %v3312, 64
        %v3393 = vpop.permute.xlu0 %3392
        %3394 = vrot.lane.b32.xlu0 %v3350, 64
        %v3395 = vpop.permute.xlu0 %3394
        %3396 = vrot.lane.b32.xlu0 %v3388, 64
        %v3397 = vpop.permute.xlu0 %3396
        %v3401 = vsel %vm2880, %v3310, %v3393
        %v3402 = vsel %vm2880, %v3348, %v3395
        %v3403 = vsel %vm2880, %v3386, %v3397
        %v3404 = vpack.c.bf16 %v3401, %v3401
        %v3405 = vld [vmem:[#allocation14] sm:$0xf]
        %v3406 = vld [vmem:[#allocation14 + $0x4] sm:$0xf]
        %v3407 = vld [vmem:[#allocation14 + $0x8] sm:$0xf]
        %v3408 = vld [vmem:[#allocation14 + $0xc] sm:$0xf]
        %v3409 = vld [vmem:[#allocation14 + $0x10] sm:$0xf]
        %v3410 = vld [vmem:[#allocation14 + $0x14] sm:$0xf]
        %v3411 = vld [vmem:[#allocation14 + $0x18] sm:$0xf]
        %v3412 = vld [vmem:[#allocation14 + $0x1c] sm:$0xf]
        %v3413 = vld [vmem:[#allocation14 + $0x20] sm:$0xf]
        %v3414 = vld [vmem:[#allocation14 + $0x24] sm:$0xf]
        %v3415 = vld [vmem:[#allocation14 + $0x28] sm:$0xf]
        %v3416 = vld [vmem:[#allocation14 + $0x2c] sm:$0xf]
        %v3417 = vld [vmem:[#allocation14 + $0x30] sm:$0xf]
        %v3418 = vld [vmem:[#allocation14 + $0x34] sm:$0xf]
        %v3419 = vld [vmem:[#allocation14 + $0x38] sm:$0xf]
        %v3420 = vld [vmem:[#allocation14 + $0x3c] sm:$0xf]
        %v3421 = vld [vmem:[#allocation16] sm:$0x1]
        %v3423 = vperm.slane %v3421, 0
        %v3441 = vunpack.c.l.b16 %v3405
        %v3442 = vunpack.c.l.b16 %v3406
        %v3443 = vunpack.c.l.b16 %v3407
        %v3444 = vunpack.c.l.b16 %v3408
        %v3445 = vunpack.c.l.b16 %v3409
        %v3446 = vunpack.c.l.b16 %v3410
        %v3447 = vunpack.c.l.b16 %v3411
        %v3448 = vunpack.c.l.b16 %v3412
        %v3449 = vunpack.c.l.b16 %v3413
        %v3450 = vunpack.c.l.b16 %v3414
        %v3451 = vunpack.c.l.b16 %v3415
        %v3452 = vunpack.c.l.b16 %v3416
        %v3453 = vunpack.c.l.b16 %v3417
        %v3454 = vunpack.c.l.b16 %v3418
        %v3455 = vunpack.c.l.b16 %v3419
        %v3456 = vunpack.c.l.b16 %v3420
        %v3457 = vpack.c.b16 %v3442, %v3441
        %v3458 = vpack.c.b16 %v3444, %v3443
        %v3459 = vpack.c.b16 %v3446, %v3445
        %v3460 = vpack.c.b16 %v3448, %v3447
        %v3461 = vpack.c.b16 %v3450, %v3449
        %v3462 = vpack.c.b16 %v3452, %v3451
        %v3463 = vpack.c.b16 %v3454, %v3453
        %v3464 = vpack.c.b16 %v3456, %v3455
        %3473 = vmatpush.bf16.msra.mxu0 %v3464
        %3474 = vmatpush.bf16.msra.mxu0 %v3463
        %3475 = vmatpush.bf16.msra.mxu0 %v3462
        %3476 = vmatpush.bf16.msra.mxu0 %v3461
        %3477 = vmatpush.bf16.msra.mxu0 %v3460
        %3478 = vmatpush.bf16.msra.mxu0 %v3459
        %3479 = vmatpush.bf16.msra.mxu0 %v3458
        %3480 = vmatpush.bf16.msra.mxu0 %v3457
        %3481 = vmatmul.bf16.gmra.mxu0 %v3404
        %v3482 = vpop.f32.mrf.mxu0
        %v3483 = vadd.f32 %v3423, %v3482
        %v3484 = vpop.f32.mrf.mxu0
        %3485 = vdwg.mxu0
        %v3486 = vperm.slane %v1066, 0
        %v3487 = vmul.f32 %v3486, %v3483
        %v3488 = vadd.f32 %v703, %v3487
        %3489 = vadd.xlane.f32.xlu0 %v3488
        %v3490 = vpop.xlane.xlu0 %3489
        %v3491 = vmul.f32 %v3490, %v1498
        %v3492 = vmul.f32 %v3488, %v3488
        %3493 = vadd.xlane.f32.xlu0 %v3492
        %v3494 = vpop.xlane.xlu0 %3493
        %v3495 = vmul.f32 %v3494, %v1498
        %v3496 = vmul.f32 %v3491, %v3491
        %v3497 = vsub.f32 %v3495, %v3496
        %v3498 = vsub.f32 %v3488, %v3491
        %v3499 = vadd.f32 %v3497, 1e-06
        %v3500 = vrsqrt.pop %v3499
        %v3501 = vmul.f32 %v3500, %v3499
        %v3502 = vmul.f32 %v3501, %v3500
        %v3503 = vmul.f32 0.5, %v3502
        %v3504 = vsub.f32 1.5, %v3503
        %v3505 = vmul.f32 %v3500, %v3504
        %vm3506 = vweird.f32 %v3499
        %vm3507 = vweird.f32 %v3500
        %vm3508 = vmor %vm3506, %vm3507
        %v3509 = vsel %vm3508, %v3500, %v3505
        %v3510 = vmul.f32 %v3498, %v3509
        %v3511 = vadd.f32 %v1092, 1.0
        %v3512 = vperm.slane %v3511, 0
        %v3513 = vmul.f32 %v3510, %v3512
        %v3514 = vperm.slane %v1079, 0
        %v3515 = vadd.f32 %v3513, %v3514
        %v3516 = vpack.c.bf16 %v3515, %v3515
        %v3517 = vld [vmem:[#allocation17] sm:$0xff]
        %v3518 = vld [vmem:[#allocation17 + $0x8] sm:$0xff]
        %v3519 = vld [vmem:[#allocation17 + $0x10] sm:$0xff]
        %v3520 = vld [vmem:[#allocation17 + $0x18] sm:$0xff]
        %v3521 = vld [vmem:[#allocation17 + $0x20] sm:$0xff]
        %v3522 = vld [vmem:[#allocation17 + $0x28] sm:$0xff]
        %v3523 = vld [vmem:[#allocation17 + $0x30] sm:$0xff]
        %v3524 = vld [vmem:[#allocation17 + $0x38] sm:$0xff]
        %v3525 = vld [vmem:[#allocation17 + $0x40] sm:$0xff]
        %v3526 = vld [vmem:[#allocation17 + $0x48] sm:$0xff]
        %v3527 = vld [vmem:[#allocation17 + $0x50] sm:$0xff]
        %v3528 = vld [vmem:[#allocation17 + $0x58] sm:$0xff]
        %v3529 = vld [vmem:[#allocation17 + $0x60] sm:$0xff]
        %v3530 = vld [vmem:[#allocation17 + $0x68] sm:$0xff]
        %v3531 = vld [vmem:[#allocation17 + $0x70] sm:$0xff]
        %v3532 = vld [vmem:[#allocation17 + $0x78] sm:$0xff]
        %v3533 = vld [vmem:[#allocation17 + $0x80] sm:$0xff]
        %v3534 = vld [vmem:[#allocation17 + $0x88] sm:$0xff]
        %v3535 = vld [vmem:[#allocation17 + $0x90] sm:$0xff]
        %v3536 = vld [vmem:[#allocation17 + $0x98] sm:$0xff]
        %v3537 = vld [vmem:[#allocation17 + $0xa0] sm:$0xff]
        %v3538 = vld [vmem:[#allocation17 + $0xa8] sm:$0xff]
        %v3539 = vld [vmem:[#allocation17 + $0xb0] sm:$0xff]
        %v3540 = vld [vmem:[#allocation17 + $0xb8] sm:$0xff]
        %v3541 = vld [vmem:[#allocation17 + $0xc0] sm:$0xff]
        %v3542 = vld [vmem:[#allocation17 + $0xc8] sm:$0xff]
        %v3543 = vld [vmem:[#allocation17 + $0xd0] sm:$0xff]
        %v3544 = vld [vmem:[#allocation17 + $0xd8] sm:$0xff]
        %v3545 = vld [vmem:[#allocation17 + $0xe0] sm:$0xff]
        %v3546 = vld [vmem:[#allocation17 + $0xe8] sm:$0xff]
        %v3547 = vld [vmem:[#allocation17 + $0xf0] sm:$0xff]
        %v3548 = vld [vmem:[#allocation17 + $0xf8] sm:$0xff]
        %v3549 = vld [vmem:[%s10] sm:$0xf]
        %v3551 = vperm.slane %v3549, 0
        %v3552 = vperm.slane %v3549, 1
        %v3553 = vperm.slane %v3549, 2
        %v3554 = vperm.slane %v3549, 3
        %v3591 = vunpack.c.l.b16 %v3517
        %v3592 = vunpack.c.h.b16 %v3517
        %v3593 = vunpack.c.l.b16 %v3518
        %v3594 = vunpack.c.h.b16 %v3518
        %v3595 = vunpack.c.l.b16 %v3519
        %v3596 = vunpack.c.h.b16 %v3519
        %v3597 = vunpack.c.l.b16 %v3520
        %v3598 = vunpack.c.h.b16 %v3520
        %v3599 = vunpack.c.l.b16 %v3521
        %v3600 = vunpack.c.h.b16 %v3521
        %v3601 = vunpack.c.l.b16 %v3522
        %v3602 = vunpack.c.h.b16 %v3522
        %v3603 = vunpack.c.l.b16 %v3523
        %v3604 = vunpack.c.h.b16 %v3523
        %v3605 = vunpack.c.l.b16 %v3524
        %v3606 = vunpack.c.h.b16 %v3524
        %v3607 = vunpack.c.l.b16 %v3525
        %v3608 = vunpack.c.h.b16 %v3525
        %v3609 = vunpack.c.l.b16 %v3526
        %v3610 = vunpack.c.h.b16 %v3526
        %v3611 = vunpack.c.l.b16 %v3527
        %v3612 = vunpack.c.h.b16 %v3527
        %v3613 = vunpack.c.l.b16 %v3528
        %v3614 = vunpack.c.h.b16 %v3528
        %v3615 = vunpack.c.l.b16 %v3529
        %v3616 = vunpack.c.h.b16 %v3529
        %v3617 = vunpack.c.l.b16 %v3530
        %v3618 = vunpack.c.h.b16 %v3530
        %v3619 = vunpack.c.l.b16 %v3531
        %v3620 = vunpack.c.h.b16 %v3531
        %v3621 = vunpack.c.l.b16 %v3532
        %v3622 = vunpack.c.h.b16 %v3532
        %v3623 = vunpack.c.l.b16 %v3533
        %v3624 = vunpack.c.h.b16 %v3533
        %v3625 = vunpack.c.l.b16 %v3534
        %v3626 = vunpack.c.h.b16 %v3534
        %v3627 = vunpack.c.l.b16 %v3535
        %v3628 = vunpack.c.h.b16 %v3535
        %v3629 = vunpack.c.l.b16 %v3536
        %v3630 = vunpack.c.h.b16 %v3536
        %v3631 = vunpack.c.l.b16 %v3537
        %v3632 = vunpack.c.h.b16 %v3537
        %v3633 = vunpack.c.l.b16 %v3538
        %v3634 = vunpack.c.h.b16 %v3538
        %v3635 = vunpack.c.l.b16 %v3539
        %v3636 = vunpack.c.h.b16 %v3539
        %v3637 = vunpack.c.l.b16 %v3540
        %v3638 = vunpack.c.h.b16 %v3540
        %v3639 = vunpack.c.l.b16 %v3541
        %v3640 = vunpack.c.h.b16 %v3541
        %v3641 = vunpack.c.l.b16 %v3542
        %v3642 = vunpack.c.h.b16 %v3542
        %v3643 = vunpack.c.l.b16 %v3543
        %v3644 = vunpack.c.h.b16 %v3543
        %v3645 = vunpack.c.l.b16 %v3544
        %v3646 = vunpack.c.h.b16 %v3544
        %v3647 = vunpack.c.l.b16 %v3545
        %v3648 = vunpack.c.h.b16 %v3545
        %v3649 = vunpack.c.l.b16 %v3546
        %v3650 = vunpack.c.h.b16 %v3546
        %v3651 = vunpack.c.l.b16 %v3547
        %v3652 = vunpack.c.h.b16 %v3547
        %v3653 = vunpack.c.l.b16 %v3548
        %v3654 = vunpack.c.h.b16 %v3548
        %v3655 = vpack.c.b16 %v3595, %v3591
        %v3656 = vpack.c.b16 %v3596, %v3592
        %v3657 = vpack.c.b16 %v3597, %v3593
        %v3658 = vpack.c.b16 %v3598, %v3594
        %v3659 = vpack.c.b16 %v3603, %v3599
        %v3660 = vpack.c.b16 %v3604, %v3600
        %v3661 = vpack.c.b16 %v3605, %v3601
        %v3662 = vpack.c.b16 %v3606, %v3602
        %v3663 = vpack.c.b16 %v3611, %v3607
        %v3664 = vpack.c.b16 %v3612, %v3608
        %v3665 = vpack.c.b16 %v3613, %v3609
        %v3666 = vpack.c.b16 %v3614, %v3610
        %v3667 = vpack.c.b16 %v3619, %v3615
        %v3668 = vpack.c.b16 %v3620, %v3616
        %v3669 = vpack.c.b16 %v3621, %v3617
        %v3670 = vpack.c.b16 %v3622, %v3618
        %v3671 = vpack.c.b16 %v3627, %v3623
        %v3672 = vpack.c.b16 %v3628, %v3624
        %v3673 = vpack.c.b16 %v3629, %v3625
        %v3674 = vpack.c.b16 %v3630, %v3626
        %v3675 = vpack.c.b16 %v3635, %v3631
        %v3676 = vpack.c.b16 %v3636, %v3632
        %v3677 = vpack.c.b16 %v3637, %v3633
        %v3678 = vpack.c.b16 %v3638, %v3634
        %v3679 = vpack.c.b16 %v3643, %v3639
        %v3680 = vpack.c.b16 %v3644, %v3640
        %v3681 = vpack.c.b16 %v3645, %v3641
        %v3682 = vpack.c.b16 %v3646, %v3642
        %v3683 = vpack.c.b16 %v3651, %v3647
        %v3684 = vpack.c.b16 %v3652, %v3648
        %v3685 = vpack.c.b16 %v3653, %v3649
        %v3686 = vpack.c.b16 %v3654, %v3650
        %3719 = vmatpush.bf16.msra.mxu0 %v3683
        %3720 = vmatpush.bf16.msra.mxu0 %v3679
        %3721 = vmatpush.bf16.msra.mxu0 %v3675
        %3722 = vmatpush.bf16.msra.mxu0 %v3671
        %3723 = vmatpush.bf16.msra.mxu0 %v3667
        %3724 = vmatpush.bf16.msra.mxu0 %v3663
        %3725 = vmatpush.bf16.msra.mxu0 %v3659
        %3726 = vmatpush.bf16.msra.mxu0 %v3655
        %3727 = vmatmul.bf16.gmra.mxu0 %v3516
        %v3728 = vpop.f32.mrf.mxu0
        %v3729 = vadd.f32 %v3551, %v3728
        %v3730 = vpop.f32.mrf.mxu0
        %3731 = vdwg.mxu0
        %3732 = vmatpush.bf16.msra.mxu0 %v3684
        %3733 = vmatpush.bf16.msra.mxu0 %v3680
        %3734 = vmatpush.bf16.msra.mxu0 %v3676
        %3735 = vmatpush.bf16.msra.mxu0 %v3672
        %3736 = vmatpush.bf16.msra.mxu0 %v3668
        %3737 = vmatpush.bf16.msra.mxu0 %v3664
        %3738 = vmatpush.bf16.msra.mxu0 %v3660
        %3739 = vmatpush.bf16.msra.mxu0 %v3656
        %3740 = vmatmul.bf16.gmra.mxu0 %v3516
        %v3741 = vpop.f32.mrf.mxu0
        %v3742 = vadd.f32 %v3552, %v3741
        %v3743 = vpop.f32.mrf.mxu0
        %3744 = vdwg.mxu0
        %3745 = vmatpush.bf16.msra.mxu0 %v3685
        %3746 = vmatpush.bf16.msra.mxu0 %v3681
        %3747 = vmatpush.bf16.msra.mxu0 %v3677
        %3748 = vmatpush.bf16.msra.mxu0 %v3673
        %3749 = vmatpush.bf16.msra.mxu0 %v3669
        %3750 = vmatpush.bf16.msra.mxu0 %v3665
        %3751 = vmatpush.bf16.msra.mxu0 %v3661
        %3752 = vmatpush.bf16.msra.mxu0 %v3657
        %3753 = vmatmul.bf16.gmra.mxu0 %v3516
        %v3754 = vpop.f32.mrf.mxu0
        %v3755 = vadd.f32 %v3553, %v3754
        %v3756 = vpop.f32.mrf.mxu0
        %3757 = vdwg.mxu0
        %3758 = vmatpush.bf16.msra.mxu0 %v3686
        %3759 = vmatpush.bf16.msra.mxu0 %v3682
        %3760 = vmatpush.bf16.msra.mxu0 %v3678
        %3761 = vmatpush.bf16.msra.mxu0 %v3674
        %3762 = vmatpush.bf16.msra.mxu0 %v3670
        %3763 = vmatpush.bf16.msra.mxu0 %v3666
        %3764 = vmatpush.bf16.msra.mxu0 %v3662
        %3765 = vmatpush.bf16.msra.mxu0 %v3658
        %3766 = vmatmul.bf16.gmra.mxu0 %v3516
        %v3767 = vpop.f32.mrf.mxu0
        %v3768 = vadd.f32 %v3554, %v3767
        %v3769 = vpop.f32.mrf.mxu0
        %3770 = vdwg.mxu0
        %v3771 = vmul.f32 %v3729, 0.5
        %v3772 = vmul.f32 %v3742, 0.5
        %v3773 = vmul.f32 %v3755, 0.5
        %v3774 = vmul.f32 %v3768, 0.5
        %v3775 = vmul.f32 %v3729, 0.044715
        %v3776 = vmul.f32 %v3742, 0.044715
        %v3777 = vmul.f32 %v3755, 0.044715
        %v3778 = vmul.f32 %v3768, 0.044715
        %v3779 = vmul.f32 %v3775, %v3729
        %v3780 = vmul.f32 %v3776, %v3742
        %v3781 = vmul.f32 %v3777, %v3755
        %v3782 = vmul.f32 %v3778, %v3768
        %v3783 = vmul.f32 %v3779, %v3729
        %v3784 = vmul.f32 %v3780, %v3742
        %v3785 = vmul.f32 %v3781, %v3755
        %v3786 = vmul.f32 %v3782, %v3768
        %v3787 = vadd.f32 %v3729, %v3783
        %v3788 = vadd.f32 %v3742, %v3784
        %v3789 = vadd.f32 %v3755, %v3785
        %v3790 = vadd.f32 %v3768, %v3786
        %v3791 = vmul.f32 %v3787, 0.7978846
        %v3792 = vmul.f32 %v3788, 0.7978846
        %v3793 = vmul.f32 %v3789, 0.7978846
        %v3794 = vmul.f32 %v3790, 0.7978846
        %v3795 = vtanh.pop %v3791
        %v3796 = vtanh.pop %v3792
        %v3797 = vtanh.pop %v3793
        %v3798 = vtanh.pop %v3794
        %v3799 = vadd.f32 %v3795, 1.0
        %v3800 = vadd.f32 %v3796, 1.0
        %v3801 = vadd.f32 %v3797, 1.0
        %v3802 = vadd.f32 %v3798, 1.0
        %v3803 = vmul.f32 %v3771, %v3799
        %v3804 = vmul.f32 %v3772, %v3800
        %v3805 = vmul.f32 %v3773, %v3801
        %v3806 = vmul.f32 %v3774, %v3802
        %v3807 = vpack.c.bf16 %v3803, %v3803
        %v3808 = vpack.c.bf16 %v3804, %v3804
        %v3809 = vpack.c.bf16 %v3805, %v3805
        %v3810 = vpack.c.bf16 %v3806, %v3806
        %v3811 = vld [vmem:[#allocation19] sm:$0xf]
        %v3812 = vld [vmem:[#allocation19 + $0x4] sm:$0xf]
        %v3813 = vld [vmem:[#allocation19 + $0x8] sm:$0xf]
        %v3814 = vld [vmem:[#allocation19 + $0xc] sm:$0xf]
        %v3815 = vld [vmem:[#allocation19 + $0x10] sm:$0xf]
        %v3816 = vld [vmem:[#allocation19 + $0x14] sm:$0xf]
        %v3817 = vld [vmem:[#allocation19 + $0x18] sm:$0xf]
        %v3818 = vld [vmem:[#allocation19 + $0x1c] sm:$0xf]
        %v3819 = vld [vmem:[#allocation19 + $0x20] sm:$0xf]
        %v3820 = vld [vmem:[#allocation19 + $0x24] sm:$0xf]
        %v3821 = vld [vmem:[#allocation19 + $0x28] sm:$0xf]
        %v3822 = vld [vmem:[#allocation19 + $0x2c] sm:$0xf]
        %v3823 = vld [vmem:[#allocation19 + $0x30] sm:$0xf]
        %v3824 = vld [vmem:[#allocation19 + $0x34] sm:$0xf]
        %v3825 = vld [vmem:[#allocation19 + $0x38] sm:$0xf]
        %v3826 = vld [vmem:[#allocation19 + $0x3c] sm:$0xf]
        %v3827 = vld [vmem:[#allocation19 + $0x40] sm:$0xf]
        %v3828 = vld [vmem:[#allocation19 + $0x44] sm:$0xf]
        %v3829 = vld [vmem:[#allocation19 + $0x48] sm:$0xf]
        %v3830 = vld [vmem:[#allocation19 + $0x4c] sm:$0xf]
        %v3831 = vld [vmem:[#allocation19 + $0x50] sm:$0xf]
        %v3832 = vld [vmem:[#allocation19 + $0x54] sm:$0xf]
        %v3833 = vld [vmem:[#allocation19 + $0x58] sm:$0xf]
        %v3834 = vld [vmem:[#allocation19 + $0x5c] sm:$0xf]
        %v3835 = vld [vmem:[#allocation19 + $0x60] sm:$0xf]
        %v3836 = vld [vmem:[#allocation19 + $0x64] sm:$0xf]
        %v3837 = vld [vmem:[#allocation19 + $0x68] sm:$0xf]
        %v3838 = vld [vmem:[#allocation19 + $0x6c] sm:$0xf]
        %v3839 = vld [vmem:[#allocation19 + $0x70] sm:$0xf]
        %v3840 = vld [vmem:[#allocation19 + $0x74] sm:$0xf]
        %v3841 = vld [vmem:[#allocation19 + $0x78] sm:$0xf]
        %v3842 = vld [vmem:[#allocation19 + $0x7c] sm:$0xf]
        %v3843 = vld [vmem:[#allocation19 + $0x80] sm:$0xf]
        %v3844 = vld [vmem:[#allocation19 + $0x84] sm:$0xf]
        %v3845 = vld [vmem:[#allocation19 + $0x88] sm:$0xf]
        %v3846 = vld [vmem:[#allocation19 + $0x8c] sm:$0xf]
        %v3847 = vld [vmem:[#allocation19 + $0x90] sm:$0xf]
        %v3848 = vld [vmem:[#allocation19 + $0x94] sm:$0xf]
        %v3849 = vld [vmem:[#allocation19 + $0x98] sm:$0xf]
        %v3850 = vld [vmem:[#allocation19 + $0x9c] sm:$0xf]
        %v3851 = vld [vmem:[#allocation19 + $0xa0] sm:$0xf]
        %v3852 = vld [vmem:[#allocation19 + $0xa4] sm:$0xf]
        %v3853 = vld [vmem:[#allocation19 + $0xa8] sm:$0xf]
        %v3854 = vld [vmem:[#allocation19 + $0xac] sm:$0xf]
        %v3855 = vld [vmem:[#allocation19 + $0xb0] sm:$0xf]
        %v3856 = vld [vmem:[#allocation19 + $0xb4] sm:$0xf]
        %v3857 = vld [vmem:[#allocation19 + $0xb8] sm:$0xf]
        %v3858 = vld [vmem:[#allocation19 + $0xbc] sm:$0xf]
        %v3859 = vld [vmem:[#allocation19 + $0xc0] sm:$0xf]
        %v3860 = vld [vmem:[#allocation19 + $0xc4] sm:$0xf]
        %v3861 = vld [vmem:[#allocation19 + $0xc8] sm:$0xf]
        %v3862 = vld [vmem:[#allocation19 + $0xcc] sm:$0xf]
        %v3863 = vld [vmem:[#allocation19 + $0xd0] sm:$0xf]
        %v3864 = vld [vmem:[#allocation19 + $0xd4] sm:$0xf]
        %v3865 = vld [vmem:[#allocation19 + $0xd8] sm:$0xf]
        %v3866 = vld [vmem:[#allocation19 + $0xdc] sm:$0xf]
        %v3867 = vld [vmem:[#allocation19 + $0xe0] sm:$0xf]
        %v3868 = vld [vmem:[#allocation19 + $0xe4] sm:$0xf]
        %v3869 = vld [vmem:[#allocation19 + $0xe8] sm:$0xf]
        %v3870 = vld [vmem:[#allocation19 + $0xec] sm:$0xf]
        %v3871 = vld [vmem:[#allocation19 + $0xf0] sm:$0xf]
        %v3872 = vld [vmem:[#allocation19 + $0xf4] sm:$0xf]
        %v3873 = vld [vmem:[#allocation19 + $0xf8] sm:$0xf]
        %v3874 = vld [vmem:[#allocation19 + $0xfc] sm:$0xf]
        %v3875 = vld [vmem:[%s12] sm:$0x1]
        %v3877 = vperm.slane %v3875, 0
        %v3943 = vunpack.c.l.b16 %v3811
        %v3944 = vunpack.c.l.b16 %v3812
        %v3945 = vunpack.c.l.b16 %v3813
        %v3946 = vunpack.c.l.b16 %v3814
        %v3947 = vunpack.c.l.b16 %v3815
        %v3948 = vunpack.c.l.b16 %v3816
        %v3949 = vunpack.c.l.b16 %v3817
        %v3950 = vunpack.c.l.b16 %v3818
        %v3951 = vunpack.c.l.b16 %v3819
        %v3952 = vunpack.c.l.b16 %v3820
        %v3953 = vunpack.c.l.b16 %v3821
        %v3954 = vunpack.c.l.b16 %v3822
        %v3955 = vunpack.c.l.b16 %v3823
        %v3956 = vunpack.c.l.b16 %v3824
        %v3957 = vunpack.c.l.b16 %v3825
        %v3958 = vunpack.c.l.b16 %v3826
        %v3959 = vunpack.c.l.b16 %v3827
        %v3960 = vunpack.c.l.b16 %v3828
        %v3961 = vunpack.c.l.b16 %v3829
        %v3962 = vunpack.c.l.b16 %v3830
        %v3963 = vunpack.c.l.b16 %v3831
        %v3964 = vunpack.c.l.b16 %v3832
        %v3965 = vunpack.c.l.b16 %v3833
        %v3966 = vunpack.c.l.b16 %v3834
        %v3967 = vunpack.c.l.b16 %v3835
        %v3968 = vunpack.c.l.b16 %v3836
        %v3969 = vunpack.c.l.b16 %v3837
        %v3970 = vunpack.c.l.b16 %v3838
        %v3971 = vunpack.c.l.b16 %v3839
        %v3972 = vunpack.c.l.b16 %v3840
        %v3973 = vunpack.c.l.b16 %v3841
        %v3974 = vunpack.c.l.b16 %v3842
        %v3975 = vunpack.c.l.b16 %v3843
        %v3976 = vunpack.c.l.b16 %v3844
        %v3977 = vunpack.c.l.b16 %v3845
        %v3978 = vunpack.c.l.b16 %v3846
        %v3979 = vunpack.c.l.b16 %v3847
        %v3980 = vunpack.c.l.b16 %v3848
        %v3981 = vunpack.c.l.b16 %v3849
        %v3982 = vunpack.c.l.b16 %v3850
        %v3983 = vunpack.c.l.b16 %v3851
        %v3984 = vunpack.c.l.b16 %v3852
        %v3985 = vunpack.c.l.b16 %v3853
        %v3986 = vunpack.c.l.b16 %v3854
        %v3987 = vunpack.c.l.b16 %v3855
        %v3988 = vunpack.c.l.b16 %v3856
        %v3989 = vunpack.c.l.b16 %v3857
        %v3990 = vunpack.c.l.b16 %v3858
        %v3991 = vunpack.c.l.b16 %v3859
        %v3992 = vunpack.c.l.b16 %v3860
        %v3993 = vunpack.c.l.b16 %v3861
        %v3994 = vunpack.c.l.b16 %v3862
        %v3995 = vunpack.c.l.b16 %v3863
        %v3996 = vunpack.c.l.b16 %v3864
        %v3997 = vunpack.c.l.b16 %v3865
        %v3998 = vunpack.c.l.b16 %v3866
        %v3999 = vunpack.c.l.b16 %v3867
        %v4000 = vunpack.c.l.b16 %v3868
        %v4001 = vunpack.c.l.b16 %v3869
        %v4002 = vunpack.c.l.b16 %v3870
        %v4003 = vunpack.c.l.b16 %v3871
        %v4004 = vunpack.c.l.b16 %v3872
        %v4005 = vunpack.c.l.b16 %v3873
        %v4006 = vunpack.c.l.b16 %v3874
        %v4007 = vpack.c.b16 %v3944, %v3943
        %v4008 = vpack.c.b16 %v3946, %v3945
        %v4009 = vpack.c.b16 %v3948, %v3947
        %v4010 = vpack.c.b16 %v3950, %v3949
        %v4011 = vpack.c.b16 %v3952, %v3951
        %v4012 = vpack.c.b16 %v3954, %v3953
        %v4013 = vpack.c.b16 %v3956, %v3955
        %v4014 = vpack.c.b16 %v3958, %v3957
        %v4015 = vpack.c.b16 %v3960, %v3959
        %v4016 = vpack.c.b16 %v3962, %v3961
        %v4017 = vpack.c.b16 %v3964, %v3963
        %v4018 = vpack.c.b16 %v3966, %v3965
        %v4019 = vpack.c.b16 %v3968, %v3967
        %v4020 = vpack.c.b16 %v3970, %v3969
        %v4021 = vpack.c.b16 %v3972, %v3971
        %v4022 = vpack.c.b16 %v3974, %v3973
        %v4023 = vpack.c.b16 %v3976, %v3975
        %v4024 = vpack.c.b16 %v3978, %v3977
        %v4025 = vpack.c.b16 %v3980, %v3979
        %v4026 = vpack.c.b16 %v3982, %v3981
        %v4027 = vpack.c.b16 %v3984, %v3983
        %v4028 = vpack.c.b16 %v3986, %v3985
        %v4029 = vpack.c.b16 %v3988, %v3987
        %v4030 = vpack.c.b16 %v3990, %v3989
        %v4031 = vpack.c.b16 %v3992, %v3991
        %v4032 = vpack.c.b16 %v3994, %v3993
        %v4033 = vpack.c.b16 %v3996, %v3995
        %v4034 = vpack.c.b16 %v3998, %v3997
        %v4035 = vpack.c.b16 %v4000, %v3999
        %v4036 = vpack.c.b16 %v4002, %v4001
        %v4037 = vpack.c.b16 %v4004, %v4003
        %v4038 = vpack.c.b16 %v4006, %v4005
        %4071 = vmatpush.bf16.msra.mxu0 %v4014
        %4072 = vmatpush.bf16.msra.mxu0 %v4013
        %4073 = vmatpush.bf16.msra.mxu0 %v4012
        %4074 = vmatpush.bf16.msra.mxu0 %v4011
        %4075 = vmatpush.bf16.msra.mxu0 %v4010
        %4076 = vmatpush.bf16.msra.mxu0 %v4009
        %4077 = vmatpush.bf16.msra.mxu0 %v4008
        %4078 = vmatpush.bf16.msra.mxu0 %v4007
        %4079 = vmatmul.bf16.gmra.mxu0 %v3807
        %v4080 = vpop.f32.mrf.mxu0
        %v4081 = vadd.f32 %v3877, %v4080
        %v4082 = vpop.f32.mrf.mxu0
        %4083 = vdwg.mxu0
        %4084 = vmatpush.bf16.msra.mxu0 %v4022
        %4085 = vmatpush.bf16.msra.mxu0 %v4021
        %4086 = vmatpush.bf16.msra.mxu0 %v4020
        %4087 = vmatpush.bf16.msra.mxu0 %v4019
        %4088 = vmatpush.bf16.msra.mxu0 %v4018
        %4089 = vmatpush.bf16.msra.mxu0 %v4017
        %4090 = vmatpush.bf16.msra.mxu0 %v4016
        %4091 = vmatpush.bf16.msra.mxu0 %v4015
        %4092 = vmatmul.bf16.gmra.mxu0 %v3808
        %v4093 = vpop.f32.mrf.mxu0
        %v4094 = vadd.f32 %v4081, %v4093
        %v4095 = vpop.f32.mrf.mxu0
        %4096 = vdwg.mxu0
        %4097 = vmatpush.bf16.msra.mxu0 %v4030
        %4098 = vmatpush.bf16.msra.mxu0 %v4029
        %4099 = vmatpush.bf16.msra.mxu0 %v4028
        %4100 = vmatpush.bf16.msra.mxu0 %v4027
        %4101 = vmatpush.bf16.msra.mxu0 %v4026
        %4102 = vmatpush.bf16.msra.mxu0 %v4025
        %4103 = vmatpush.bf16.msra.mxu0 %v4024
        %4104 = vmatpush.bf16.msra.mxu0 %v4023
        %4105 = vmatmul.bf16.gmra.mxu0 %v3809
        %v4106 = vpop.f32.mrf.mxu0
        %v4107 = vadd.f32 %v4094, %v4106
        %v4108 = vpop.f32.mrf.mxu0
        %4109 = vdwg.mxu0
        %4110 = vmatpush.bf16.msra.mxu0 %v4038
        %4111 = vmatpush.bf16.msra.mxu0 %v4037
        %4112 = vmatpush.bf16.msra.mxu0 %v4036
        %4113 = vmatpush.bf16.msra.mxu0 %v4035
        %4114 = vmatpush.bf16.msra.mxu0 %v4034
        %4115 = vmatpush.bf16.msra.mxu0 %v4033
        %4116 = vmatpush.bf16.msra.mxu0 %v4032
        %4117 = vmatpush.bf16.msra.mxu0 %v4031
        %4118 = vmatmul.bf16.gmra.mxu0 %v3810
        %v4119 = vpop.f32.mrf.mxu0
        %v4120 = vadd.f32 %v4107, %v4119
        %v4121 = vpop.f32.mrf.mxu0
        %4122 = vdwg.mxu0
        %v4123 = vperm.slane %v1105, 0
        %v4124 = vmul.f32 %v4123, %v4120
        %v4125 = vadd.f32 %v3488, %v4124
        %v4126 = vpack.c.bf16 %v3403, %v3402
        %s4127 = scalar_lea.vmem [#allocation14], 64
        %v4128 = vld [vmem:[%s4127] sm:$0xf]
        %v4129 = vld [vmem:[%s4127 + $0x4] sm:$0xf]
        %v4130 = vld [vmem:[%s4127 + $0x8] sm:$0xf]
        %v4131 = vld [vmem:[%s4127 + $0xc] sm:$0xf]
        %v4132 = vld [vmem:[%s4127 + $0x10] sm:$0xf]
        %v4133 = vld [vmem:[%s4127 + $0x14] sm:$0xf]
        %v4134 = vld [vmem:[%s4127 + $0x18] sm:$0xf]
        %v4135 = vld [vmem:[%s4127 + $0x1c] sm:$0xf]
        %v4136 = vld [vmem:[%s4127 + $0x20] sm:$0xf]
        %v4137 = vld [vmem:[%s4127 + $0x24] sm:$0xf]
        %v4138 = vld [vmem:[%s4127 + $0x28] sm:$0xf]
        %v4139 = vld [vmem:[%s4127 + $0x2c] sm:$0xf]
        %v4140 = vld [vmem:[%s4127 + $0x30] sm:$0xf]
        %v4141 = vld [vmem:[%s4127 + $0x34] sm:$0xf]
        %v4142 = vld [vmem:[%s4127 + $0x38] sm:$0xf]
        %v4143 = vld [vmem:[%s4127 + $0x3c] sm:$0xf]
        %s4144 = scalar_lea.vmem [#allocation16], 1
        %v4145 = vld [vmem:[%s4144] sm:$0x1]
        %v4147 = vperm.slane %v4145, 0
        %v4165 = vunpack.c.l.b16 %v4128
        %v4166 = vunpack.c.l.b16 %v4129
        %v4167 = vunpack.c.l.b16 %v4130
        %v4168 = vunpack.c.l.b16 %v4131
        %v4169 = vunpack.c.l.b16 %v4132
        %v4170 = vunpack.c.l.b16 %v4133
        %v4171 = vunpack.c.l.b16 %v4134
        %v4172 = vunpack.c.l.b16 %v4135
        %v4173 = vunpack.c.l.b16 %v4136
        %v4174 = vunpack.c.l.b16 %v4137
        %v4175 = vunpack.c.l.b16 %v4138
        %v4176 = vunpack.c.l.b16 %v4139
        %v4177 = vunpack.c.l.b16 %v4140
        %v4178 = vunpack.c.l.b16 %v4141
        %v4179 = vunpack.c.l.b16 %v4142
        %v4180 = vunpack.c.l.b16 %v4143
        %v4181 = vpack.c.b16 %v4166, %v4165
        %v4182 = vpack.c.b16 %v4168, %v4167
        %v4183 = vpack.c.b16 %v4170, %v4169
        %v4184 = vpack.c.b16 %v4172, %v4171
        %v4185 = vpack.c.b16 %v4174, %v4173
        %v4186 = vpack.c.b16 %v4176, %v4175
        %v4187 = vpack.c.b16 %v4178, %v4177
        %v4188 = vpack.c.b16 %v4180, %v4179
        %4197 = vmatpush.bf16.msra.mxu0 %v4188
        %4198 = vmatpush.bf16.msra.mxu0 %v4187
        %4199 = vmatpush.bf16.msra.mxu0 %v4186
        %4200 = vmatpush.bf16.msra.mxu0 %v4185
        %4201 = vmatpush.bf16.msra.mxu0 %v4184
        %4202 = vmatpush.bf16.msra.mxu0 %v4183
        %4203 = vmatpush.bf16.msra.mxu0 %v4182
        %4204 = vmatpush.bf16.msra.mxu0 %v4181
        %4205 = vmatmul.bf16.gmra.mxu0 %v4126
        %v4206 = vpop.f32.mrf.mxu0
        %v4207 = vadd.f32 %v4147, %v4206
        %v4208 = vpop.f32.mrf.mxu0
        %v4209 = vadd.f32 %v4147, %v4208
        %4210 = vdwg.mxu0
        %v4211 = vperm.slane %v1448, 0
        %v4212 = vmul.f32 %v4211, %v4207
        %v4213 = vmul.f32 %v4211, %v4209
        %v4214 = vadd.f32 %v704, %v4212
        %v4215 = vadd.f32 %v705, %v4213
        %4216 = vadd.xlane.f32.xlu0 %v4214
        %v4217 = vpop.xlane.xlu0 %4216
        %4218 = vadd.xlane.f32.xlu0 %v4215
        %v4219 = vpop.xlane.xlu0 %4218
        %v4220 = vmul.f32 %v4217, %v1498
        %v4221 = vmul.f32 %v4219, %v1498
        %v4222 = vmul.f32 %v4214, %v4214
        %v4223 = vmul.f32 %v4215, %v4215
        %4224 = vadd.xlane.f32.xlu0 %v4222
        %v4225 = vpop.xlane.xlu0 %4224
        %4226 = vadd.xlane.f32.xlu0 %v4223
        %v4227 = vpop.xlane.xlu0 %4226
        %v4228 = vmul.f32 %v4225, %v1498
        %v4229 = vmul.f32 %v4227, %v1498
        %v4230 = vmul.f32 %v4220, %v4220
        %v4231 = vmul.f32 %v4221, %v4221
        %v4232 = vsub.f32 %v4228, %v4230
        %v4233 = vsub.f32 %v4229, %v4231
        %v4234 = vsub.f32 %v4214, %v4220
        %v4235 = vsub.f32 %v4215, %v4221
        %v4236 = vadd.f32 %v4232, 1e-06
        %v4237 = vadd.f32 %v4233, 1e-06
        %v4238 = vrsqrt.pop %v4236
        %v4239 = vmul.f32 %v4238, %v4236
        %v4240 = vmul.f32 %v4239, %v4238
        %v4241 = vmul.f32 0.5, %v4240
        %v4242 = vsub.f32 1.5, %v4241
        %v4243 = vmul.f32 %v4238, %v4242
        %vm4244 = vweird.f32 %v4236
        %vm4245 = vweird.f32 %v4238
        %vm4246 = vmor %vm4244, %vm4245
        %v4247 = vsel %vm4246, %v4238, %v4243
        %v4248 = vrsqrt.pop %v4237
        %v4249 = vmul.f32 %v4248, %v4237
        %v4250 = vmul.f32 %v4249, %v4248
        %v4251 = vmul.f32 0.5, %v4250
        %v4252 = vsub.f32 1.5, %v4251
        %v4253 = vmul.f32 %v4248, %v4252
        %vm4254 = vweird.f32 %v4237
        %vm4255 = vweird.f32 %v4248
        %vm4256 = vmor %vm4254, %vm4255
        %v4257 = vsel %vm4256, %v4248, %v4253
        %v4258 = vmul.f32 %v4234, %v4247
        %v4259 = vmul.f32 %v4235, %v4257
        %v4260 = vadd.f32 %v1474, 1.0
        %v4261 = vperm.slane %v4260, 0
        %v4262 = vmul.f32 %v4258, %v4261
        %v4263 = vmul.f32 %v4259, %v4261
        %v4264 = vperm.slane %v1461, 0
        %v4265 = vadd.f32 %v4262, %v4264
        %v4266 = vadd.f32 %v4263, %v4264
        %v4267 = vpack.c.bf16 %v4266, %v4265
        %s4268 = scalar_lea.vmem [#allocation17], 256
        %v4269 = vld [vmem:[%s4268] sm:$0xff]
        %v4270 = vld [vmem:[%s4268 + $0x8] sm:$0xff]
        %v4271 = vld [vmem:[%s4268 + $0x10] sm:$0xff]
        %v4272 = vld [vmem:[%s4268 + $0x18] sm:$0xff]
        %v4273 = vld [vmem:[%s4268 + $0x20] sm:$0xff]
        %v4274 = vld [vmem:[%s4268 + $0x28] sm:$0xff]
        %v4275 = vld [vmem:[%s4268 + $0x30] sm:$0xff]
        %v4276 = vld [vmem:[%s4268 + $0x38] sm:$0xff]
        %v4277 = vld [vmem:[%s4268 + $0x40] sm:$0xff]
        %v4278 = vld [vmem:[%s4268 + $0x48] sm:$0xff]
        %v4279 = vld [vmem:[%s4268 + $0x50] sm:$0xff]
        %v4280 = vld [vmem:[%s4268 + $0x58] sm:$0xff]
        %v4281 = vld [vmem:[%s4268 + $0x60] sm:$0xff]
        %v4282 = vld [vmem:[%s4268 + $0x68] sm:$0xff]
        %v4283 = vld [vmem:[%s4268 + $0x70] sm:$0xff]
        %v4284 = vld [vmem:[%s4268 + $0x78] sm:$0xff]
        %v4285 = vld [vmem:[%s4268 + $0x80] sm:$0xff]
        %v4286 = vld [vmem:[%s4268 + $0x88] sm:$0xff]
        %v4287 = vld [vmem:[%s4268 + $0x90] sm:$0xff]
        %v4288 = vld [vmem:[%s4268 + $0x98] sm:$0xff]
        %v4289 = vld [vmem:[%s4268 + $0xa0] sm:$0xff]
        %v4290 = vld [vmem:[%s4268 + $0xa8] sm:$0xff]
        %v4291 = vld [vmem:[%s4268 + $0xb0] sm:$0xff]
        %v4292 = vld [vmem:[%s4268 + $0xb8] sm:$0xff]
        %v4293 = vld [vmem:[%s4268 + $0xc0] sm:$0xff]
        %v4294 = vld [vmem:[%s4268 + $0xc8] sm:$0xff]
        %v4295 = vld [vmem:[%s4268 + $0xd0] sm:$0xff]
        %v4296 = vld [vmem:[%s4268 + $0xd8] sm:$0xff]
        %v4297 = vld [vmem:[%s4268 + $0xe0] sm:$0xff]
        %v4298 = vld [vmem:[%s4268 + $0xe8] sm:$0xff]
        %v4299 = vld [vmem:[%s4268 + $0xf0] sm:$0xff]
        %v4300 = vld [vmem:[%s4268 + $0xf8] sm:$0xff]
        %s4301 = scalar_lea.vmem %s10, 4
        %v4302 = vld [vmem:[%s4301] sm:$0xf]
        %v4304 = vperm.slane %v4302, 0
        %v4305 = vperm.slane %v4302, 1
        %v4306 = vperm.slane %v4302, 2
        %v4307 = vperm.slane %v4302, 3
        %v4344 = vunpack.c.l.b16 %v4269
        %v4345 = vunpack.c.h.b16 %v4269
        %v4346 = vunpack.c.l.b16 %v4270
        %v4347 = vunpack.c.h.b16 %v4270
        %v4348 = vunpack.c.l.b16 %v4271
        %v4349 = vunpack.c.h.b16 %v4271
        %v4350 = vunpack.c.l.b16 %v4272
        %v4351 = vunpack.c.h.b16 %v4272
        %v4352 = vunpack.c.l.b16 %v4273
        %v4353 = vunpack.c.h.b16 %v4273
        %v4354 = vunpack.c.l.b16 %v4274
        %v4355 = vunpack.c.h.b16 %v4274
        %v4356 = vunpack.c.l.b16 %v4275
        %v4357 = vunpack.c.h.b16 %v4275
        %v4358 = vunpack.c.l.b16 %v4276
        %v4359 = vunpack.c.h.b16 %v4276
        %v4360 = vunpack.c.l.b16 %v4277
        %v4361 = vunpack.c.h.b16 %v4277
        %v4362 = vunpack.c.l.b16 %v4278
        %v4363 = vunpack.c.h.b16 %v4278
        %v4364 = vunpack.c.l.b16 %v4279
        %v4365 = vunpack.c.h.b16 %v4279
        %v4366 = vunpack.c.l.b16 %v4280
        %v4367 = vunpack.c.h.b16 %v4280
        %v4368 = vunpack.c.l.b16 %v4281
        %v4369 = vunpack.c.h.b16 %v4281
        %v4370 = vunpack.c.l.b16 %v4282
        %v4371 = vunpack.c.h.b16 %v4282
        %v4372 = vunpack.c.l.b16 %v4283
        %v4373 = vunpack.c.h.b16 %v4283
        %v4374 = vunpack.c.l.b16 %v4284
        %v4375 = vunpack.c.h.b16 %v4284
        %v4376 = vunpack.c.l.b16 %v4285
        %v4377 = vunpack.c.h.b16 %v4285
        %v4378 = vunpack.c.l.b16 %v4286
        %v4379 = vunpack.c.h.b16 %v4286
        %v4380 = vunpack.c.l.b16 %v4287
        %v4381 = vunpack.c.h.b16 %v4287
        %v4382 = vunpack.c.l.b16 %v4288
        %v4383 = vunpack.c.h.b16 %v4288
        %v4384 = vunpack.c.l.b16 %v4289
        %v4385 = vunpack.c.h.b16 %v4289
        %v4386 = vunpack.c.l.b16 %v4290
        %v4387 = vunpack.c.h.b16 %v4290
        %v4388 = vunpack.c.l.b16 %v4291
        %v4389 = vunpack.c.h.b16 %v4291
        %v4390 = vunpack.c.l.b16 %v4292
        %v4391 = vunpack.c.h.b16 %v4292
        %v4392 = vunpack.c.l.b16 %v4293
        %v4393 = vunpack.c.h.b16 %v4293
        %v4394 = vunpack.c.l.b16 %v4294
        %v4395 = vunpack.c.h.b16 %v4294
        %v4396 = vunpack.c.l.b16 %v4295
        %v4397 = vunpack.c.h.b16 %v4295
        %v4398 = vunpack.c.l.b16 %v4296
        %v4399 = vunpack.c.h.b16 %v4296
        %v4400 = vunpack.c.l.b16 %v4297
        %v4401 = vunpack.c.h.b16 %v4297
        %v4402 = vunpack.c.l.b16 %v4298
        %v4403 = vunpack.c.h.b16 %v4298
        %v4404 = vunpack.c.l.b16 %v4299
        %v4405 = vunpack.c.h.b16 %v4299
        %v4406 = vunpack.c.l.b16 %v4300
        %v4407 = vunpack.c.h.b16 %v4300
        %v4408 = vpack.c.b16 %v4348, %v4344
        %v4409 = vpack.c.b16 %v4349, %v4345
        %v4410 = vpack.c.b16 %v4350, %v4346
        %v4411 = vpack.c.b16 %v4351, %v4347
        %v4412 = vpack.c.b16 %v4356, %v4352
        %v4413 = vpack.c.b16 %v4357, %v4353
        %v4414 = vpack.c.b16 %v4358, %v4354
        %v4415 = vpack.c.b16 %v4359, %v4355
        %v4416 = vpack.c.b16 %v4364, %v4360
        %v4417 = vpack.c.b16 %v4365, %v4361
        %v4418 = vpack.c.b16 %v4366, %v4362
        %v4419 = vpack.c.b16 %v4367, %v4363
        %v4420 = vpack.c.b16 %v4372, %v4368
        %v4421 = vpack.c.b16 %v4373, %v4369
        %v4422 = vpack.c.b16 %v4374, %v4370
        %v4423 = vpack.c.b16 %v4375, %v4371
        %v4424 = vpack.c.b16 %v4380, %v4376
        %v4425 = vpack.c.b16 %v4381, %v4377
        %v4426 = vpack.c.b16 %v4382, %v4378
        %v4427 = vpack.c.b16 %v4383, %v4379
        %v4428 = vpack.c.b16 %v4388, %v4384
        %v4429 = vpack.c.b16 %v4389, %v4385
        %v4430 = vpack.c.b16 %v4390, %v4386
        %v4431 = vpack.c.b16 %v4391, %v4387
        %v4432 = vpack.c.b16 %v4396, %v4392
        %v4433 = vpack.c.b16 %v4397, %v4393
        %v4434 = vpack.c.b16 %v4398, %v4394
        %v4435 = vpack.c.b16 %v4399, %v4395
        %v4436 = vpack.c.b16 %v4404, %v4400
        %v4437 = vpack.c.b16 %v4405, %v4401
        %v4438 = vpack.c.b16 %v4406, %v4402
        %v4439 = vpack.c.b16 %v4407, %v4403
        %4472 = vmatpush.bf16.msra.mxu0 %v4436
        %4473 = vmatpush.bf16.msra.mxu0 %v4432
        %4474 = vmatpush.bf16.msra.mxu0 %v4428
        %4475 = vmatpush.bf16.msra.mxu0 %v4424
        %4476 = vmatpush.bf16.msra.mxu0 %v4420
        %4477 = vmatpush.bf16.msra.mxu0 %v4416
        %4478 = vmatpush.bf16.msra.mxu0 %v4412
        %4479 = vmatpush.bf16.msra.mxu0 %v4408
        %4480 = vmatmul.bf16.gmra.mxu0 %v4267
        %v4481 = vpop.f32.mrf.mxu0
        %v4482 = vadd.f32 %v4304, %v4481
        %v4483 = vpop.f32.mrf.mxu0
        %v4484 = vadd.f32 %v4304, %v4483
        %4485 = vdwg.mxu0
        %4486 = vmatpush.bf16.msra.mxu0 %v4437
        %4487 = vmatpush.bf16.msra.mxu0 %v4433
        %4488 = vmatpush.bf16.msra.mxu0 %v4429
        %4489 = vmatpush.bf16.msra.mxu0 %v4425
        %4490 = vmatpush.bf16.msra.mxu0 %v4421
        %4491 = vmatpush.bf16.msra.mxu0 %v4417
        %4492 = vmatpush.bf16.msra.mxu0 %v4413
        %4493 = vmatpush.bf16.msra.mxu0 %v4409
        %4494 = vmatmul.bf16.gmra.mxu0 %v4267
        %v4495 = vpop.f32.mrf.mxu0
        %v4496 = vadd.f32 %v4305, %v4495
        %v4497 = vpop.f32.mrf.mxu0
        %v4498 = vadd.f32 %v4305, %v4497
        %4499 = vdwg.mxu0
        %4500 = vmatpush.bf16.msra.mxu0 %v4438
        %4501 = vmatpush.bf16.msra.mxu0 %v4434
        %4502 = vmatpush.bf16.msra.mxu0 %v4430
        %4503 = vmatpush.bf16.msra.mxu0 %v4426
        %4504 = vmatpush.bf16.msra.mxu0 %v4422
        %4505 = vmatpush.bf16.msra.mxu0 %v4418
        %4506 = vmatpush.bf16.msra.mxu0 %v4414
        %4507 = vmatpush.bf16.msra.mxu0 %v4410
        %4508 = vmatmul.bf16.gmra.mxu0 %v4267
        %v4509 = vpop.f32.mrf.mxu0
        %v4510 = vadd.f32 %v4306, %v4509
        %v4511 = vpop.f32.mrf.mxu0
        %v4512 = vadd.f32 %v4306, %v4511
        %4513 = vdwg.mxu0
        %4514 = vmatpush.bf16.msra.mxu0 %v4439
        %4515 = vmatpush.bf16.msra.mxu0 %v4435
        %4516 = vmatpush.bf16.msra.mxu0 %v4431
        %4517 = vmatpush.bf16.msra.mxu0 %v4427
        %4518 = vmatpush.bf16.msra.mxu0 %v4423
        %4519 = vmatpush.bf16.msra.mxu0 %v4419
        %4520 = vmatpush.bf16.msra.mxu0 %v4415
        %4521 = vmatpush.bf16.msra.mxu0 %v4411
        %4522 = vmatmul.bf16.gmra.mxu0 %v4267
        %v4523 = vpop.f32.mrf.mxu0
        %v4524 = vadd.f32 %v4307, %v4523
        %v4525 = vpop.f32.mrf.mxu0
        %v4526 = vadd.f32 %v4307, %v4525
        %4527 = vdwg.mxu0
        %v4528 = vmul.f32 %v4482, 0.5
        %v4529 = vmul.f32 %v4496, 0.5
        %v4530 = vmul.f32 %v4510, 0.5
        %v4531 = vmul.f32 %v4524, 0.5
        %v4532 = vmul.f32 %v4484, 0.5
        %v4533 = vmul.f32 %v4498, 0.5
        %v4534 = vmul.f32 %v4512, 0.5
        %v4535 = vmul.f32 %v4526, 0.5
        %v4536 = vmul.f32 %v4482, 0.044715
        %v4537 = vmul.f32 %v4496, 0.044715
        %v4538 = vmul.f32 %v4510, 0.044715
        %v4539 = vmul.f32 %v4524, 0.044715
        %v4540 = vmul.f32 %v4484, 0.044715
        %v4541 = vmul.f32 %v4498, 0.044715
        %v4542 = vmul.f32 %v4512, 0.044715
        %v4543 = vmul.f32 %v4526, 0.044715
        %v4544 = vmul.f32 %v4536, %v4482
        %v4545 = vmul.f32 %v4537, %v4496
        %v4546 = vmul.f32 %v4538, %v4510
        %v4547 = vmul.f32 %v4539, %v4524
        %v4548 = vmul.f32 %v4540, %v4484
        %v4549 = vmul.f32 %v4541, %v4498
        %v4550 = vmul.f32 %v4542, %v4512
        %v4551 = vmul.f32 %v4543, %v4526
        %v4552 = vmul.f32 %v4544, %v4482
        %v4553 = vmul.f32 %v4545, %v4496
        %v4554 = vmul.f32 %v4546, %v4510
        %v4555 = vmul.f32 %v4547, %v4524
        %v4556 = vmul.f32 %v4548, %v4484
        %v4557 = vmul.f32 %v4549, %v4498
        %v4558 = vmul.f32 %v4550, %v4512
        %v4559 = vmul.f32 %v4551, %v4526
        %v4560 = vadd.f32 %v4482, %v4552
        %v4561 = vadd.f32 %v4496, %v4553
        %v4562 = vadd.f32 %v4510, %v4554
        %v4563 = vadd.f32 %v4524, %v4555
        %v4564 = vadd.f32 %v4484, %v4556
        %v4565 = vadd.f32 %v4498, %v4557
        %v4566 = vadd.f32 %v4512, %v4558
        %v4567 = vadd.f32 %v4526, %v4559
        %v4568 = vmul.f32 %v4560, 0.7978846
        %v4569 = vmul.f32 %v4561, 0.7978846
        %v4570 = vmul.f32 %v4562, 0.7978846
        %v4571 = vmul.f32 %v4563, 0.7978846
        %v4572 = vmul.f32 %v4564, 0.7978846
        %v4573 = vmul.f32 %v4565, 0.7978846
        %v4574 = vmul.f32 %v4566, 0.7978846
        %v4575 = vmul.f32 %v4567, 0.7978846
        %v4576 = vtanh.pop %v4568
        %v4577 = vtanh.pop %v4569
        %v4578 = vtanh.pop %v4570
        %v4579 = vtanh.pop %v4571
        %v4580 = vtanh.pop %v4572
        %v4581 = vtanh.pop %v4573
        %v4582 = vtanh.pop %v4574
        %v4583 = vtanh.pop %v4575
        %v4584 = vadd.f32 %v4576, 1.0
        %v4585 = vadd.f32 %v4577, 1.0
        %v4586 = vadd.f32 %v4578, 1.0
        %v4587 = vadd.f32 %v4579, 1.0
        %v4588 = vadd.f32 %v4580, 1.0
        %v4589 = vadd.f32 %v4581, 1.0
        %v4590 = vadd.f32 %v4582, 1.0
        %v4591 = vadd.f32 %v4583, 1.0
        %v4592 = vmul.f32 %v4528, %v4584
        %v4593 = vmul.f32 %v4529, %v4585
        %v4594 = vmul.f32 %v4530, %v4586
        %v4595 = vmul.f32 %v4531, %v4587
        %v4596 = vmul.f32 %v4532, %v4588
        %v4597 = vmul.f32 %v4533, %v4589
        %v4598 = vmul.f32 %v4534, %v4590
        %v4599 = vmul.f32 %v4535, %v4591
        %v4600 = vpack.c.bf16 %v4596, %v4592
        %v4601 = vpack.c.bf16 %v4597, %v4593
        %v4602 = vpack.c.bf16 %v4598, %v4594
        %v4603 = vpack.c.bf16 %v4599, %v4595
        %s4604 = scalar_lea.vmem [#allocation19], 256
        %v4605 = vld [vmem:[%s4604] sm:$0xf]
        %v4606 = vld [vmem:[%s4604 + $0x4] sm:$0xf]
        %v4607 = vld [vmem:[%s4604 + $0x8] sm:$0xf]
        %v4608 = vld [vmem:[%s4604 + $0xc] sm:$0xf]
        %v4609 = vld [vmem:[%s4604 + $0x10] sm:$0xf]
        %v4610 = vld [vmem:[%s4604 + $0x14] sm:$0xf]
        %v4611 = vld [vmem:[%s4604 + $0x18] sm:$0xf]
        %v4612 = vld [vmem:[%s4604 + $0x1c] sm:$0xf]
        %v4613 = vld [vmem:[%s4604 + $0x20] sm:$0xf]
        %v4614 = vld [vmem:[%s4604 + $0x24] sm:$0xf]
        %v4615 = vld [vmem:[%s4604 + $0x28] sm:$0xf]
        %v4616 = vld [vmem:[%s4604 + $0x2c] sm:$0xf]
        %v4617 = vld [vmem:[%s4604 + $0x30] sm:$0xf]
        %v4618 = vld [vmem:[%s4604 + $0x34] sm:$0xf]
        %v4619 = vld [vmem:[%s4604 + $0x38] sm:$0xf]
        %v4620 = vld [vmem:[%s4604 + $0x3c] sm:$0xf]
        %v4621 = vld [vmem:[%s4604 + $0x40] sm:$0xf]
        %v4622 = vld [vmem:[%s4604 + $0x44] sm:$0xf]
        %v4623 = vld [vmem:[%s4604 + $0x48] sm:$0xf]
        %v4624 = vld [vmem:[%s4604 + $0x4c] sm:$0xf]
        %v4625 = vld [vmem:[%s4604 + $0x50] sm:$0xf]
        %v4626 = vld [vmem:[%s4604 + $0x54] sm:$0xf]
        %v4627 = vld [vmem:[%s4604 + $0x58] sm:$0xf]
        %v4628 = vld [vmem:[%s4604 + $0x5c] sm:$0xf]
        %v4629 = vld [vmem:[%s4604 + $0x60] sm:$0xf]
        %v4630 = vld [vmem:[%s4604 + $0x64] sm:$0xf]
        %v4631 = vld [vmem:[%s4604 + $0x68] sm:$0xf]
        %v4632 = vld [vmem:[%s4604 + $0x6c] sm:$0xf]
        %v4633 = vld [vmem:[%s4604 + $0x70] sm:$0xf]
        %v4634 = vld [vmem:[%s4604 + $0x74] sm:$0xf]
        %v4635 = vld [vmem:[%s4604 + $0x78] sm:$0xf]
        %v4636 = vld [vmem:[%s4604 + $0x7c] sm:$0xf]
        %v4637 = vld [vmem:[%s4604 + $0x80] sm:$0xf]
        %v4638 = vld [vmem:[%s4604 + $0x84] sm:$0xf]
        %v4639 = vld [vmem:[%s4604 + $0x88] sm:$0xf]
        %v4640 = vld [vmem:[%s4604 + $0x8c] sm:$0xf]
        %v4641 = vld [vmem:[%s4604 + $0x90] sm:$0xf]
        %v4642 = vld [vmem:[%s4604 + $0x94] sm:$0xf]
        %v4643 = vld [vmem:[%s4604 + $0x98] sm:$0xf]
        %v4644 = vld [vmem:[%s4604 + $0x9c] sm:$0xf]
        %v4645 = vld [vmem:[%s4604 + $0xa0] sm:$0xf]
        %v4646 = vld [vmem:[%s4604 + $0xa4] sm:$0xf]
        %v4647 = vld [vmem:[%s4604 + $0xa8] sm:$0xf]
        %v4648 = vld [vmem:[%s4604 + $0xac] sm:$0xf]
        %v4649 = vld [vmem:[%s4604 + $0xb0] sm:$0xf]
        %v4650 = vld [vmem:[%s4604 + $0xb4] sm:$0xf]
        %v4651 = vld [vmem:[%s4604 + $0xb8] sm:$0xf]
        %v4652 = vld [vmem:[%s4604 + $0xbc] sm:$0xf]
        %v4653 = vld [vmem:[%s4604 + $0xc0] sm:$0xf]
        %v4654 = vld [vmem:[%s4604 + $0xc4] sm:$0xf]
        %v4655 = vld [vmem:[%s4604 + $0xc8] sm:$0xf]
        %v4656 = vld [vmem:[%s4604 + $0xcc] sm:$0xf]
        %v4657 = vld [vmem:[%s4604 + $0xd0] sm:$0xf]
        %v4658 = vld [vmem:[%s4604 + $0xd4] sm:$0xf]
        %v4659 = vld [vmem:[%s4604 + $0xd8] sm:$0xf]
        %v4660 = vld [vmem:[%s4604 + $0xdc] sm:$0xf]
        %v4661 = vld [vmem:[%s4604 + $0xe0] sm:$0xf]
        %v4662 = vld [vmem:[%s4604 + $0xe4] sm:$0xf]
        %v4663 = vld [vmem:[%s4604 + $0xe8] sm:$0xf]
        %v4664 = vld [vmem:[%s4604 + $0xec] sm:$0xf]
        %v4665 = vld [vmem:[%s4604 + $0xf0] sm:$0xf]
        %v4666 = vld [vmem:[%s4604 + $0xf4] sm:$0xf]
        %v4667 = vld [vmem:[%s4604 + $0xf8] sm:$0xf]
        %v4668 = vld [vmem:[%s4604 + $0xfc] sm:$0xf]
        %s4669 = scalar_lea.vmem %s12, 1
        %v4670 = vld [vmem:[%s4669] sm:$0x1]
        %v4672 = vperm.slane %v4670, 0
        %v4738 = vunpack.c.l.b16 %v4605
        %v4739 = vunpack.c.l.b16 %v4606
        %v4740 = vunpack.c.l.b16 %v4607
        %v4741 = vunpack.c.l.b16 %v4608
        %v4742 = vunpack.c.l.b16 %v4609
        %v4743 = vunpack.c.l.b16 %v4610
        %v4744 = vunpack.c.l.b16 %v4611
        %v4745 = vunpack.c.l.b16 %v4612
        %v4746 = vunpack.c.l.b16 %v4613
        %v4747 = vunpack.c.l.b16 %v4614
        %v4748 = vunpack.c.l.b16 %v4615
        %v4749 = vunpack.c.l.b16 %v4616
        %v4750 = vunpack.c.l.b16 %v4617
        %v4751 = vunpack.c.l.b16 %v4618
        %v4752 = vunpack.c.l.b16 %v4619
        %v4753 = vunpack.c.l.b16 %v4620
        %v4754 = vunpack.c.l.b16 %v4621
        %v4755 = vunpack.c.l.b16 %v4622
        %v4756 = vunpack.c.l.b16 %v4623
        %v4757 = vunpack.c.l.b16 %v4624
        %v4758 = vunpack.c.l.b16 %v4625
        %v4759 = vunpack.c.l.b16 %v4626
        %v4760 = vunpack.c.l.b16 %v4627
        %v4761 = vunpack.c.l.b16 %v4628
        %v4762 = vunpack.c.l.b16 %v4629
        %v4763 = vunpack.c.l.b16 %v4630
        %v4764 = vunpack.c.l.b16 %v4631
        %v4765 = vunpack.c.l.b16 %v4632
        %v4766 = vunpack.c.l.b16 %v4633
        %v4767 = vunpack.c.l.b16 %v4634
        %v4768 = vunpack.c.l.b16 %v4635
        %v4769 = vunpack.c.l.b16 %v4636
        %v4770 = vunpack.c.l.b16 %v4637
        %v4771 = vunpack.c.l.b16 %v4638
        %v4772 = vunpack.c.l.b16 %v4639
        %v4773 = vunpack.c.l.b16 %v4640
        %v4774 = vunpack.c.l.b16 %v4641
        %v4775 = vunpack.c.l.b16 %v4642
        %v4776 = vunpack.c.l.b16 %v4643
        %v4777 = vunpack.c.l.b16 %v4644
        %v4778 = vunpack.c.l.b16 %v4645
        %v4779 = vunpack.c.l.b16 %v4646
        %v4780 = vunpack.c.l.b16 %v4647
        %v4781 = vunpack.c.l.b16 %v4648
        %v4782 = vunpack.c.l.b16 %v4649
        %v4783 = vunpack.c.l.b16 %v4650
        %v4784 = vunpack.c.l.b16 %v4651
        %v4785 = vunpack.c.l.b16 %v4652
        %v4786 = vunpack.c.l.b16 %v4653
        %v4787 = vunpack.c.l.b16 %v4654
        %v4788 = vunpack.c.l.b16 %v4655
        %v4789 = vunpack.c.l.b16 %v4656
        %v4790 = vunpack.c.l.b16 %v4657
        %v4791 = vunpack.c.l.b16 %v4658
        %v4792 = vunpack.c.l.b16 %v4659
        %v4793 = vunpack.c.l.b16 %v4660
        %v4794 = vunpack.c.l.b16 %v4661
        %v4795 = vunpack.c.l.b16 %v4662
        %v4796 = vunpack.c.l.b16 %v4663
        %v4797 = vunpack.c.l.b16 %v4664
        %v4798 = vunpack.c.l.b16 %v4665
        %v4799 = vunpack.c.l.b16 %v4666
        %v4800 = vunpack.c.l.b16 %v4667
        %v4801 = vunpack.c.l.b16 %v4668
        %v4802 = vpack.c.b16 %v4739, %v4738
        %v4803 = vpack.c.b16 %v4741, %v4740
        %v4804 = vpack.c.b16 %v4743, %v4742
        %v4805 = vpack.c.b16 %v4745, %v4744
        %v4806 = vpack.c.b16 %v4747, %v4746
        %v4807 = vpack.c.b16 %v4749, %v4748
        %v4808 = vpack.c.b16 %v4751, %v4750
        %v4809 = vpack.c.b16 %v4753, %v4752
        %v4810 = vpack.c.b16 %v4755, %v4754
        %v4811 = vpack.c.b16 %v4757, %v4756
        %v4812 = vpack.c.b16 %v4759, %v4758
        %v4813 = vpack.c.b16 %v4761, %v4760
        %v4814 = vpack.c.b16 %v4763, %v4762
        %v4815 = vpack.c.b16 %v4765, %v4764
        %v4816 = vpack.c.b16 %v4767, %v4766
        %v4817 = vpack.c.b16 %v4769, %v4768
        %v4818 = vpack.c.b16 %v4771, %v4770
        %v4819 = vpack.c.b16 %v4773, %v4772
        %v4820 = vpack.c.b16 %v4775, %v4774
        %v4821 = vpack.c.b16 %v4777, %v4776
        %v4822 = vpack.c.b16 %v4779, %v4778
        %v4823 = vpack.c.b16 %v4781, %v4780
        %v4824 = vpack.c.b16 %v4783, %v4782
        %v4825 = vpack.c.b16 %v4785, %v4784
        %v4826 = vpack.c.b16 %v4787, %v4786
        %v4827 = vpack.c.b16 %v4789, %v4788
        %v4828 = vpack.c.b16 %v4791, %v4790
        %v4829 = vpack.c.b16 %v4793, %v4792
        %v4830 = vpack.c.b16 %v4795, %v4794
        %v4831 = vpack.c.b16 %v4797, %v4796
        %v4832 = vpack.c.b16 %v4799, %v4798
        %v4833 = vpack.c.b16 %v4801, %v4800
        %4866 = vmatpush.bf16.msra.mxu0 %v4809
        %4867 = vmatpush.bf16.msra.mxu0 %v4808
        %4868 = vmatpush.bf16.msra.mxu0 %v4807
        %4869 = vmatpush.bf16.msra.mxu0 %v4806
        %4870 = vmatpush.bf16.msra.mxu0 %v4805
        %4871 = vmatpush.bf16.msra.mxu0 %v4804
        %4872 = vmatpush.bf16.msra.mxu0 %v4803
        %4873 = vmatpush.bf16.msra.mxu0 %v4802
        %4874 = vmatmul.bf16.gmra.mxu0 %v4600
        %v4875 = vpop.f32.mrf.mxu0
        %v4876 = vadd.f32 %v4672, %v4875
        %v4877 = vpop.f32.mrf.mxu0
        %v4878 = vadd.f32 %v4672, %v4877
        %4879 = vdwg.mxu0
        %4880 = vmatpush.bf16.msra.mxu0 %v4817
        %4881 = vmatpush.bf16.msra.mxu0 %v4816
        %4882 = vmatpush.bf16.msra.mxu0 %v4815
        %4883 = vmatpush.bf16.msra.mxu0 %v4814
        %4884 = vmatpush.bf16.msra.mxu0 %v4813
        %4885 = vmatpush.bf16.msra.mxu0 %v4812
        %4886 = vmatpush.bf16.msra.mxu0 %v4811
        %4887 = vmatpush.bf16.msra.mxu0 %v4810
        %4888 = vmatmul.bf16.gmra.mxu0 %v4601
        %v4889 = vpop.f32.mrf.mxu0
        %v4890 = vadd.f32 %v4876, %v4889
        %v4891 = vpop.f32.mrf.mxu0
        %v4892 = vadd.f32 %v4878, %v4891
        %4893 = vdwg.mxu0
        %4894 = vmatpush.bf16.msra.mxu0 %v4825
        %4895 = vmatpush.bf16.msra.mxu0 %v4824
        %4896 = vmatpush.bf16.msra.mxu0 %v4823
        %4897 = vmatpush.bf16.msra.mxu0 %v4822
        %4898 = vmatpush.bf16.msra.mxu0 %v4821
        %4899 = vmatpush.bf16.msra.mxu0 %v4820
        %4900 = vmatpush.bf16.msra.mxu0 %v4819
        %4901 = vmatpush.bf16.msra.mxu0 %v4818
        %4902 = vmatmul.bf16.gmra.mxu0 %v4602
        %v4903 = vpop.f32.mrf.mxu0
        %v4904 = vadd.f32 %v4890, %v4903
        %v4905 = vpop.f32.mrf.mxu0
        %v4906 = vadd.f32 %v4892, %v4905
        %4907 = vdwg.mxu0
        %4908 = vmatpush.bf16.msra.mxu0 %v4833
        %4909 = vmatpush.bf16.msra.mxu0 %v4832
        %4910 = vmatpush.bf16.msra.mxu0 %v4831
        %4911 = vmatpush.bf16.msra.mxu0 %v4830
        %4912 = vmatpush.bf16.msra.mxu0 %v4829
        %4913 = vmatpush.bf16.msra.mxu0 %v4828
        %4914 = vmatpush.bf16.msra.mxu0 %v4827
        %4915 = vmatpush.bf16.msra.mxu0 %v4826
        %4916 = vmatmul.bf16.gmra.mxu0 %v4603
        %v4917 = vpop.f32.mrf.mxu0
        %v4918 = vadd.f32 %v4904, %v4917
        %v4919 = vpop.f32.mrf.mxu0
        %v4920 = vadd.f32 %v4906, %v4919
        %4921 = vdwg.mxu0
        %v4922 = vperm.slane %v1487, 0
        %v4923 = vmul.f32 %v4922, %v4918
        %v4924 = vmul.f32 %v4922, %v4920
        %v4925 = vadd.f32 %v4214, %v4923
        %v4926 = vadd.f32 %v4215, %v4924
        %4927 = vst [vmem:[%s694] sm:$0xff] %v4125
        %4928 = vst [vmem:[%s701] sm:$0xff] %v4925
        %4929 = vst [vmem:[%s701 + $0x8] sm:$0xff] %v4926
        %s4930 = sand.u32 %s338, 1
        %s4931 = scalar_lea.sflag [#allocation4], %s4930
        %s4932 = sand.u32 %s338, 1
        %s4933 = smul.addr %s4932, 8
        %s4934 = scalar_lea.vmem [#allocation20], %s4933
        %s4935 = sand.u32 %s364, 1
        %s4936 = scalar_lea.sflag [#allocation22], %s4935
        %s4937 = sand.u32 %s364, 1
        %s4938 = smul.addr %s4937, 16
        %s4939 = scalar_lea.vmem [#allocation21], %s4938
        // Predicated region
        $region117: #{tpu_custom_call.1} parent=71 // pred_check
          %p4940 = pneg %p348
        $region118: #{tpu_custom_call.1} parent=71 // pred_check_branch
          %4942 = sbr.rel (%p4940) target = $region120
        $region119: #{tpu_custom_call.1} parent=71 // pred_region
          %4944 = vsyncadd %s4931, 0
          %s4945 = smul.addr %s42, 8
          %s4946 = scalar_lea.hbm %s13, %s4945
          %s4948 = sshll.u32 %s4934, 4
          %s4949 = int_to_ptr.vmem [resolvable:$true] %s4948
          %s4950 = sshll.u32 %s4946, 4
          %s4951 = int_to_ptr.hbm [resolvable:$true] %s4950
          %4953 = dma.vmem_to_hbm [thread:$0]  %s4949, 128, %s4951, %s4931
        $region120: #{tpu_custom_call.1} parent=71 // pred_fallthru
          _
        // Predicated region
        $region121: #{tpu_custom_call.1} parent=71 // pred_check
          %p4954 = pneg %p374
        $region122: #{tpu_custom_call.1} parent=71 // pred_check_branch
          %4956 = sbr.rel (%p4954) target = $region124
        $region123: #{tpu_custom_call.1} parent=71 // pred_region
          %4958 = vsyncadd %s4936, 0
          %s4959 = smul.addr %s42, 2
          %s4960 = smul.addr %s4959, 8
          %s4961 = scalar_lea.hbm %s14, %s4960
          %s4962 = sshll.u32 %s4939, 4
          %s4963 = int_to_ptr.vmem [resolvable:$true] %s4962
          %s4964 = sshll.u32 %s4961, 4
          %s4965 = int_to_ptr.hbm [resolvable:$true] %s4964
          %4970 = dma.vmem_to_hbm [thread:$0]  %s4963, 256, %s4965, %s4936, 128, 128, 8
        $region124: #{tpu_custom_call.1} parent=71 // pred_fallthru
          _
      $region72: #{tpu_custom_call.1} parent=5 // pred_fallthru
        _
      %p4971 = scmp.le.s32.totalorder 2, %s37
      // Predicated region
      $region125: #{tpu_custom_call.1} parent=5 // pred_check
        %p4972 = pneg %p4971
      $region126: #{tpu_custom_call.1} parent=5 // pred_check_branch
        %4974 = sbr.rel (%p4972) target = $region128
      $region127: #{tpu_custom_call.1} parent=5 // pred_region
        %s4975 = ssub.s32 %s37, 2
        // Predicated region
        $region129: #{tpu_custom_call.1} parent=127 // pred_check
          %p4976 = pneg %p354
        $region130: #{tpu_custom_call.1} parent=127 // pred_check_branch
          %4978 = sbr.rel (%p4976) target = $region132
        $region131: #{tpu_custom_call.1} parent=127 // pred_region
          %s4979 = sand.u32 %s339, 1
          %s4980 = scalar_lea.sflag [#allocation4], %s4979
          %s4981 = sand.u32 %s339, 1
          %s4982 = smul.addr %s4981, 8
          %s4983 = scalar_lea.vmem [#allocation20], %s4982
          %4985 = dma.done %s4980, 128
        $region132: #{tpu_custom_call.1} parent=127 // pred_fallthru
          _
        // Predicated region
        $region133: #{tpu_custom_call.1} parent=127 // pred_check
          %p4986 = pneg %p380
        $region134: #{tpu_custom_call.1} parent=127 // pred_check_branch
          %4988 = sbr.rel (%p4986) target = $region136
        $region135: #{tpu_custom_call.1} parent=127 // pred_region
          %s4989 = sand.u32 %s365, 1
          %s4990 = scalar_lea.sflag [#allocation22], %s4989
          %s4991 = sand.u32 %s365, 1
          %s4992 = smul.addr %s4991, 16
          %s4993 = scalar_lea.vmem [#allocation21], %s4992
          %4995 = dma.done %s4990, 256
        $region136: #{tpu_custom_call.1} parent=127 // pred_fallthru
          _
      $region128: #{tpu_custom_call.1} parent=5 // pred_fallthru
        _
    $region6: #{tpu_custom_call.1} parent=1 // loop_footer
      %s41 = sadd.s32 1, %s37
    $region7: #{tpu_custom_call.1} parent=1 // loop_footer_branch
      %36 = sbr.rel target = $region3
    $region8: #{tpu_custom_call.1} parent=1 // loop_exit
      _
    %4996 = vsyncpa [#allocation3], 1
    %s4997 = scalar_lea.sflag [#allocation3], 1
    %4998 = vsyncpa %s4997, 1
    %4999 = vsyncpa [#allocation6], 1
    %s5000 = scalar_lea.sflag [#allocation6], 1
    %5001 = vsyncpa %s5000, 1
    %5002 = vsyncpa [#allocation9], 1
    %5003 = vsyncpa [#allocation12], 1
    %5004 = vsyncpa [#allocation15], 1
    %5005 = vsyncpa [#allocation18], 1
    %5006 = vsyncpa [#allocation4], 1
    %s5007 = scalar_lea.sflag [#allocation4], 1
    %5008 = vsyncpa %s5007, 1
    %5009 = vsyncpa [#allocation22], 1
    %s5010 = scalar_lea.sflag [#allocation22], 1
    %5011 = vsyncpa %s5010, 1

</llo_original>
